<compile_context>
chip_gen: v7x
topology: tpu7x:2x2x1
jax: 0.10.0
libtpu: 0.0.40
codegen_flags: <defaults>
</compile_context>

<pallas_src>
import math

import jax
import jax.numpy as jnp
from jax.experimental import pallas as pl
from jax.experimental.pallas import tpu as pltpu


# ---------------------------------------------------------------------------
# helpers
# ---------------------------------------------------------------------------
def _nbytes(shape, dtype):
    n = 1
    for s in shape:
        n *= int(s)
    return n * jnp.dtype(dtype).itemsize


def _pick_nb(n):
    # Images per grid step: amortize per-step overhead, but keep the "parallel"
    # batch grid length >= 2 so v7x's two TensorCores both get work.
    for cand in (8, 4, 2):
        if n % cand == 0 and n // cand >= 2:
            return cand
    return 1


# ---------------------------------------------------------------------------
# Fused Pallas kernel: firstconv -> (maxpool) -> residual blocks
# ---------------------------------------------------------------------------
def _fused_down_stack(x_nhwc, wf_r, bf_r, wb, bb, *, nblock, pool):
    """x_nhwc: (N,H,W,Cin) f32; wf_r: (9*Cin,Cout) mm_dtype; bf_r: (1,Cout) f32;
    wb: (2*nblock, 9*Cout, Cout) mm_dtype; bb: (2*nblock, 1, Cout) f32."""
    N, H, W, Cin = x_nhwc.shape
    Cout = wf_r.shape[-1]
    mm_dtype = wf_r.dtype                     # im2col-matrix + weight dtype
    if pool:
        assert H % 2 == 0 and W % 2 == 0, "pool=True path assumes even H, W"
        Ho, Wo = H // 2, W // 2
    else:
        Ho, Wo = H, W
    Nb = _pick_nb(N)
    assert N % Nb == 0
    Me = Nb * H * Wo          # rows per W-parity block of the firstconv im2col
    Ma = Nb * H * W           # firstconv im2col rows
    Mb = Nb * Ho * Wo         # residual-conv im2col rows

    # ---- in-kernel helpers --------------------------------------------------
    def zero_border(p, hh, ww, cc):
        # Only the 1-px borders carry the convs' zero padding; interiors are
        # always fully overwritten each step, so nothing else is cleared.
        zr = jnp.zeros((Nb, 1, ww + 2, cc), jnp.float32)
        zc = jnp.zeros((Nb, hh + 2, 1, cc), jnp.float32)
        p[:, 0:1, :, :] = zr
        p[:, hh + 1:hh + 2, :, :] = zr
        p[:, :, 0:1, :] = zc
        p[:, :, ww + 1:ww + 2, :] = zc

    def conv3x3(pad_ref, cols_ref, hc, wc, cl, w, b):
        """3x3 conv, stride 1, pad 1 (borders of pad_ref), one im2col matmul."""
        m = Nb * hc * wc
        for kh in range(3):
            for kw in range(3):
                k = kh * 3 + kw
                tap = pad_ref[:, kh:kh + hc, kw:kw + wc, :]     # (Nb,hc,wc,cl)
                cols_ref[:, k * cl:(k + 1) * cl] = (
                    tap.reshape(m, cl).astype(cols_ref.dtype))
        y = jnp.dot(cols_ref[...], w, preferred_element_type=jnp.float32)
        return y + b                                            # (m, Cout) f32

    def res_blocks_and_store(pad_b, cols_b, acc, wb_ref, bb_ref, o_ref):
        # x <- x + conv1(relu(conv0(relu(x)))); ReLU applied exactly once per
        # activation, at the pad_b interior write.
        for i in range(nblock):
            pad_b[:, 1:Ho + 1, 1:Wo + 1, :] = jnp.maximum(acc[...], 0.0)
            h = conv3x3(pad_b, cols_b, Ho, Wo, Cout,
                        wb_ref[2 * i], bb_ref[2 * i])
            pad_b[:, 1:Ho + 1, 1:Wo + 1, :] = (
                jnp.maximum(h, 0.0).reshape(Nb, Ho, Wo, Cout))
            d = conv3x3(pad_b, cols_b, Ho, Wo, Cout,
                        wb_ref[2 * i + 1], bb_ref[2 * i + 1])
            acc[...] = acc[...] + d.reshape(Nb, Ho, Wo, Cout)
        o_ref[...] = acc[...]

    # ---- kernel bodies --------------------------------------------------------
    def kernel_pool(xe_ref, xo_ref, wf_ref, bf_ref, wb_ref, bb_ref, o_ref,
                    pad_ae, pad_ao, pad_b, cols_a, cols_b, wmax, acc):
        zero_border(pad_ae, H, Wo, Cin)
        zero_border(pad_ao, H, Wo, Cin)
        zero_border(pad_b, Ho, Wo, Cout)
        pad_ae[:, 1:H + 1, 1:Wo + 1, :] = xe_ref[...]   # even cols w = 2j
        pad_ao[:, 1:H + 1, 1:Wo + 1, :] = xo_ref[...]   # odd  cols w = 2j+1

        # First conv: single im2col matmul with W-deinterleaved rows.
        #   even output w=2j :  kw0 -> odd plane @0, kw1 -> even @1, kw2 -> odd @1
        #   odd  output w=2j+1: kw0 -> even @1,      kw1 -> odd @1,  kw2 -> even @2
        even_src = {0: (pad_ao, 0), 1: (pad_ae, 1), 2: (pad_ao, 1)}
        odd_src = {0: (pad_ae, 1), 1: (pad_ao, 1), 2: (pad_ae, 2)}
        for kh in range(3):
            for kw in range(3):
                k = kh * 3 + kw
                for row0, (src, off) in ((0, even_src[kw]), (Me, odd_src[kw])):
                    tap = src[:, kh:kh + H, off:off + Wo, :]
                    cols_a[row0:row0 + Me, k * Cin:(k + 1) * Cin] = (
                        tap.reshape(Me, Cin).astype(cols_a.dtype))
        y = jnp.dot(cols_a[...], wf_ref[...],
                    preferred_element_type=jnp.float32) + bf_ref[...]
        y_e = y[0:Me].reshape(Nb, H, Wo, Cout)          # output columns 2j
        y_o = y[Me:2 * Me].reshape(Nb, H, Wo, Cout)     # output columns 2j+1

        # max_pool2d(kernel=3, stride=2, padding=1):
        # W direction first (even/odd columns already separate), then H via an
        # even/odd split of the leading H dim.  Whole-block maxima only.
        wmax[...] = jnp.maximum(y_e, y_o)                             # 2j, 2j+1
        if Wo > 1:
            wmax[:, :, 1:Wo, :] = jnp.maximum(wmax[:, :, 1:Wo, :],
                                              y_o[:, :, 0:Wo - 1, :])  # 2j-1
        cr = wmax[...].reshape(Nb, Ho, 2, Wo, Cout)
        ev, od = cr[:, :, 0], cr[:, :, 1]               # rows 2i / 2i+1
        m01 = jnp.maximum(ev, od)
        acc[:, 0:1] = m01[:, 0:1]                       # row -1 is padding
        if Ho > 1:
            acc[:, 1:Ho] = jnp.maximum(m01[:, 1:Ho], od[:, 0:Ho - 1])  # 2i-1

        res_blocks_and_store(pad_b, cols_b, acc, wb_ref, bb_ref, o_ref)

    def kernel_nopool(x_ref, wf_ref, bf_ref, wb_ref, bb_ref, o_ref,
                      pad_a, pad_b, cols_a, cols_b, acc):
        zero_border(pad_a, H, W, Cin)
        zero_border(pad_b, H, W, Cout)
        pad_a[:, 1:H + 1, 1:W + 1, :] = x_ref[...]
        y = conv3x3(pad_a, cols_a, H, W, Cin, wf_ref[...], bf_ref[...])
        acc[...] = y.reshape(Nb, H, W, Cout)
        res_blocks_and_store(pad_b, cols_b, acc, wb_ref, bb_ref, o_ref)

    # ---- specs / scratch / compiler params ------------------------------------
    w_specs = [
        pl.BlockSpec((9 * Cin, Cout), lambda n: (0, 0)),
        pl.BlockSpec((1, Cout), lambda n: (0, 0)),
        pl.BlockSpec((2 * nblock, 9 * Cout, Cout), lambda n: (0, 0, 0)),
        pl.BlockSpec((2 * nblock, 1, Cout), lambda n: (0, 0, 0)),
    ]
    if pool:
        x_e = x_nhwc[:, :, 0::2, :]                     # deinterleave in XLA
        x_o = x_nhwc[:, :, 1::2, :]
        inputs = (x_e, x_o, wf_r, bf_r, wb, bb)
        in_specs = [pl.BlockSpec((Nb, H, Wo, Cin), lambda n: (n, 0, 0, 0)),
                    pl.BlockSpec((Nb, H, Wo, Cin), lambda n: (n, 0, 0, 0)),
                    *w_specs]
        scratch_defs = [
            ((Nb, H + 2, Wo + 2, Cin), jnp.float32),     # pad_ae
            ((Nb, H + 2, Wo + 2, Cin), jnp.float32),     # pad_ao
            ((Nb, Ho + 2, Wo + 2, Cout), jnp.float32),   # pad_b
            ((Ma, 9 * Cin), mm_dtype),                   # cols_a
            ((Mb, 9 * Cout), mm_dtype),                  # cols_b
            ((Nb, H, Wo, Cout), jnp.float32),            # wmax (pool only)
            ((Nb, Ho, Wo, Cout), jnp.float32),           # acc
        ]
        kernel = kernel_pool
        in_block_bytes = 2 * _nbytes((Nb, H, Wo, Cin), jnp.float32)
    else:
        inputs = (x_nhwc, wf_r, bf_r, wb, bb)
        in_specs = [pl.BlockSpec((Nb, H, W, Cin), lambda n: (n, 0, 0, 0)),
                    *w_specs]
        scratch_defs = [
            ((Nb, H + 2, W + 2, Cin), jnp.float32),      # pad_a
            ((Nb, H + 2, W + 2, Cout), jnp.float32),     # pad_b
            ((Ma, 9 * Cin), mm_dtype),                   # cols_a
            ((Ma, 9 * Cout), mm_dtype),                  # cols_b
            ((Nb, H, W, Cout), jnp.float32),             # acc
        ]
        kernel = kernel_nopool
        in_block_bytes = _nbytes((Nb, H, W, Cin), jnp.float32)

    scratch = [pltpu.VMEM(s, d) for s, d in scratch_defs]
    weight_bytes = (_nbytes((9 * Cin, Cout), mm_dtype)
                    + _nbytes((2 * nblock, 9 * Cout, Cout), mm_dtype)
                    + _nbytes((1, Cout), jnp.float32)
                    + _nbytes((2 * nblock, 1, Cout), jnp.float32))
    out_block_bytes = _nbytes((Nb, Ho, Wo, Cout), jnp.float32)
    need = (sum(_nbytes(s, d) for s, d in scratch_defs)
            + 2 * (in_block_bytes + out_block_bytes) + 2 * weight_bytes)
    # Raise the scoped VMEM limit only when the footprint needs it; cap at
    # 48 MiB so a v5e/v6e-sized choice never overruns v7x's 64 MiB physical.
    vmem_limit = None if need <= 12 * 2 ** 20 else int(
        min(48 * 2 ** 20, need + (8 << 20)))

    return pl.pallas_call(
        kernel,
        out_shape=jax.ShapeDtypeStruct((N, Ho, Wo, Cout), jnp.float32),
        grid=(N // Nb,),
        in_specs=in_specs,
        out_specs=pl.BlockSpec((Nb, Ho, Wo, Cout), lambda n: (n, 0, 0, 0)),
        scratch_shapes=scratch,
        compiler_params=pltpu.CompilerParams(
            dimension_semantics=("parallel",),
            vmem_limit_bytes=vmem_limit),
    )(*inputs)


# ---------------------------------------------------------------------------
# Public forward (NCHW in/out, matches the PyTorch module) + params
# ---------------------------------------------------------------------------
def cnn_down_stack(x_nchw, params, pool=True, matmul_dtype=jnp.float32):
    """matmul_dtype=jnp.bfloat16 enables the MXU-native bf16 cols/weights path
    (recommended on v6e/v7x); activations, biases and accumulation stay f32."""
    x = jnp.transpose(x_nchw, (0, 2, 3, 1)).astype(jnp.float32)   # NCHW -> NHWC
    wf, bf = params["firstconv"]
    Cin, Cout = wf.shape[2], wf.shape[3]
    nblock = len(params["blocks"])
    assert nblock >= 1
    mm = jnp.dtype(matmul_dtype)
    wf_r = wf.reshape(9 * Cin, Cout).astype(mm)     # (kh,kw,cin)-major = im2col
    bf_r = bf.reshape(1, Cout).astype(jnp.float32)
    flat = [cw for blk in params["blocks"] for cw in blk]   # conv0, conv1 / block
    wb = jnp.stack([w.reshape(9 * Cout, Cout) for (w, _) in flat]).astype(mm)
    bb = jnp.stack([b.reshape(1, Cout) for (_, b) in flat]).astype(jnp.float32)
    out = _fused_down_stack(x, wf_r, bf_r, wb, bb, nblock=nblock, pool=pool)
    return jnp.transpose(out, (0, 3, 1, 2))                       # NHWC -> NCHW


def _normed_conv_params(key, cin, cout, scale):
    # NormedConv2d init: random weight rescaled so each output filter has
    # L2 norm == scale; bias zeroed.  Forward is a plain conv.
    w = jax.random.normal(key, (3, 3, cin, cout), jnp.float32)
    norm = jnp.sqrt(jnp.sum(w * w, axis=(0, 1, 2), keepdims=True))
    w = w * (scale / norm)
    b = jnp.zeros((cout,), jnp.float32)
    return w, b


def init_params(key, inchan, outchan, nblock, scale=1.0):
    keys = jax.random.split(key, 1 + 2 * nblock)
    params = {"firstconv": _normed_conv_params(keys[0], inchan, outchan, 1.0),
              "blocks": []}
    s_block = scale / math.sqrt(nblock)
    s_conv = math.sqrt(s_block)
    for i in range(nblock):
        c0 = _normed_conv_params(keys[1 + 2 * i], outchan, outchan, s_conv)
        c1 = _normed_conv_params(keys[2 + 2 * i], outchan, outchan, s_conv)
        params["blocks"].append((c0, c1))
    return params


# ---------------------------------------------------------------------------
# Plain-JAX reference for validation
# ---------------------------------------------------------------------------
def _conv_ref(x, w, b):
    y = jax.lax.conv_general_dilated(
        x, w, window_strides=(1, 1), padding="SAME",
        dimension_numbers=("NHWC", "HWIO", "NHWC"),
        precision=jax.lax.Precision.HIGHEST)
    return y + b.reshape(1, 1, 1, -1)


def _pool_ref(x):
    return jax.lax.reduce_window(
        x, -jnp.inf, jax.lax.max,
        window_dimensions=(1, 3, 3, 1), window_strides=(1, 2, 2, 1),
        padding=((0, 0), (1, 1), (1, 1), (0, 0)))


def cnn_down_stack_ref(x_nchw, params, pool=True):
    x = jnp.transpose(x_nchw, (0, 2, 3, 1))
    w, b = params["firstconv"]
    x = _conv_ref(x, w, b)
    if pool:
        x = _pool_ref(x)
    for (w0, b0), (w1, b1) in params["blocks"]:
        r = x
        h = _conv_ref(jax.nn.relu(x), w0, b0)
        x = r + _conv_ref(jax.nn.relu(h), w1, b1)
    return jnp.transpose(x, (0, 3, 1, 2))


# ---------------------------------------------------------------------------
if __name__ == "__main__":
    key = jax.random.PRNGKey(0)
    kx, kp = jax.random.split(key)

    N, Cin, H, W = 2, 4, 16, 16
    Cout, nblock = 16, 2

    x = jax.random.normal(kx, (N, Cin, H, W), jnp.float32)
    params = init_params(kp, Cin, Cout, nblock, scale=1.0)

    fwd = jax.jit(cnn_down_stack, static_argnames=("pool", "matmul_dtype"))

    # pool=True (default module config), f32 matmul path
    out = jax.block_until_ready(fwd(x, params))
    assert out.shape == (N, Cout, (H + 1) // 2, (W + 1) // 2), out.shape
    ref = cnn_down_stack_ref(x, params)
    max_err = float(jnp.max(jnp.abs(out - ref)))
    # Tolerance covers the MXU's default-precision f32 matmul rounding across
    # the 5-conv-deep stack (reference uses Precision.HIGHEST).
    assert max_err < 1e-2, f"pool=True mismatch vs reference: max_err={max_err}"

    # pool=False branch
    out_np = jax.block_until_ready(fwd(x, params, pool=False))
    assert out_np.shape == (N, Cout, H, W), out_np.shape
    ref_np = cnn_down_stack_ref(x, params, pool=False)
    max_err_np = float(jnp.max(jnp.abs(out_np - ref_np)))
    assert max_err_np < 1e-2, f"pool=False mismatch: max_err={max_err_np}"

    # bf16 cols/weights fast path (v6e/v7x); looser tolerance for bf16 rounding.
    out_bf = jax.block_until_ready(fwd(x, params, matmul_dtype=jnp.bfloat16))
    max_err_bf = float(jnp.max(jnp.abs(out_bf - ref)))
    assert max_err_bf < 1e-1, f"bf16 path mismatch: max_err={max_err_bf}"

    print("KERNEL_OK")
</pallas_src>

<mosaic_0001>
module attributes {stable_mosaic.version = 11 : i64} {
  func.func @kernel_pool(%arg0: i32, %arg1: memref<1x16x8x4xf32, #tpu.memory_space<vmem>>, %arg2: memref<1x16x8x4xf32, #tpu.memory_space<vmem>>, %arg3: memref<36x16xf32, #tpu.memory_space<vmem>>, %arg4: memref<1x16xf32, #tpu.memory_space<vmem>>, %arg5: memref<4x144x16xf32, #tpu.memory_space<vmem>>, %arg6: memref<4x1x16xf32, #tpu.memory_space<vmem>>, %arg7: memref<1x8x8x16xf32, #tpu.memory_space<vmem>>, %arg8: memref<1x18x10x4xf32, #tpu.memory_space<vmem>>, %arg9: memref<1x18x10x4xf32, #tpu.memory_space<vmem>>, %arg10: memref<1x10x10x16xf32, #tpu.memory_space<vmem>>, %arg11: memref<256x36xf32, #tpu.memory_space<vmem>>, %arg12: memref<64x144xf32, #tpu.memory_space<vmem>>, %arg13: memref<1x16x8x16xf32, #tpu.memory_space<vmem>>, %arg14: memref<1x8x8x16xf32, #tpu.memory_space<vmem>>) attributes {dimension_semantics = [#tpu.dimension_semantics<parallel>], iteration_bounds = array<i64: 2>, scalar_prefetch = 0 : i64, scratch_operands = 7 : i64, tpu.core_type = #tpu.core_type<tc>, window_params = [{transform_indices = @transform_0, window_bounds = array<i64: 1, 16, 8, 4>}, {transform_indices = @transform_1, window_bounds = array<i64: 1, 16, 8, 4>}, {pipeline_mode = #tpu.pipeline_mode<synchronous>, transform_indices = @transform_2, window_bounds = array<i64: 36, 16>}, {pipeline_mode = #tpu.pipeline_mode<synchronous>, transform_indices = @transform_3, window_bounds = array<i64: 1, 16>}, {pipeline_mode = #tpu.pipeline_mode<synchronous>, transform_indices = @transform_4, window_bounds = array<i64: 4, 144, 16>}, {pipeline_mode = #tpu.pipeline_mode<synchronous>, transform_indices = @transform_5, window_bounds = array<i64: 4, 1, 16>}, {transform_indices = @transform_6, window_bounds = array<i64: 1, 8, 8, 16>}]} {
    %cst = arith.constant 0.000000e+00 : f32
    %0 = vector.broadcast %cst : f32 to vector<1x1x10x4xf32>
    %cst_0 = arith.constant 0.000000e+00 : f32
    %1 = vector.broadcast %cst_0 : f32 to vector<1x18x1x4xf32>
    %c0 = arith.constant 0 : index
    %c0_1 = arith.constant 0 : index
    %c0_2 = arith.constant 0 : index
    %c0_3 = arith.constant 0 : index
    %2 = vector.load %arg8[%c0, %c0_1, %c0_2, %c0_3] : memref<1x18x10x4xf32, #tpu.memory_space<vmem>>, vector<1x1x10x4xf32>
    tpu.vector_store %arg8[%c0, %c0_1, %c0_2, %c0_3], %0 {strides = array<i32>} : memref<1x18x10x4xf32, #tpu.memory_space<vmem>>, vector<1x1x10x4xf32>,
    %c0_4 = arith.constant 0 : index
    %c17 = arith.constant 17 : index
    %c0_5 = arith.constant 0 : index
    %c0_6 = arith.constant 0 : index
    %3 = vector.load %arg8[%c0_4, %c17, %c0_5, %c0_6] : memref<1x18x10x4xf32, #tpu.memory_space<vmem>>, vector<1x1x10x4xf32>
    tpu.vector_store %arg8[%c0_4, %c17, %c0_5, %c0_6], %0 {strides = array<i32>} : memref<1x18x10x4xf32, #tpu.memory_space<vmem>>, vector<1x1x10x4xf32>,
    %c0_7 = arith.constant 0 : index
    %c0_8 = arith.constant 0 : index
    %c0_9 = arith.constant 0 : index
    %c0_10 = arith.constant 0 : index
    %4 = vector.load %arg8[%c0_7, %c0_8, %c0_9, %c0_10] : memref<1x18x10x4xf32, #tpu.memory_space<vmem>>, vector<1x18x1x4xf32>
    tpu.vector_store %arg8[%c0_7, %c0_8, %c0_9, %c0_10], %1 {strides = array<i32>} : memref<1x18x10x4xf32, #tpu.memory_space<vmem>>, vector<1x18x1x4xf32>,
    %c0_11 = arith.constant 0 : index
    %c0_12 = arith.constant 0 : index
    %c9 = arith.constant 9 : index
    %c0_13 = arith.constant 0 : index
    %5 = vector.load %arg8[%c0_11, %c0_12, %c9, %c0_13] : memref<1x18x10x4xf32, #tpu.memory_space<vmem>>, vector<1x18x1x4xf32>
    tpu.vector_store %arg8[%c0_11, %c0_12, %c9, %c0_13], %1 {strides = array<i32>} : memref<1x18x10x4xf32, #tpu.memory_space<vmem>>, vector<1x18x1x4xf32>,
    %cst_14 = arith.constant 0.000000e+00 : f32
    %6 = vector.broadcast %cst_14 : f32 to vector<1x1x10x4xf32>
    %cst_15 = arith.constant 0.000000e+00 : f32
    %7 = vector.broadcast %cst_15 : f32 to vector<1x18x1x4xf32>
    %c0_16 = arith.constant 0 : index
    %c0_17 = arith.constant 0 : index
    %c0_18 = arith.constant 0 : index
    %c0_19 = arith.constant 0 : index
    %8 = vector.load %arg9[%c0_16, %c0_17, %c0_18, %c0_19] : memref<1x18x10x4xf32, #tpu.memory_space<vmem>>, vector<1x1x10x4xf32>
    tpu.vector_store %arg9[%c0_16, %c0_17, %c0_18, %c0_19], %6 {strides = array<i32>} : memref<1x18x10x4xf32, #tpu.memory_space<vmem>>, vector<1x1x10x4xf32>,
    %c0_20 = arith.constant 0 : index
    %c17_21 = arith.constant 17 : index
    %c0_22 = arith.constant 0 : index
    %c0_23 = arith.constant 0 : index
    %9 = vector.load %arg9[%c0_20, %c17_21, %c0_22, %c0_23] : memref<1x18x10x4xf32, #tpu.memory_space<vmem>>, vector<1x1x10x4xf32>
    tpu.vector_store %arg9[%c0_20, %c17_21, %c0_22, %c0_23], %6 {strides = array<i32>} : memref<1x18x10x4xf32, #tpu.memory_space<vmem>>, vector<1x1x10x4xf32>,
    %c0_24 = arith.constant 0 : index
    %c0_25 = arith.constant 0 : index
    %c0_26 = arith.constant 0 : index
    %c0_27 = arith.constant 0 : index
    %10 = vector.load %arg9[%c0_24, %c0_25, %c0_26, %c0_27] : memref<1x18x10x4xf32, #tpu.memory_space<vmem>>, vector<1x18x1x4xf32>
    tpu.vector_store %arg9[%c0_24, %c0_25, %c0_26, %c0_27], %7 {strides = array<i32>} : memref<1x18x10x4xf32, #tpu.memory_space<vmem>>, vector<1x18x1x4xf32>,
    %c0_28 = arith.constant 0 : index
    %c0_29 = arith.constant 0 : index
    %c9_30 = arith.constant 9 : index
    %c0_31 = arith.constant 0 : index
    %11 = vector.load %arg9[%c0_28, %c0_29, %c9_30, %c0_31] : memref<1x18x10x4xf32, #tpu.memory_space<vmem>>, vector<1x18x1x4xf32>
    tpu.vector_store %arg9[%c0_28, %c0_29, %c9_30, %c0_31], %7 {strides = array<i32>} : memref<1x18x10x4xf32, #tpu.memory_space<vmem>>, vector<1x18x1x4xf32>,
    %cst_32 = arith.constant 0.000000e+00 : f32
    %12 = vector.broadcast %cst_32 : f32 to vector<1x1x10x16xf32>
    %cst_33 = arith.constant 0.000000e+00 : f32
    %13 = vector.broadcast %cst_33 : f32 to vector<1x10x1x16xf32>
    %c0_34 = arith.constant 0 : index
    %c0_35 = arith.constant 0 : index
    %c0_36 = arith.constant 0 : index
    %c0_37 = arith.constant 0 : index
    %14 = vector.load %arg10[%c0_34, %c0_35, %c0_36, %c0_37] : memref<1x10x10x16xf32, #tpu.memory_space<vmem>>, vector<1x1x10x16xf32>
    tpu.vector_store %arg10[%c0_34, %c0_35, %c0_36, %c0_37], %12 {strides = array<i32>} : memref<1x10x10x16xf32, #tpu.memory_space<vmem>>, vector<1x1x10x16xf32>,
    %c0_38 = arith.constant 0 : index
    %c9_39 = arith.constant 9 : index
    %c0_40 = arith.constant 0 : index
    %c0_41 = arith.constant 0 : index
    %15 = vector.load %arg10[%c0_38, %c9_39, %c0_40, %c0_41] : memref<1x10x10x16xf32, #tpu.memory_space<vmem>>, vector<1x1x10x16xf32>
    tpu.vector_store %arg10[%c0_38, %c9_39, %c0_40, %c0_41], %12 {strides = array<i32>} : memref<1x10x10x16xf32, #tpu.memory_space<vmem>>, vector<1x1x10x16xf32>,
    %c0_42 = arith.constant 0 : index
    %c0_43 = arith.constant 0 : index
    %c0_44 = arith.constant 0 : index
    %c0_45 = arith.constant 0 : index
    %16 = vector.load %arg10[%c0_42, %c0_43, %c0_44, %c0_45] : memref<1x10x10x16xf32, #tpu.memory_space<vmem>>, vector<1x10x1x16xf32>
    tpu.vector_store %arg10[%c0_42, %c0_43, %c0_44, %c0_45], %13 {strides = array<i32>} : memref<1x10x10x16xf32, #tpu.memory_space<vmem>>, vector<1x10x1x16xf32>,
    %c0_46 = arith.constant 0 : index
    %c0_47 = arith.constant 0 : index
    %c9_48 = arith.constant 9 : index
    %c0_49 = arith.constant 0 : index
    %17 = vector.load %arg10[%c0_46, %c0_47, %c9_48, %c0_49] : memref<1x10x10x16xf32, #tpu.memory_space<vmem>>, vector<1x10x1x16xf32>
    tpu.vector_store %arg10[%c0_46, %c0_47, %c9_48, %c0_49], %13 {strides = array<i32>} : memref<1x10x10x16xf32, #tpu.memory_space<vmem>>, vector<1x10x1x16xf32>,
    %c0_50 = arith.constant 0 : index
    %c0_51 = arith.constant 0 : index
    %c0_52 = arith.constant 0 : index
    %c0_53 = arith.constant 0 : index
    %18 = vector.load %arg1[%c0_50, %c0_51, %c0_52, %c0_53] : memref<1x16x8x4xf32, #tpu.memory_space<vmem>>, vector<1x16x8x4xf32>
    %c0_54 = arith.constant 0 : index
    %c1 = arith.constant 1 : index
    %c1_55 = arith.constant 1 : index
    %c0_56 = arith.constant 0 : index
    %19 = vector.load %arg8[%c0_54, %c1, %c1_55, %c0_56] : memref<1x18x10x4xf32, #tpu.memory_space<vmem>>, vector<1x16x8x4xf32>
    tpu.vector_store %arg8[%c0_54, %c1, %c1_55, %c0_56], %18 {strides = array<i32>} : memref<1x18x10x4xf32, #tpu.memory_space<vmem>>, vector<1x16x8x4xf32>,
    %c0_57 = arith.constant 0 : index
    %c0_58 = arith.constant 0 : index
    %c0_59 = arith.constant 0 : index
    %c0_60 = arith.constant 0 : index
    %20 = vector.load %arg2[%c0_57, %c0_58, %c0_59, %c0_60] : memref<1x16x8x4xf32, #tpu.memory_space<vmem>>, vector<1x16x8x4xf32>
    %c0_61 = arith.constant 0 : index
    %c1_62 = arith.constant 1 : index
    %c1_63 = arith.constant 1 : index
    %c0_64 = arith.constant 0 : index
    %21 = vector.load %arg9[%c0_61, %c1_62, %c1_63, %c0_64] : memref<1x18x10x4xf32, #tpu.memory_space<vmem>>, vector<1x16x8x4xf32>
    tpu.vector_store %arg9[%c0_61, %c1_62, %c1_63, %c0_64], %20 {strides = array<i32>} : memref<1x18x10x4xf32, #tpu.memory_space<vmem>>, vector<1x16x8x4xf32>,
    %c0_65 = arith.constant 0 : index
    %c0_66 = arith.constant 0 : index
    %c0_67 = arith.constant 0 : index
    %c0_68 = arith.constant 0 : index
    %22 = vector.load %arg9[%c0_65, %c0_66, %c0_67, %c0_68] : memref<1x18x10x4xf32, #tpu.memory_space<vmem>>, vector<1x16x8x4xf32>
    %23 = vector.shape_cast %22 : vector<1x16x8x4xf32> to vector<128x4xf32>
    %c0_69 = arith.constant 0 : index
    %c0_70 = arith.constant 0 : index
    %24 = vector.load %arg11[%c0_69, %c0_70] : memref<256x36xf32, #tpu.memory_space<vmem>>, vector<128x4xf32>
    tpu.vector_store %arg11[%c0_69, %c0_70], %23 {strides = array<i32>} : memref<256x36xf32, #tpu.memory_space<vmem>>, vector<128x4xf32>,
    %c0_71 = arith.constant 0 : index
    %c0_72 = arith.constant 0 : index
    %c1_73 = arith.constant 1 : index
    %c0_74 = arith.constant 0 : index
    %25 = vector.load %arg8[%c0_71, %c0_72, %c1_73, %c0_74] : memref<1x18x10x4xf32, #tpu.memory_space<vmem>>, vector<1x16x8x4xf32>
    %26 = vector.shape_cast %25 : vector<1x16x8x4xf32> to vector<128x4xf32>
    %c128 = arith.constant 128 : index
    %c0_75 = arith.constant 0 : index
    %27 = vector.load %arg11[%c128, %c0_75] : memref<256x36xf32, #tpu.memory_space<vmem>>, vector<128x4xf32>
    tpu.vector_store %arg11[%c128, %c0_75], %26 {strides = array<i32>} : memref<256x36xf32, #tpu.memory_space<vmem>>, vector<128x4xf32>,
    %c0_76 = arith.constant 0 : index
    %c0_77 = arith.constant 0 : index
    %c1_78 = arith.constant 1 : index
    %c0_79 = arith.constant 0 : index
    %28 = vector.load %arg8[%c0_76, %c0_77, %c1_78, %c0_79] : memref<1x18x10x4xf32, #tpu.memory_space<vmem>>, vector<1x16x8x4xf32>
    %29 = vector.shape_cast %28 : vector<1x16x8x4xf32> to vector<128x4xf32>
    %c0_80 = arith.constant 0 : index
    %c4 = arith.constant 4 : index
    %30 = vector.load %arg11[%c0_80, %c4] : memref<256x36xf32, #tpu.memory_space<vmem>>, vector<128x4xf32>
    tpu.vector_store %arg11[%c0_80, %c4], %29 {strides = array<i32>} : memref<256x36xf32, #tpu.memory_space<vmem>>, vector<128x4xf32>,
    %c0_81 = arith.constant 0 : index
    %c0_82 = arith.constant 0 : index
    %c1_83 = arith.constant 1 : index
    %c0_84 = arith.constant 0 : index
    %31 = vector.load %arg9[%c0_81, %c0_82, %c1_83, %c0_84] : memref<1x18x10x4xf32, #tpu.memory_space<vmem>>, vector<1x16x8x4xf32>
    %32 = vector.shape_cast %31 : vector<1x16x8x4xf32> to vector<128x4xf32>
    %c128_85 = arith.constant 128 : index
    %c4_86 = arith.constant 4 : index
    %33 = vector.load %arg11[%c128_85, %c4_86] : memref<256x36xf32, #tpu.memory_space<vmem>>, vector<128x4xf32>
    tpu.vector_store %arg11[%c128_85, %c4_86], %32 {strides = array<i32>} : memref<256x36xf32, #tpu.memory_space<vmem>>, vector<128x4xf32>,
    %c0_87 = arith.constant 0 : index
    %c0_88 = arith.constant 0 : index
    %c1_89 = arith.constant 1 : index
    %c0_90 = arith.constant 0 : index
    %34 = vector.load %arg9[%c0_87, %c0_88, %c1_89, %c0_90] : memref<1x18x10x4xf32, #tpu.memory_space<vmem>>, vector<1x16x8x4xf32>
    %35 = vector.shape_cast %34 : vector<1x16x8x4xf32> to vector<128x4xf32>
    %c0_91 = arith.constant 0 : index
    %c8 = arith.constant 8 : index
    %36 = vector.load %arg11[%c0_91, %c8] : memref<256x36xf32, #tpu.memory_space<vmem>>, vector<128x4xf32>
    tpu.vector_store %arg11[%c0_91, %c8], %35 {strides = array<i32>} : memref<256x36xf32, #tpu.memory_space<vmem>>, vector<128x4xf32>,
    %c0_92 = arith.constant 0 : index
    %c0_93 = arith.constant 0 : index
    %c2 = arith.constant 2 : index
    %c0_94 = arith.constant 0 : index
    %37 = vector.load %arg8[%c0_92, %c0_93, %c2, %c0_94] : memref<1x18x10x4xf32, #tpu.memory_space<vmem>>, vector<1x16x8x4xf32>
    %38 = vector.shape_cast %37 : vector<1x16x8x4xf32> to vector<128x4xf32>
    %c128_95 = arith.constant 128 : index
    %c8_96 = arith.constant 8 : index
    %39 = vector.load %arg11[%c128_95, %c8_96] : memref<256x36xf32, #tpu.memory_space<vmem>>, vector<128x4xf32>
    tpu.vector_store %arg11[%c128_95, %c8_96], %38 {strides = array<i32>} : memref<256x36xf32, #tpu.memory_space<vmem>>, vector<128x4xf32>,
    %c0_97 = arith.constant 0 : index
    %c1_98 = arith.constant 1 : index
    %c0_99 = arith.constant 0 : index
    %c0_100 = arith.constant 0 : index
    %40 = vector.load %arg9[%c0_97, %c1_98, %c0_99, %c0_100] : memref<1x18x10x4xf32, #tpu.memory_space<vmem>>, vector<1x16x8x4xf32>
    %41 = vector.shape_cast %40 : vector<1x16x8x4xf32> to vector<128x4xf32>
    %c0_101 = arith.constant 0 : index
    %c12 = arith.constant 12 : index
    %42 = vector.load %arg11[%c0_101, %c12] : memref<256x36xf32, #tpu.memory_space<vmem>>, vector<128x4xf32>
    tpu.vector_store %arg11[%c0_101, %c12], %41 {strides = array<i32>} : memref<256x36xf32, #tpu.memory_space<vmem>>, vector<128x4xf32>,
    %c0_102 = arith.constant 0 : index
    %c1_103 = arith.constant 1 : index
    %c1_104 = arith.constant 1 : index
    %c0_105 = arith.constant 0 : index
    %43 = vector.load %arg8[%c0_102, %c1_103, %c1_104, %c0_105] : memref<1x18x10x4xf32, #tpu.memory_space<vmem>>, vector<1x16x8x4xf32>
    %44 = vector.shape_cast %43 : vector<1x16x8x4xf32> to vector<128x4xf32>
    %c128_106 = arith.constant 128 : index
    %c12_107 = arith.constant 12 : index
    %45 = vector.load %arg11[%c128_106, %c12_107] : memref<256x36xf32, #tpu.memory_space<vmem>>, vector<128x4xf32>
    tpu.vector_store %arg11[%c128_106, %c12_107], %44 {strides = array<i32>} : memref<256x36xf32, #tpu.memory_space<vmem>>, vector<128x4xf32>,
    %c0_108 = arith.constant 0 : index
    %c1_109 = arith.constant 1 : index
    %c1_110 = arith.constant 1 : index
    %c0_111 = arith.constant 0 : index
    %46 = vector.load %arg8[%c0_108, %c1_109, %c1_110, %c0_111] : memref<1x18x10x4xf32, #tpu.memory_space<vmem>>, vector<1x16x8x4xf32>
    %47 = vector.shape_cast %46 : vector<1x16x8x4xf32> to vector<128x4xf32>
    %c0_112 = arith.constant 0 : index
    %c16 = arith.constant 16 : index
    %48 = vector.load %arg11[%c0_112, %c16] : memref<256x36xf32, #tpu.memory_space<vmem>>, vector<128x4xf32>
    tpu.vector_store %arg11[%c0_112, %c16], %47 {strides = array<i32>} : memref<256x36xf32, #tpu.memory_space<vmem>>, vector<128x4xf32>,
    %c0_113 = arith.constant 0 : index
    %c1_114 = arith.constant 1 : index
    %c1_115 = arith.constant 1 : index
    %c0_116 = arith.constant 0 : index
    %49 = vector.load %arg9[%c0_113, %c1_114, %c1_115, %c0_116] : memref<1x18x10x4xf32, #tpu.memory_space<vmem>>, vector<1x16x8x4xf32>
    %50 = vector.shape_cast %49 : vector<1x16x8x4xf32> to vector<128x4xf32>
    %c128_117 = arith.constant 128 : index
    %c16_118 = arith.constant 16 : index
    %51 = vector.load %arg11[%c128_117, %c16_118] : memref<256x36xf32, #tpu.memory_space<vmem>>, vector<128x4xf32>
    tpu.vector_store %arg11[%c128_117, %c16_118], %50 {strides = array<i32>} : memref<256x36xf32, #tpu.memory_space<vmem>>, vector<128x4xf32>,
    %c0_119 = arith.constant 0 : index
    %c1_120 = arith.constant 1 : index
    %c1_121 = arith.constant 1 : index
    %c0_122 = arith.constant 0 : index
    %52 = vector.load %arg9[%c0_119, %c1_120, %c1_121, %c0_122] : memref<1x18x10x4xf32, #tpu.memory_space<vmem>>, vector<1x16x8x4xf32>
    %53 = vector.shape_cast %52 : vector<1x16x8x4xf32> to vector<128x4xf32>
    %c0_123 = arith.constant 0 : index
    %c20 = arith.constant 20 : index
    %54 = vector.load %arg11[%c0_123, %c20] : memref<256x36xf32, #tpu.memory_space<vmem>>, vector<128x4xf32>
    tpu.vector_store %arg11[%c0_123, %c20], %53 {strides = array<i32>} : memref<256x36xf32, #tpu.memory_space<vmem>>, vector<128x4xf32>,
    %c0_124 = arith.constant 0 : index
    %c1_125 = arith.constant 1 : index
    %c2_126 = arith.constant 2 : index
    %c0_127 = arith.constant 0 : index
    %55 = vector.load %arg8[%c0_124, %c1_125, %c2_126, %c0_127] : memref<1x18x10x4xf32, #tpu.memory_space<vmem>>, vector<1x16x8x4xf32>
    %56 = vector.shape_cast %55 : vector<1x16x8x4xf32> to vector<128x4xf32>
    %c128_128 = arith.constant 128 : index
    %c20_129 = arith.constant 20 : index
    %57 = vector.load %arg11[%c128_128, %c20_129] : memref<256x36xf32, #tpu.memory_space<vmem>>, vector<128x4xf32>
    tpu.vector_store %arg11[%c128_128, %c20_129], %56 {strides = array<i32>} : memref<256x36xf32, #tpu.memory_space<vmem>>, vector<128x4xf32>,
    %c0_130 = arith.constant 0 : index
    %c2_131 = arith.constant 2 : index
    %c0_132 = arith.constant 0 : index
    %c0_133 = arith.constant 0 : index
    %58 = vector.load %arg9[%c0_130, %c2_131, %c0_132, %c0_133] : memref<1x18x10x4xf32, #tpu.memory_space<vmem>>, vector<1x16x8x4xf32>
    %59 = vector.shape_cast %58 : vector<1x16x8x4xf32> to vector<128x4xf32>
    %c0_134 = arith.constant 0 : index
    %c24 = arith.constant 24 : index
    %60 = vector.load %arg11[%c0_134, %c24] : memref<256x36xf32, #tpu.memory_space<vmem>>, vector<128x4xf32>
    tpu.vector_store %arg11[%c0_134, %c24], %59 {strides = array<i32>} : memref<256x36xf32, #tpu.memory_space<vmem>>, vector<128x4xf32>,
    %c0_135 = arith.constant 0 : index
    %c2_136 = arith.constant 2 : index
    %c1_137 = arith.constant 1 : index
    %c0_138 = arith.constant 0 : index
    %61 = vector.load %arg8[%c0_135, %c2_136, %c1_137, %c0_138] : memref<1x18x10x4xf32, #tpu.memory_space<vmem>>, vector<1x16x8x4xf32>
    %62 = vector.shape_cast %61 : vector<1x16x8x4xf32> to vector<128x4xf32>
    %c128_139 = arith.constant 128 : index
    %c24_140 = arith.constant 24 : index
    %63 = vector.load %arg11[%c128_139, %c24_140] : memref<256x36xf32, #tpu.memory_space<vmem>>, vector<128x4xf32>
    tpu.vector_store %arg11[%c128_139, %c24_140], %62 {strides = array<i32>} : memref<256x36xf32, #tpu.memory_space<vmem>>, vector<128x4xf32>,
    %c0_141 = arith.constant 0 : index
    %c2_142 = arith.constant 2 : index
    %c1_143 = arith.constant 1 : index
    %c0_144 = arith.constant 0 : index
    %64 = vector.load %arg8[%c0_141, %c2_142, %c1_143, %c0_144] : memref<1x18x10x4xf32, #tpu.memory_space<vmem>>, vector<1x16x8x4xf32>
    %65 = vector.shape_cast %64 : vector<1x16x8x4xf32> to vector<128x4xf32>
    %c0_145 = arith.constant 0 : index
    %c28 = arith.constant 28 : index
    %66 = vector.load %arg11[%c0_145, %c28] : memref<256x36xf32, #tpu.memory_space<vmem>>, vector<128x4xf32>
    tpu.vector_store %arg11[%c0_145, %c28], %65 {strides = array<i32>} : memref<256x36xf32, #tpu.memory_space<vmem>>, vector<128x4xf32>,
    %c0_146 = arith.constant 0 : index
    %c2_147 = arith.constant 2 : index
    %c1_148 = arith.constant 1 : index
    %c0_149 = arith.constant 0 : index
    %67 = vector.load %arg9[%c0_146, %c2_147, %c1_148, %c0_149] : memref<1x18x10x4xf32, #tpu.memory_space<vmem>>, vector<1x16x8x4xf32>
    %68 = vector.shape_cast %67 : vector<1x16x8x4xf32> to vector<128x4xf32>
    %c128_150 = arith.constant 128 : index
    %c28_151 = arith.constant 28 : index
    %69 = vector.load %arg11[%c128_150, %c28_151] : memref<256x36xf32, #tpu.memory_space<vmem>>, vector<128x4xf32>
    tpu.vector_store %arg11[%c128_150, %c28_151], %68 {strides = array<i32>} : memref<256x36xf32, #tpu.memory_space<vmem>>, vector<128x4xf32>,
    %c0_152 = arith.constant 0 : index
    %c2_153 = arith.constant 2 : index
    %c1_154 = arith.constant 1 : index
    %c0_155 = arith.constant 0 : index
    %70 = vector.load %arg9[%c0_152, %c2_153, %c1_154, %c0_155] : memref<1x18x10x4xf32, #tpu.memory_space<vmem>>, vector<1x16x8x4xf32>
    %71 = vector.shape_cast %70 : vector<1x16x8x4xf32> to vector<128x4xf32>
    %c0_156 = arith.constant 0 : index
    %c32 = arith.constant 32 : index
    %72 = vector.load %arg11[%c0_156, %c32] : memref<256x36xf32, #tpu.memory_space<vmem>>, vector<128x4xf32>
    tpu.vector_store %arg11[%c0_156, %c32], %71 {strides = array<i32>} : memref<256x36xf32, #tpu.memory_space<vmem>>, vector<128x4xf32>,
    %c0_157 = arith.constant 0 : index
    %c2_158 = arith.constant 2 : index
    %c2_159 = arith.constant 2 : index
    %c0_160 = arith.constant 0 : index
    %73 = vector.load %arg8[%c0_157, %c2_158, %c2_159, %c0_160] : memref<1x18x10x4xf32, #tpu.memory_space<vmem>>, vector<1x16x8x4xf32>
    %74 = vector.shape_cast %73 : vector<1x16x8x4xf32> to vector<128x4xf32>
    %c128_161 = arith.constant 128 : index
    %c32_162 = arith.constant 32 : index
    %75 = vector.load %arg11[%c128_161, %c32_162] : memref<256x36xf32, #tpu.memory_space<vmem>>, vector<128x4xf32>
    tpu.vector_store %arg11[%c128_161, %c32_162], %74 {strides = array<i32>} : memref<256x36xf32, #tpu.memory_space<vmem>>, vector<128x4xf32>,
    %c0_163 = arith.constant 0 : index
    %c0_164 = arith.constant 0 : index
    %76 = vector.load %arg11[%c0_163, %c0_164] : memref<256x36xf32, #tpu.memory_space<vmem>>, vector<256x36xf32>
    %c0_165 = arith.constant 0 : index
    %c0_166 = arith.constant 0 : index
    %77 = vector.load %arg3[%c0_165, %c0_166] : memref<36x16xf32, #tpu.memory_space<vmem>>, vector<36x16xf32>
    %cst_167 = arith.constant dense<0.000000e+00> : vector<256x16xf32>
    %78 = tpu.matmul %76, %77, %cst_167 {dimension_numbers = #tpu.dot_dimension_numbers<[1], [0], [0], [1], [0, 0, 1, 1], [], []>} : vector<256x36xf32>, vector<36x16xf32>, vector<256x16xf32> -> vector<256x16xf32>
    %c0_168 = arith.constant 0 : index
    %c0_169 = arith.constant 0 : index
    %79 = vector.load %arg4[%c0_168, %c0_169] : memref<1x16xf32, #tpu.memory_space<vmem>>, vector<1x16xf32>
    %80 = vector.broadcast %79 : vector<1x16xf32> to vector<256x16xf32>
    %81 = arith.addf %78, %80 : vector<256x16xf32>
    %82 = vector.extract_strided_slice %81 {offsets = [0, 0], sizes = [128, 16], strides = [1, 1]} : vector<256x16xf32> to vector<128x16xf32>
    %83 = vector.shape_cast %82 : vector<128x16xf32> to vector<1x16x8x16xf32>
    %84 = vector.extract_strided_slice %81 {offsets = [128, 0], sizes = [128, 16], strides = [1, 1]} : vector<256x16xf32> to vector<128x16xf32>
    %85 = vector.shape_cast %84 : vector<128x16xf32> to vector<1x16x8x16xf32>
    %86 = arith.maximumf %83, %85 : vector<1x16x8x16xf32>
    %c0_170 = arith.constant 0 : index
    %c0_171 = arith.constant 0 : index
    %c0_172 = arith.constant 0 : index
    %c0_173 = arith.constant 0 : index
    %87 = vector.load %arg13[%c0_170, %c0_171, %c0_172, %c0_173] : memref<1x16x8x16xf32, #tpu.memory_space<vmem>>, vector<1x16x8x16xf32>
    tpu.vector_store %arg13[%c0_170, %c0_171, %c0_172, %c0_173], %86 {strides = array<i32>} : memref<1x16x8x16xf32, #tpu.memory_space<vmem>>, vector<1x16x8x16xf32>,
    %c0_174 = arith.constant 0 : index
    %c0_175 = arith.constant 0 : index
    %c1_176 = arith.constant 1 : index
    %c0_177 = arith.constant 0 : index
    %88 = vector.load %arg13[%c0_174, %c0_175, %c1_176, %c0_177] : memref<1x16x8x16xf32, #tpu.memory_space<vmem>>, vector<1x16x7x16xf32>
    %89 = vector.extract_strided_slice %85 {offsets = [0, 0, 0, 0], sizes = [1, 16, 7, 16], strides = [1, 1, 1, 1]} : vector<1x16x8x16xf32> to vector<1x16x7x16xf32>
    %90 = arith.maximumf %88, %89 : vector<1x16x7x16xf32>
    %c0_178 = arith.constant 0 : index
    %c0_179 = arith.constant 0 : index
    %c1_180 = arith.constant 1 : index
    %c0_181 = arith.constant 0 : index
    %91 = vector.load %arg13[%c0_178, %c0_179, %c1_180, %c0_181] : memref<1x16x8x16xf32, #tpu.memory_space<vmem>>, vector<1x16x7x16xf32>
    tpu.vector_store %arg13[%c0_178, %c0_179, %c1_180, %c0_181], %90 {strides = array<i32>} : memref<1x16x8x16xf32, #tpu.memory_space<vmem>>, vector<1x16x7x16xf32>,
    %c0_182 = arith.constant 0 : index
    %c0_183 = arith.constant 0 : index
    %c0_184 = arith.constant 0 : index
    %c0_185 = arith.constant 0 : index
    %92 = vector.load %arg13[%c0_182, %c0_183, %c0_184, %c0_185] : memref<1x16x8x16xf32, #tpu.memory_space<vmem>>, vector<1x16x8x16xf32>
    %93 = vector.shape_cast %92 : vector<1x16x8x16xf32> to vector<1x8x2x8x16xf32>
    %94 = vector.extract_strided_slice %93 {offsets = [0, 0, 0, 0, 0], sizes = [1, 8, 1, 8, 16], strides = [1, 1, 1, 1, 1]} : vector<1x8x2x8x16xf32> to vector<1x8x1x8x16xf32>
    %95 = vector.shape_cast %94 : vector<1x8x1x8x16xf32> to vector<1x8x8x16xf32>
    %96 = vector.extract_strided_slice %93 {offsets = [0, 0, 1, 0, 0], sizes = [1, 8, 1, 8, 16], strides = [1, 1, 1, 1, 1]} : vector<1x8x2x8x16xf32> to vector<1x8x1x8x16xf32>
    %97 = vector.shape_cast %96 : vector<1x8x1x8x16xf32> to vector<1x8x8x16xf32>
    %98 = arith.maximumf %95, %97 : vector<1x8x8x16xf32>
    %99 = vector.extract_strided_slice %98 {offsets = [0, 0, 0, 0], sizes = [1, 1, 8, 16], strides = [1, 1, 1, 1]} : vector<1x8x8x16xf32> to vector<1x1x8x16xf32>
    %c0_186 = arith.constant 0 : index
    %c0_187 = arith.constant 0 : index
    %c0_188 = arith.constant 0 : index
    %c0_189 = arith.constant 0 : index
    %100 = vector.load %arg14[%c0_186, %c0_187, %c0_188, %c0_189] : memref<1x8x8x16xf32, #tpu.memory_space<vmem>>, vector<1x1x8x16xf32>
    tpu.vector_store %arg14[%c0_186, %c0_187, %c0_188, %c0_189], %99 {strides = array<i32>} : memref<1x8x8x16xf32, #tpu.memory_space<vmem>>, vector<1x1x8x16xf32>,
    %101 = vector.extract_strided_slice %98 {offsets = [0, 1, 0, 0], sizes = [1, 7, 8, 16], strides = [1, 1, 1, 1]} : vector<1x8x8x16xf32> to vector<1x7x8x16xf32>
    %102 = vector.extract_strided_slice %97 {offsets = [0, 0, 0, 0], sizes = [1, 7, 8, 16], strides = [1, 1, 1, 1]} : vector<1x8x8x16xf32> to vector<1x7x8x16xf32>
    %103 = arith.maximumf %101, %102 : vector<1x7x8x16xf32>
    %c0_190 = arith.constant 0 : index
    %c1_191 = arith.constant 1 : index
    %c0_192 = arith.constant 0 : index
    %c0_193 = arith.constant 0 : index
    %104 = vector.load %arg14[%c0_190, %c1_191, %c0_192, %c0_193] : memref<1x8x8x16xf32, #tpu.memory_space<vmem>>, vector<1x7x8x16xf32>
    tpu.vector_store %arg14[%c0_190, %c1_191, %c0_192, %c0_193], %103 {strides = array<i32>} : memref<1x8x8x16xf32, #tpu.memory_space<vmem>>, vector<1x7x8x16xf32>,
    %c0_194 = arith.constant 0 : index
    %c0_195 = arith.constant 0 : index
    %c0_196 = arith.constant 0 : index
    %c0_197 = arith.constant 0 : index
    %105 = vector.load %arg14[%c0_194, %c0_195, %c0_196, %c0_197] : memref<1x8x8x16xf32, #tpu.memory_space<vmem>>, vector<1x8x8x16xf32>
    %cst_198 = arith.constant 0.000000e+00 : f32
    %106 = vector.broadcast %cst_198 : f32 to vector<1x8x8x16xf32>
    %107 = arith.maximumf %105, %106 : vector<1x8x8x16xf32>
    %c0_199 = arith.constant 0 : index
    %c1_200 = arith.constant 1 : index
    %c1_201 = arith.constant 1 : index
    %c0_202 = arith.constant 0 : index
    %108 = vector.load %arg10[%c0_199, %c1_200, %c1_201, %c0_202] : memref<1x10x10x16xf32, #tpu.memory_space<vmem>>, vector<1x8x8x16xf32>
    tpu.vector_store %arg10[%c0_199, %c1_200, %c1_201, %c0_202], %107 {strides = array<i32>} : memref<1x10x10x16xf32, #tpu.memory_space<vmem>>, vector<1x8x8x16xf32>,
    %c0_203 = arith.constant 0 : index
    %c0_204 = arith.constant 0 : index
    %c0_205 = arith.constant 0 : index
    %109 = vector.load %arg5[%c0_203, %c0_204, %c0_205] : memref<4x144x16xf32, #tpu.memory_space<vmem>>, vector<1x144x16xf32>
    %110 = vector.shape_cast %109 : vector<1x144x16xf32> to vector<144x16xf32>
    %c0_206 = arith.constant 0 : index
    %c0_207 = arith.constant 0 : index
    %c0_208 = arith.constant 0 : index
    %111 = vector.load %arg6[%c0_206, %c0_207, %c0_208] : memref<4x1x16xf32, #tpu.memory_space<vmem>>, vector<1x1x16xf32>
    %112 = vector.shape_cast %111 : vector<1x1x16xf32> to vector<1x16xf32>
    %c0_209 = arith.constant 0 : index
    %c0_210 = arith.constant 0 : index
    %c0_211 = arith.constant 0 : index
    %c0_212 = arith.constant 0 : index
    %113 = vector.load %arg10[%c0_209, %c0_210, %c0_211, %c0_212] : memref<1x10x10x16xf32, #tpu.memory_space<vmem>>, vector<1x8x8x16xf32>
    %114 = vector.shape_cast %113 : vector<1x8x8x16xf32> to vector<64x16xf32>
    %c0_213 = arith.constant 0 : index
    %c0_214 = arith.constant 0 : index
    %115 = vector.load %arg12[%c0_213, %c0_214] : memref<64x144xf32, #tpu.memory_space<vmem>>, vector<64x16xf32>
    tpu.vector_store %arg12[%c0_213, %c0_214], %114 {strides = array<i32>} : memref<64x144xf32, #tpu.memory_space<vmem>>, vector<64x16xf32>,
    %c0_215 = arith.constant 0 : index
    %c0_216 = arith.constant 0 : index
    %c1_217 = arith.constant 1 : index
    %c0_218 = arith.constant 0 : index
    %116 = vector.load %arg10[%c0_215, %c0_216, %c1_217, %c0_218] : memref<1x10x10x16xf32, #tpu.memory_space<vmem>>, vector<1x8x8x16xf32>
    %117 = vector.shape_cast %116 : vector<1x8x8x16xf32> to vector<64x16xf32>
    %c0_219 = arith.constant 0 : index
    %c16_220 = arith.constant 16 : index
    %118 = vector.load %arg12[%c0_219, %c16_220] : memref<64x144xf32, #tpu.memory_space<vmem>>, vector<64x16xf32>
    tpu.vector_store %arg12[%c0_219, %c16_220], %117 {strides = array<i32>} : memref<64x144xf32, #tpu.memory_space<vmem>>, vector<64x16xf32>,
    %c0_221 = arith.constant 0 : index
    %c0_222 = arith.constant 0 : index
    %c2_223 = arith.constant 2 : index
    %c0_224 = arith.constant 0 : index
    %119 = vector.load %arg10[%c0_221, %c0_222, %c2_223, %c0_224] : memref<1x10x10x16xf32, #tpu.memory_space<vmem>>, vector<1x8x8x16xf32>
    %120 = vector.shape_cast %119 : vector<1x8x8x16xf32> to vector<64x16xf32>
    %c0_225 = arith.constant 0 : index
    %c32_226 = arith.constant 32 : index
    %121 = vector.load %arg12[%c0_225, %c32_226] : memref<64x144xf32, #tpu.memory_space<vmem>>, vector<64x16xf32>
    tpu.vector_store %arg12[%c0_225, %c32_226], %120 {strides = array<i32>} : memref<64x144xf32, #tpu.memory_space<vmem>>, vector<64x16xf32>,
    %c0_227 = arith.constant 0 : index
    %c1_228 = arith.constant 1 : index
    %c0_229 = arith.constant 0 : index
    %c0_230 = arith.constant 0 : index
    %122 = vector.load %arg10[%c0_227, %c1_228, %c0_229, %c0_230] : memref<1x10x10x16xf32, #tpu.memory_space<vmem>>, vector<1x8x8x16xf32>
    %123 = vector.shape_cast %122 : vector<1x8x8x16xf32> to vector<64x16xf32>
    %c0_231 = arith.constant 0 : index
    %c48 = arith.constant 48 : index
    %124 = vector.load %arg12[%c0_231, %c48] : memref<64x144xf32, #tpu.memory_space<vmem>>, vector<64x16xf32>
    tpu.vector_store %arg12[%c0_231, %c48], %123 {strides = array<i32>} : memref<64x144xf32, #tpu.memory_space<vmem>>, vector<64x16xf32>,
    %c0_232 = arith.constant 0 : index
    %c1_233 = arith.constant 1 : index
    %c1_234 = arith.constant 1 : index
    %c0_235 = arith.constant 0 : index
    %125 = vector.load %arg10[%c0_232, %c1_233, %c1_234, %c0_235] : memref<1x10x10x16xf32, #tpu.memory_space<vmem>>, vector<1x8x8x16xf32>
    %126 = vector.shape_cast %125 : vector<1x8x8x16xf32> to vector<64x16xf32>
    %c0_236 = arith.constant 0 : index
    %c64 = arith.constant 64 : index
    %127 = vector.load %arg12[%c0_236, %c64] : memref<64x144xf32, #tpu.memory_space<vmem>>, vector<64x16xf32>
    tpu.vector_store %arg12[%c0_236, %c64], %126 {strides = array<i32>} : memref<64x144xf32, #tpu.memory_space<vmem>>, vector<64x16xf32>,
    %c0_237 = arith.constant 0 : index
    %c1_238 = arith.constant 1 : index
    %c2_239 = arith.constant 2 : index
    %c0_240 = arith.constant 0 : index
    %128 = vector.load %arg10[%c0_237, %c1_238, %c2_239, %c0_240] : memref<1x10x10x16xf32, #tpu.memory_space<vmem>>, vector<1x8x8x16xf32>
    %129 = vector.shape_cast %128 : vector<1x8x8x16xf32> to vector<64x16xf32>
    %c0_241 = arith.constant 0 : index
    %c80 = arith.constant 80 : index
    %130 = vector.load %arg12[%c0_241, %c80] : memref<64x144xf32, #tpu.memory_space<vmem>>, vector<64x16xf32>
    tpu.vector_store %arg12[%c0_241, %c80], %129 {strides = array<i32>} : memref<64x144xf32, #tpu.memory_space<vmem>>, vector<64x16xf32>,
    %c0_242 = arith.constant 0 : index
    %c2_243 = arith.constant 2 : index
    %c0_244 = arith.constant 0 : index
    %c0_245 = arith.constant 0 : index
    %131 = vector.load %arg10[%c0_242, %c2_243, %c0_244, %c0_245] : memref<1x10x10x16xf32, #tpu.memory_space<vmem>>, vector<1x8x8x16xf32>
    %132 = vector.shape_cast %131 : vector<1x8x8x16xf32> to vector<64x16xf32>
    %c0_246 = arith.constant 0 : index
    %c96 = arith.constant 96 : index
    %133 = vector.load %arg12[%c0_246, %c96] : memref<64x144xf32, #tpu.memory_space<vmem>>, vector<64x16xf32>
    tpu.vector_store %arg12[%c0_246, %c96], %132 {strides = array<i32>} : memref<64x144xf32, #tpu.memory_space<vmem>>, vector<64x16xf32>,
    %c0_247 = arith.constant 0 : index
    %c2_248 = arith.constant 2 : index
    %c1_249 = arith.constant 1 : index
    %c0_250 = arith.constant 0 : index
    %134 = vector.load %arg10[%c0_247, %c2_248, %c1_249, %c0_250] : memref<1x10x10x16xf32, #tpu.memory_space<vmem>>, vector<1x8x8x16xf32>
    %135 = vector.shape_cast %134 : vector<1x8x8x16xf32> to vector<64x16xf32>
    %c0_251 = arith.constant 0 : index
    %c112 = arith.constant 112 : index
    %136 = vector.load %arg12[%c0_251, %c112] : memref<64x144xf32, #tpu.memory_space<vmem>>, vector<64x16xf32>
    tpu.vector_store %arg12[%c0_251, %c112], %135 {strides = array<i32>} : memref<64x144xf32, #tpu.memory_space<vmem>>, vector<64x16xf32>,
    %c0_252 = arith.constant 0 : index
    %c2_253 = arith.constant 2 : index
    %c2_254 = arith.constant 2 : index
    %c0_255 = arith.constant 0 : index
    %137 = vector.load %arg10[%c0_252, %c2_253, %c2_254, %c0_255] : memref<1x10x10x16xf32, #tpu.memory_space<vmem>>, vector<1x8x8x16xf32>
    %138 = vector.shape_cast %137 : vector<1x8x8x16xf32> to vector<64x16xf32>
    %c0_256 = arith.constant 0 : index
    %c128_257 = arith.constant 128 : index
    %139 = vector.load %arg12[%c0_256, %c128_257] : memref<64x144xf32, #tpu.memory_space<vmem>>, vector<64x16xf32>
    tpu.vector_store %arg12[%c0_256, %c128_257], %138 {strides = array<i32>} : memref<64x144xf32, #tpu.memory_space<vmem>>, vector<64x16xf32>,
    %c0_258 = arith.constant 0 : index
    %c0_259 = arith.constant 0 : index
    %140 = vector.load %arg12[%c0_258, %c0_259] : memref<64x144xf32, #tpu.memory_space<vmem>>, vector<64x144xf32>
    %cst_260 = arith.constant dense<0.000000e+00> : vector<64x16xf32>
    %141 = tpu.matmul %140, %110, %cst_260 {dimension_numbers = #tpu.dot_dimension_numbers<[1], [0], [0], [1], [0, 0, 1, 1], [], []>} : vector<64x144xf32>, vector<144x16xf32>, vector<64x16xf32> -> vector<64x16xf32>
    %142 = vector.broadcast %112 : vector<1x16xf32> to vector<64x16xf32>
    %143 = arith.addf %141, %142 : vector<64x16xf32>
    %cst_261 = arith.constant 0.000000e+00 : f32
    %144 = vector.broadcast %cst_261 : f32 to vector<64x16xf32>
    %145 = arith.maximumf %143, %144 : vector<64x16xf32>
    %146 = vector.shape_cast %145 : vector<64x16xf32> to vector<1x8x8x16xf32>
    %c0_262 = arith.constant 0 : index
    %c1_263 = arith.constant 1 : index
    %c1_264 = arith.constant 1 : index
    %c0_265 = arith.constant 0 : index
    %147 = vector.load %arg10[%c0_262, %c1_263, %c1_264, %c0_265] : memref<1x10x10x16xf32, #tpu.memory_space<vmem>>, vector<1x8x8x16xf32>
    tpu.vector_store %arg10[%c0_262, %c1_263, %c1_264, %c0_265], %146 {strides = array<i32>} : memref<1x10x10x16xf32, #tpu.memory_space<vmem>>, vector<1x8x8x16xf32>,
    %c1_266 = arith.constant 1 : index
    %c0_267 = arith.constant 0 : index
    %c0_268 = arith.constant 0 : index
    %148 = vector.load %arg5[%c1_266, %c0_267, %c0_268] : memref<4x144x16xf32, #tpu.memory_space<vmem>>, vector<1x144x16xf32>
    %149 = vector.shape_cast %148 : vector<1x144x16xf32> to vector<144x16xf32>
    %c1_269 = arith.constant 1 : index
    %c0_270 = arith.constant 0 : index
    %c0_271 = arith.constant 0 : index
    %150 = vector.load %arg6[%c1_269, %c0_270, %c0_271] : memref<4x1x16xf32, #tpu.memory_space<vmem>>, vector<1x1x16xf32>
    %151 = vector.shape_cast %150 : vector<1x1x16xf32> to vector<1x16xf32>
    %c0_272 = arith.constant 0 : index
    %c0_273 = arith.constant 0 : index
    %c0_274 = arith.constant 0 : index
    %c0_275 = arith.constant 0 : index
    %152 = vector.load %arg10[%c0_272, %c0_273, %c0_274, %c0_275] : memref<1x10x10x16xf32, #tpu.memory_space<vmem>>, vector<1x8x8x16xf32>
    %153 = vector.shape_cast %152 : vector<1x8x8x16xf32> to vector<64x16xf32>
    %c0_276 = arith.constant 0 : index
    %c0_277 = arith.constant 0 : index
    %154 = vector.load %arg12[%c0_276, %c0_277] : memref<64x144xf32, #tpu.memory_space<vmem>>, vector<64x16xf32>
    tpu.vector_store %arg12[%c0_276, %c0_277], %153 {strides = array<i32>} : memref<64x144xf32, #tpu.memory_space<vmem>>, vector<64x16xf32>,
    %c0_278 = arith.constant 0 : index
    %c0_279 = arith.constant 0 : index
    %c1_280 = arith.constant 1 : index
    %c0_281 = arith.constant 0 : index
    %155 = vector.load %arg10[%c0_278, %c0_279, %c1_280, %c0_281] : memref<1x10x10x16xf32, #tpu.memory_space<vmem>>, vector<1x8x8x16xf32>
    %156 = vector.shape_cast %155 : vector<1x8x8x16xf32> to vector<64x16xf32>
    %c0_282 = arith.constant 0 : index
    %c16_283 = arith.constant 16 : index
    %157 = vector.load %arg12[%c0_282, %c16_283] : memref<64x144xf32, #tpu.memory_space<vmem>>, vector<64x16xf32>
    tpu.vector_store %arg12[%c0_282, %c16_283], %156 {strides = array<i32>} : memref<64x144xf32, #tpu.memory_space<vmem>>, vector<64x16xf32>,
    %c0_284 = arith.constant 0 : index
    %c0_285 = arith.constant 0 : index
    %c2_286 = arith.constant 2 : index
    %c0_287 = arith.constant 0 : index
    %158 = vector.load %arg10[%c0_284, %c0_285, %c2_286, %c0_287] : memref<1x10x10x16xf32, #tpu.memory_space<vmem>>, vector<1x8x8x16xf32>
    %159 = vector.shape_cast %158 : vector<1x8x8x16xf32> to vector<64x16xf32>
    %c0_288 = arith.constant 0 : index
    %c32_289 = arith.constant 32 : index
    %160 = vector.load %arg12[%c0_288, %c32_289] : memref<64x144xf32, #tpu.memory_space<vmem>>, vector<64x16xf32>
    tpu.vector_store %arg12[%c0_288, %c32_289], %159 {strides = array<i32>} : memref<64x144xf32, #tpu.memory_space<vmem>>, vector<64x16xf32>,
    %c0_290 = arith.constant 0 : index
    %c1_291 = arith.constant 1 : index
    %c0_292 = arith.constant 0 : index
    %c0_293 = arith.constant 0 : index
    %161 = vector.load %arg10[%c0_290, %c1_291, %c0_292, %c0_293] : memref<1x10x10x16xf32, #tpu.memory_space<vmem>>, vector<1x8x8x16xf32>
    %162 = vector.shape_cast %161 : vector<1x8x8x16xf32> to vector<64x16xf32>
    %c0_294 = arith.constant 0 : index
    %c48_295 = arith.constant 48 : index
    %163 = vector.load %arg12[%c0_294, %c48_295] : memref<64x144xf32, #tpu.memory_space<vmem>>, vector<64x16xf32>
    tpu.vector_store %arg12[%c0_294, %c48_295], %162 {strides = array<i32>} : memref<64x144xf32, #tpu.memory_space<vmem>>, vector<64x16xf32>,
    %c0_296 = arith.constant 0 : index
    %c1_297 = arith.constant 1 : index
    %c1_298 = arith.constant 1 : index
    %c0_299 = arith.constant 0 : index
    %164 = vector.load %arg10[%c0_296, %c1_297, %c1_298, %c0_299] : memref<1x10x10x16xf32, #tpu.memory_space<vmem>>, vector<1x8x8x16xf32>
    %165 = vector.shape_cast %164 : vector<1x8x8x16xf32> to vector<64x16xf32>
    %c0_300 = arith.constant 0 : index
    %c64_301 = arith.constant 64 : index
    %166 = vector.load %arg12[%c0_300, %c64_301] : memref<64x144xf32, #tpu.memory_space<vmem>>, vector<64x16xf32>
    tpu.vector_store %arg12[%c0_300, %c64_301], %165 {strides = array<i32>} : memref<64x144xf32, #tpu.memory_space<vmem>>, vector<64x16xf32>,
    %c0_302 = arith.constant 0 : index
    %c1_303 = arith.constant 1 : index
    %c2_304 = arith.constant 2 : index
    %c0_305 = arith.constant 0 : index
    %167 = vector.load %arg10[%c0_302, %c1_303, %c2_304, %c0_305] : memref<1x10x10x16xf32, #tpu.memory_space<vmem>>, vector<1x8x8x16xf32>
    %168 = vector.shape_cast %167 : vector<1x8x8x16xf32> to vector<64x16xf32>
    %c0_306 = arith.constant 0 : index
    %c80_307 = arith.constant 80 : index
    %169 = vector.load %arg12[%c0_306, %c80_307] : memref<64x144xf32, #tpu.memory_space<vmem>>, vector<64x16xf32>
    tpu.vector_store %arg12[%c0_306, %c80_307], %168 {strides = array<i32>} : memref<64x144xf32, #tpu.memory_space<vmem>>, vector<64x16xf32>,
    %c0_308 = arith.constant 0 : index
    %c2_309 = arith.constant 2 : index
    %c0_310 = arith.constant 0 : index
    %c0_311 = arith.constant 0 : index
    %170 = vector.load %arg10[%c0_308, %c2_309, %c0_310, %c0_311] : memref<1x10x10x16xf32, #tpu.memory_space<vmem>>, vector<1x8x8x16xf32>
    %171 = vector.shape_cast %170 : vector<1x8x8x16xf32> to vector<64x16xf32>
    %c0_312 = arith.constant 0 : index
    %c96_313 = arith.constant 96 : index
    %172 = vector.load %arg12[%c0_312, %c96_313] : memref<64x144xf32, #tpu.memory_space<vmem>>, vector<64x16xf32>
    tpu.vector_store %arg12[%c0_312, %c96_313], %171 {strides = array<i32>} : memref<64x144xf32, #tpu.memory_space<vmem>>, vector<64x16xf32>,
    %c0_314 = arith.constant 0 : index
    %c2_315 = arith.constant 2 : index
    %c1_316 = arith.constant 1 : index
    %c0_317 = arith.constant 0 : index
    %173 = vector.load %arg10[%c0_314, %c2_315, %c1_316, %c0_317] : memref<1x10x10x16xf32, #tpu.memory_space<vmem>>, vector<1x8x8x16xf32>
    %174 = vector.shape_cast %173 : vector<1x8x8x16xf32> to vector<64x16xf32>
    %c0_318 = arith.constant 0 : index
    %c112_319 = arith.constant 112 : index
    %175 = vector.load %arg12[%c0_318, %c112_319] : memref<64x144xf32, #tpu.memory_space<vmem>>, vector<64x16xf32>
    tpu.vector_store %arg12[%c0_318, %c112_319], %174 {strides = array<i32>} : memref<64x144xf32, #tpu.memory_space<vmem>>, vector<64x16xf32>,
    %c0_320 = arith.constant 0 : index
    %c2_321 = arith.constant 2 : index
    %c2_322 = arith.constant 2 : index
    %c0_323 = arith.constant 0 : index
    %176 = vector.load %arg10[%c0_320, %c2_321, %c2_322, %c0_323] : memref<1x10x10x16xf32, #tpu.memory_space<vmem>>, vector<1x8x8x16xf32>
    %177 = vector.shape_cast %176 : vector<1x8x8x16xf32> to vector<64x16xf32>
    %c0_324 = arith.constant 0 : index
    %c128_325 = arith.constant 128 : index
    %178 = vector.load %arg12[%c0_324, %c128_325] : memref<64x144xf32, #tpu.memory_space<vmem>>, vector<64x16xf32>
    tpu.vector_store %arg12[%c0_324, %c128_325], %177 {strides = array<i32>} : memref<64x144xf32, #tpu.memory_space<vmem>>, vector<64x16xf32>,
    %c0_326 = arith.constant 0 : index
    %c0_327 = arith.constant 0 : index
    %179 = vector.load %arg12[%c0_326, %c0_327] : memref<64x144xf32, #tpu.memory_space<vmem>>, vector<64x144xf32>
    %cst_328 = arith.constant dense<0.000000e+00> : vector<64x16xf32>
    %180 = tpu.matmul %179, %149, %cst_328 {dimension_numbers = #tpu.dot_dimension_numbers<[1], [0], [0], [1], [0, 0, 1, 1], [], []>} : vector<64x144xf32>, vector<144x16xf32>, vector<64x16xf32> -> vector<64x16xf32>
    %181 = vector.broadcast %151 : vector<1x16xf32> to vector<64x16xf32>
    %182 = arith.addf %180, %181 : vector<64x16xf32>
    %c0_329 = arith.constant 0 : index
    %c0_330 = arith.constant 0 : index
    %c0_331 = arith.constant 0 : index
    %c0_332 = arith.constant 0 : index
    %183 = vector.load %arg14[%c0_329, %c0_330, %c0_331, %c0_332] : memref<1x8x8x16xf32, #tpu.memory_space<vmem>>, vector<1x8x8x16xf32>
    %184 = vector.shape_cast %182 : vector<64x16xf32> to vector<1x8x8x16xf32>
    %185 = arith.addf %183, %184 : vector<1x8x8x16xf32>
    %c0_333 = arith.constant 0 : index
    %c0_334 = arith.constant 0 : index
    %c0_335 = arith.constant 0 : index
    %c0_336 = arith.constant 0 : index
    %186 = vector.load %arg14[%c0_333, %c0_334, %c0_335, %c0_336] : memref<1x8x8x16xf32, #tpu.memory_space<vmem>>, vector<1x8x8x16xf32>
    tpu.vector_store %arg14[%c0_333, %c0_334, %c0_335, %c0_336], %185 {strides = array<i32>} : memref<1x8x8x16xf32, #tpu.memory_space<vmem>>, vector<1x8x8x16xf32>,
    %c0_337 = arith.constant 0 : index
    %c0_338 = arith.constant 0 : index
    %c0_339 = arith.constant 0 : index
    %c0_340 = arith.constant 0 : index
    %187 = vector.load %arg14[%c0_337, %c0_338, %c0_339, %c0_340] : memref<1x8x8x16xf32, #tpu.memory_space<vmem>>, vector<1x8x8x16xf32>
    %cst_341 = arith.constant 0.000000e+00 : f32
    %188 = vector.broadcast %cst_341 : f32 to vector<1x8x8x16xf32>
    %189 = arith.maximumf %187, %188 : vector<1x8x8x16xf32>
    %c0_342 = arith.constant 0 : index
    %c1_343 = arith.constant 1 : index
    %c1_344 = arith.constant 1 : index
    %c0_345 = arith.constant 0 : index
    %190 = vector.load %arg10[%c0_342, %c1_343, %c1_344, %c0_345] : memref<1x10x10x16xf32, #tpu.memory_space<vmem>>, vector<1x8x8x16xf32>
    tpu.vector_store %arg10[%c0_342, %c1_343, %c1_344, %c0_345], %189 {strides = array<i32>} : memref<1x10x10x16xf32, #tpu.memory_space<vmem>>, vector<1x8x8x16xf32>,
    %c2_346 = arith.constant 2 : index
    %c0_347 = arith.constant 0 : index
    %c0_348 = arith.constant 0 : index
    %191 = vector.load %arg5[%c2_346, %c0_347, %c0_348] : memref<4x144x16xf32, #tpu.memory_space<vmem>>, vector<1x144x16xf32>
    %192 = vector.shape_cast %191 : vector<1x144x16xf32> to vector<144x16xf32>
    %c2_349 = arith.constant 2 : index
    %c0_350 = arith.constant 0 : index
    %c0_351 = arith.constant 0 : index
    %193 = vector.load %arg6[%c2_349, %c0_350, %c0_351] : memref<4x1x16xf32, #tpu.memory_space<vmem>>, vector<1x1x16xf32>
    %194 = vector.shape_cast %193 : vector<1x1x16xf32> to vector<1x16xf32>
    %c0_352 = arith.constant 0 : index
    %c0_353 = arith.constant 0 : index
    %c0_354 = arith.constant 0 : index
    %c0_355 = arith.constant 0 : index
    %195 = vector.load %arg10[%c0_352, %c0_353, %c0_354, %c0_355] : memref<1x10x10x16xf32, #tpu.memory_space<vmem>>, vector<1x8x8x16xf32>
    %196 = vector.shape_cast %195 : vector<1x8x8x16xf32> to vector<64x16xf32>
    %c0_356 = arith.constant 0 : index
    %c0_357 = arith.constant 0 : index
    %197 = vector.load %arg12[%c0_356, %c0_357] : memref<64x144xf32, #tpu.memory_space<vmem>>, vector<64x16xf32>
    tpu.vector_store %arg12[%c0_356, %c0_357], %196 {strides = array<i32>} : memref<64x144xf32, #tpu.memory_space<vmem>>, vector<64x16xf32>,
    %c0_358 = arith.constant 0 : index
    %c0_359 = arith.constant 0 : index
    %c1_360 = arith.constant 1 : index
    %c0_361 = arith.constant 0 : index
    %198 = vector.load %arg10[%c0_358, %c0_359, %c1_360, %c0_361] : memref<1x10x10x16xf32, #tpu.memory_space<vmem>>, vector<1x8x8x16xf32>
    %199 = vector.shape_cast %198 : vector<1x8x8x16xf32> to vector<64x16xf32>
    %c0_362 = arith.constant 0 : index
    %c16_363 = arith.constant 16 : index
    %200 = vector.load %arg12[%c0_362, %c16_363] : memref<64x144xf32, #tpu.memory_space<vmem>>, vector<64x16xf32>
    tpu.vector_store %arg12[%c0_362, %c16_363], %199 {strides = array<i32>} : memref<64x144xf32, #tpu.memory_space<vmem>>, vector<64x16xf32>,
    %c0_364 = arith.constant 0 : index
    %c0_365 = arith.constant 0 : index
    %c2_366 = arith.constant 2 : index
    %c0_367 = arith.constant 0 : index
    %201 = vector.load %arg10[%c0_364, %c0_365, %c2_366, %c0_367] : memref<1x10x10x16xf32, #tpu.memory_space<vmem>>, vector<1x8x8x16xf32>
    %202 = vector.shape_cast %201 : vector<1x8x8x16xf32> to vector<64x16xf32>
    %c0_368 = arith.constant 0 : index
    %c32_369 = arith.constant 32 : index
    %203 = vector.load %arg12[%c0_368, %c32_369] : memref<64x144xf32, #tpu.memory_space<vmem>>, vector<64x16xf32>
    tpu.vector_store %arg12[%c0_368, %c32_369], %202 {strides = array<i32>} : memref<64x144xf32, #tpu.memory_space<vmem>>, vector<64x16xf32>,
    %c0_370 = arith.constant 0 : index
    %c1_371 = arith.constant 1 : index
    %c0_372 = arith.constant 0 : index
    %c0_373 = arith.constant 0 : index
    %204 = vector.load %arg10[%c0_370, %c1_371, %c0_372, %c0_373] : memref<1x10x10x16xf32, #tpu.memory_space<vmem>>, vector<1x8x8x16xf32>
    %205 = vector.shape_cast %204 : vector<1x8x8x16xf32> to vector<64x16xf32>
    %c0_374 = arith.constant 0 : index
    %c48_375 = arith.constant 48 : index
    %206 = vector.load %arg12[%c0_374, %c48_375] : memref<64x144xf32, #tpu.memory_space<vmem>>, vector<64x16xf32>
    tpu.vector_store %arg12[%c0_374, %c48_375], %205 {strides = array<i32>} : memref<64x144xf32, #tpu.memory_space<vmem>>, vector<64x16xf32>,
    %c0_376 = arith.constant 0 : index
    %c1_377 = arith.constant 1 : index
    %c1_378 = arith.constant 1 : index
    %c0_379 = arith.constant 0 : index
    %207 = vector.load %arg10[%c0_376, %c1_377, %c1_378, %c0_379] : memref<1x10x10x16xf32, #tpu.memory_space<vmem>>, vector<1x8x8x16xf32>
    %208 = vector.shape_cast %207 : vector<1x8x8x16xf32> to vector<64x16xf32>
    %c0_380 = arith.constant 0 : index
    %c64_381 = arith.constant 64 : index
    %209 = vector.load %arg12[%c0_380, %c64_381] : memref<64x144xf32, #tpu.memory_space<vmem>>, vector<64x16xf32>
    tpu.vector_store %arg12[%c0_380, %c64_381], %208 {strides = array<i32>} : memref<64x144xf32, #tpu.memory_space<vmem>>, vector<64x16xf32>,
    %c0_382 = arith.constant 0 : index
    %c1_383 = arith.constant 1 : index
    %c2_384 = arith.constant 2 : index
    %c0_385 = arith.constant 0 : index
    %210 = vector.load %arg10[%c0_382, %c1_383, %c2_384, %c0_385] : memref<1x10x10x16xf32, #tpu.memory_space<vmem>>, vector<1x8x8x16xf32>
    %211 = vector.shape_cast %210 : vector<1x8x8x16xf32> to vector<64x16xf32>
    %c0_386 = arith.constant 0 : index
    %c80_387 = arith.constant 80 : index
    %212 = vector.load %arg12[%c0_386, %c80_387] : memref<64x144xf32, #tpu.memory_space<vmem>>, vector<64x16xf32>
    tpu.vector_store %arg12[%c0_386, %c80_387], %211 {strides = array<i32>} : memref<64x144xf32, #tpu.memory_space<vmem>>, vector<64x16xf32>,
    %c0_388 = arith.constant 0 : index
    %c2_389 = arith.constant 2 : index
    %c0_390 = arith.constant 0 : index
    %c0_391 = arith.constant 0 : index
    %213 = vector.load %arg10[%c0_388, %c2_389, %c0_390, %c0_391] : memref<1x10x10x16xf32, #tpu.memory_space<vmem>>, vector<1x8x8x16xf32>
    %214 = vector.shape_cast %213 : vector<1x8x8x16xf32> to vector<64x16xf32>
    %c0_392 = arith.constant 0 : index
    %c96_393 = arith.constant 96 : index
    %215 = vector.load %arg12[%c0_392, %c96_393] : memref<64x144xf32, #tpu.memory_space<vmem>>, vector<64x16xf32>
    tpu.vector_store %arg12[%c0_392, %c96_393], %214 {strides = array<i32>} : memref<64x144xf32, #tpu.memory_space<vmem>>, vector<64x16xf32>,
    %c0_394 = arith.constant 0 : index
    %c2_395 = arith.constant 2 : index
    %c1_396 = arith.constant 1 : index
    %c0_397 = arith.constant 0 : index
    %216 = vector.load %arg10[%c0_394, %c2_395, %c1_396, %c0_397] : memref<1x10x10x16xf32, #tpu.memory_space<vmem>>, vector<1x8x8x16xf32>
    %217 = vector.shape_cast %216 : vector<1x8x8x16xf32> to vector<64x16xf32>
    %c0_398 = arith.constant 0 : index
    %c112_399 = arith.constant 112 : index
    %218 = vector.load %arg12[%c0_398, %c112_399] : memref<64x144xf32, #tpu.memory_space<vmem>>, vector<64x16xf32>
    tpu.vector_store %arg12[%c0_398, %c112_399], %217 {strides = array<i32>} : memref<64x144xf32, #tpu.memory_space<vmem>>, vector<64x16xf32>,
    %c0_400 = arith.constant 0 : index
    %c2_401 = arith.constant 2 : index
    %c2_402 = arith.constant 2 : index
    %c0_403 = arith.constant 0 : index
    %219 = vector.load %arg10[%c0_400, %c2_401, %c2_402, %c0_403] : memref<1x10x10x16xf32, #tpu.memory_space<vmem>>, vector<1x8x8x16xf32>
    %220 = vector.shape_cast %219 : vector<1x8x8x16xf32> to vector<64x16xf32>
    %c0_404 = arith.constant 0 : index
    %c128_405 = arith.constant 128 : index
    %221 = vector.load %arg12[%c0_404, %c128_405] : memref<64x144xf32, #tpu.memory_space<vmem>>, vector<64x16xf32>
    tpu.vector_store %arg12[%c0_404, %c128_405], %220 {strides = array<i32>} : memref<64x144xf32, #tpu.memory_space<vmem>>, vector<64x16xf32>,
    %c0_406 = arith.constant 0 : index
    %c0_407 = arith.constant 0 : index
    %222 = vector.load %arg12[%c0_406, %c0_407] : memref<64x144xf32, #tpu.memory_space<vmem>>, vector<64x144xf32>
    %cst_408 = arith.constant dense<0.000000e+00> : vector<64x16xf32>
    %223 = tpu.matmul %222, %192, %cst_408 {dimension_numbers = #tpu.dot_dimension_numbers<[1], [0], [0], [1], [0, 0, 1, 1], [], []>} : vector<64x144xf32>, vector<144x16xf32>, vector<64x16xf32> -> vector<64x16xf32>
    %224 = vector.broadcast %194 : vector<1x16xf32> to vector<64x16xf32>
    %225 = arith.addf %223, %224 : vector<64x16xf32>
    %cst_409 = arith.constant 0.000000e+00 : f32
    %226 = vector.broadcast %cst_409 : f32 to vector<64x16xf32>
    %227 = arith.maximumf %225, %226 : vector<64x16xf32>
    %228 = vector.shape_cast %227 : vector<64x16xf32> to vector<1x8x8x16xf32>
    %c0_410 = arith.constant 0 : index
    %c1_411 = arith.constant 1 : index
    %c1_412 = arith.constant 1 : index
    %c0_413 = arith.constant 0 : index
    %229 = vector.load %arg10[%c0_410, %c1_411, %c1_412, %c0_413] : memref<1x10x10x16xf32, #tpu.memory_space<vmem>>, vector<1x8x8x16xf32>
    tpu.vector_store %arg10[%c0_410, %c1_411, %c1_412, %c0_413], %228 {strides = array<i32>} : memref<1x10x10x16xf32, #tpu.memory_space<vmem>>, vector<1x8x8x16xf32>,
    %c3 = arith.constant 3 : index
    %c0_414 = arith.constant 0 : index
    %c0_415 = arith.constant 0 : index
    %230 = vector.load %arg5[%c3, %c0_414, %c0_415] : memref<4x144x16xf32, #tpu.memory_space<vmem>>, vector<1x144x16xf32>
    %231 = vector.shape_cast %230 : vector<1x144x16xf32> to vector<144x16xf32>
    %c3_416 = arith.constant 3 : index
    %c0_417 = arith.constant 0 : index
    %c0_418 = arith.constant 0 : index
    %232 = vector.load %arg6[%c3_416, %c0_417, %c0_418] : memref<4x1x16xf32, #tpu.memory_space<vmem>>, vector<1x1x16xf32>
    %233 = vector.shape_cast %232 : vector<1x1x16xf32> to vector<1x16xf32>
    %c0_419 = arith.constant 0 : index
    %c0_420 = arith.constant 0 : index
    %c0_421 = arith.constant 0 : index
    %c0_422 = arith.constant 0 : index
    %234 = vector.load %arg10[%c0_419, %c0_420, %c0_421, %c0_422] : memref<1x10x10x16xf32, #tpu.memory_space<vmem>>, vector<1x8x8x16xf32>
    %235 = vector.shape_cast %234 : vector<1x8x8x16xf32> to vector<64x16xf32>
    %c0_423 = arith.constant 0 : index
    %c0_424 = arith.constant 0 : index
    %236 = vector.load %arg12[%c0_423, %c0_424] : memref<64x144xf32, #tpu.memory_space<vmem>>, vector<64x16xf32>
    tpu.vector_store %arg12[%c0_423, %c0_424], %235 {strides = array<i32>} : memref<64x144xf32, #tpu.memory_space<vmem>>, vector<64x16xf32>,
    %c0_425 = arith.constant 0 : index
    %c0_426 = arith.constant 0 : index
    %c1_427 = arith.constant 1 : index
    %c0_428 = arith.constant 0 : index
    %237 = vector.load %arg10[%c0_425, %c0_426, %c1_427, %c0_428] : memref<1x10x10x16xf32, #tpu.memory_space<vmem>>, vector<1x8x8x16xf32>
    %238 = vector.shape_cast %237 : vector<1x8x8x16xf32> to vector<64x16xf32>
    %c0_429 = arith.constant 0 : index
    %c16_430 = arith.constant 16 : index
    %239 = vector.load %arg12[%c0_429, %c16_430] : memref<64x144xf32, #tpu.memory_space<vmem>>, vector<64x16xf32>
    tpu.vector_store %arg12[%c0_429, %c16_430], %238 {strides = array<i32>} : memref<64x144xf32, #tpu.memory_space<vmem>>, vector<64x16xf32>,
    %c0_431 = arith.constant 0 : index
    %c0_432 = arith.constant 0 : index
    %c2_433 = arith.constant 2 : index
    %c0_434 = arith.constant 0 : index
    %240 = vector.load %arg10[%c0_431, %c0_432, %c2_433, %c0_434] : memref<1x10x10x16xf32, #tpu.memory_space<vmem>>, vector<1x8x8x16xf32>
    %241 = vector.shape_cast %240 : vector<1x8x8x16xf32> to vector<64x16xf32>
    %c0_435 = arith.constant 0 : index
    %c32_436 = arith.constant 32 : index
    %242 = vector.load %arg12[%c0_435, %c32_436] : memref<64x144xf32, #tpu.memory_space<vmem>>, vector<64x16xf32>
    tpu.vector_store %arg12[%c0_435, %c32_436], %241 {strides = array<i32>} : memref<64x144xf32, #tpu.memory_space<vmem>>, vector<64x16xf32>,
    %c0_437 = arith.constant 0 : index
    %c1_438 = arith.constant 1 : index
    %c0_439 = arith.constant 0 : index
    %c0_440 = arith.constant 0 : index
    %243 = vector.load %arg10[%c0_437, %c1_438, %c0_439, %c0_440] : memref<1x10x10x16xf32, #tpu.memory_space<vmem>>, vector<1x8x8x16xf32>
    %244 = vector.shape_cast %243 : vector<1x8x8x16xf32> to vector<64x16xf32>
    %c0_441 = arith.constant 0 : index
    %c48_442 = arith.constant 48 : index
    %245 = vector.load %arg12[%c0_441, %c48_442] : memref<64x144xf32, #tpu.memory_space<vmem>>, vector<64x16xf32>
    tpu.vector_store %arg12[%c0_441, %c48_442], %244 {strides = array<i32>} : memref<64x144xf32, #tpu.memory_space<vmem>>, vector<64x16xf32>,
    %c0_443 = arith.constant 0 : index
    %c1_444 = arith.constant 1 : index
    %c1_445 = arith.constant 1 : index
    %c0_446 = arith.constant 0 : index
    %246 = vector.load %arg10[%c0_443, %c1_444, %c1_445, %c0_446] : memref<1x10x10x16xf32, #tpu.memory_space<vmem>>, vector<1x8x8x16xf32>
    %247 = vector.shape_cast %246 : vector<1x8x8x16xf32> to vector<64x16xf32>
    %c0_447 = arith.constant 0 : index
    %c64_448 = arith.constant 64 : index
    %248 = vector.load %arg12[%c0_447, %c64_448] : memref<64x144xf32, #tpu.memory_space<vmem>>, vector<64x16xf32>
    tpu.vector_store %arg12[%c0_447, %c64_448], %247 {strides = array<i32>} : memref<64x144xf32, #tpu.memory_space<vmem>>, vector<64x16xf32>,
    %c0_449 = arith.constant 0 : index
    %c1_450 = arith.constant 1 : index
    %c2_451 = arith.constant 2 : index
    %c0_452 = arith.constant 0 : index
    %249 = vector.load %arg10[%c0_449, %c1_450, %c2_451, %c0_452] : memref<1x10x10x16xf32, #tpu.memory_space<vmem>>, vector<1x8x8x16xf32>
    %250 = vector.shape_cast %249 : vector<1x8x8x16xf32> to vector<64x16xf32>
    %c0_453 = arith.constant 0 : index
    %c80_454 = arith.constant 80 : index
    %251 = vector.load %arg12[%c0_453, %c80_454] : memref<64x144xf32, #tpu.memory_space<vmem>>, vector<64x16xf32>
    tpu.vector_store %arg12[%c0_453, %c80_454], %250 {strides = array<i32>} : memref<64x144xf32, #tpu.memory_space<vmem>>, vector<64x16xf32>,
    %c0_455 = arith.constant 0 : index
    %c2_456 = arith.constant 2 : index
    %c0_457 = arith.constant 0 : index
    %c0_458 = arith.constant 0 : index
    %252 = vector.load %arg10[%c0_455, %c2_456, %c0_457, %c0_458] : memref<1x10x10x16xf32, #tpu.memory_space<vmem>>, vector<1x8x8x16xf32>
    %253 = vector.shape_cast %252 : vector<1x8x8x16xf32> to vector<64x16xf32>
    %c0_459 = arith.constant 0 : index
    %c96_460 = arith.constant 96 : index
    %254 = vector.load %arg12[%c0_459, %c96_460] : memref<64x144xf32, #tpu.memory_space<vmem>>, vector<64x16xf32>
    tpu.vector_store %arg12[%c0_459, %c96_460], %253 {strides = array<i32>} : memref<64x144xf32, #tpu.memory_space<vmem>>, vector<64x16xf32>,
    %c0_461 = arith.constant 0 : index
    %c2_462 = arith.constant 2 : index
    %c1_463 = arith.constant 1 : index
    %c0_464 = arith.constant 0 : index
    %255 = vector.load %arg10[%c0_461, %c2_462, %c1_463, %c0_464] : memref<1x10x10x16xf32, #tpu.memory_space<vmem>>, vector<1x8x8x16xf32>
    %256 = vector.shape_cast %255 : vector<1x8x8x16xf32> to vector<64x16xf32>
    %c0_465 = arith.constant 0 : index
    %c112_466 = arith.constant 112 : index
    %257 = vector.load %arg12[%c0_465, %c112_466] : memref<64x144xf32, #tpu.memory_space<vmem>>, vector<64x16xf32>
    tpu.vector_store %arg12[%c0_465, %c112_466], %256 {strides = array<i32>} : memref<64x144xf32, #tpu.memory_space<vmem>>, vector<64x16xf32>,
    %c0_467 = arith.constant 0 : index
    %c2_468 = arith.constant 2 : index
    %c2_469 = arith.constant 2 : index
    %c0_470 = arith.constant 0 : index
    %258 = vector.load %arg10[%c0_467, %c2_468, %c2_469, %c0_470] : memref<1x10x10x16xf32, #tpu.memory_space<vmem>>, vector<1x8x8x16xf32>
    %259 = vector.shape_cast %258 : vector<1x8x8x16xf32> to vector<64x16xf32>
    %c0_471 = arith.constant 0 : index
    %c128_472 = arith.constant 128 : index
    %260 = vector.load %arg12[%c0_471, %c128_472] : memref<64x144xf32, #tpu.memory_space<vmem>>, vector<64x16xf32>
    tpu.vector_store %arg12[%c0_471, %c128_472], %259 {strides = array<i32>} : memref<64x144xf32, #tpu.memory_space<vmem>>, vector<64x16xf32>,
    %c0_473 = arith.constant 0 : index
    %c0_474 = arith.constant 0 : index
    %261 = vector.load %arg12[%c0_473, %c0_474] : memref<64x144xf32, #tpu.memory_space<vmem>>, vector<64x144xf32>
    %cst_475 = arith.constant dense<0.000000e+00> : vector<64x16xf32>
    %262 = tpu.matmul %261, %231, %cst_475 {dimension_numbers = #tpu.dot_dimension_numbers<[1], [0], [0], [1], [0, 0, 1, 1], [], []>} : vector<64x144xf32>, vector<144x16xf32>, vector<64x16xf32> -> vector<64x16xf32>
    %263 = vector.broadcast %233 : vector<1x16xf32> to vector<64x16xf32>
    %264 = arith.addf %262, %263 : vector<64x16xf32>
    %c0_476 = arith.constant 0 : index
    %c0_477 = arith.constant 0 : index
    %c0_478 = arith.constant 0 : index
    %c0_479 = arith.constant 0 : index
    %265 = vector.load %arg14[%c0_476, %c0_477, %c0_478, %c0_479] : memref<1x8x8x16xf32, #tpu.memory_space<vmem>>, vector<1x8x8x16xf32>
    %266 = vector.shape_cast %264 : vector<64x16xf32> to vector<1x8x8x16xf32>
    %267 = arith.addf %265, %266 : vector<1x8x8x16xf32>
    %c0_480 = arith.constant 0 : index
    %c0_481 = arith.constant 0 : index
    %c0_482 = arith.constant 0 : index
    %c0_483 = arith.constant 0 : index
    %268 = vector.load %arg14[%c0_480, %c0_481, %c0_482, %c0_483] : memref<1x8x8x16xf32, #tpu.memory_space<vmem>>, vector<1x8x8x16xf32>
    tpu.vector_store %arg14[%c0_480, %c0_481, %c0_482, %c0_483], %267 {strides = array<i32>} : memref<1x8x8x16xf32, #tpu.memory_space<vmem>>, vector<1x8x8x16xf32>,
    %c0_484 = arith.constant 0 : index
    %c0_485 = arith.constant 0 : index
    %c0_486 = arith.constant 0 : index
    %c0_487 = arith.constant 0 : index
    %269 = vector.load %arg14[%c0_484, %c0_485, %c0_486, %c0_487] : memref<1x8x8x16xf32, #tpu.memory_space<vmem>>, vector<1x8x8x16xf32>
    %c0_488 = arith.constant 0 : index
    %c0_489 = arith.constant 0 : index
    %c0_490 = arith.constant 0 : index
    %c0_491 = arith.constant 0 : index
    %270 = vector.load %arg7[%c0_488, %c0_489, %c0_490, %c0_491] : memref<1x8x8x16xf32, #tpu.memory_space<vmem>>, vector<1x8x8x16xf32>
    tpu.vector_store %arg7[%c0_488, %c0_489, %c0_490, %c0_491], %269 {strides = array<i32>} : memref<1x8x8x16xf32, #tpu.memory_space<vmem>>, vector<1x8x8x16xf32>,
    return
  }
  func.func @transform_0(%arg0: i32) -> (i32, i32, i32, i32) {
    %c0_i32 = arith.constant 0 : i32
    %c0_i32_0 = arith.constant 0 : i32
    %c0_i32_1 = arith.constant 0 : i32
    %c0_i32_2 = arith.constant 0 : i32
    return %arg0, %c0_i32, %c0_i32_0, %c0_i32_1 : i32, i32, i32, i32
  }
  func.func @transform_1(%arg0: i32) -> (i32, i32, i32, i32) {
    %c0_i32 = arith.constant 0 : i32
    %c0_i32_0 = arith.constant 0 : i32
    %c0_i32_1 = arith.constant 0 : i32
    %c0_i32_2 = arith.constant 0 : i32
    return %arg0, %c0_i32, %c0_i32_0, %c0_i32_1 : i32, i32, i32, i32
  }
  func.func @transform_2(%arg0: i32) -> (i32, i32) {
    %c0_i32 = arith.constant 0 : i32
    %c0_i32_0 = arith.constant 0 : i32
    %c0_i32_1 = arith.constant 0 : i32
    return %c0_i32, %c0_i32_0 : i32, i32
  }
  func.func @transform_3(%arg0: i32) -> (i32, i32) {
    %c0_i32 = arith.constant 0 : i32
    %c0_i32_0 = arith.constant 0 : i32
    %c0_i32_1 = arith.constant 0 : i32
    return %c0_i32, %c0_i32_0 : i32, i32
  }
  func.func @transform_4(%arg0: i32) -> (i32, i32, i32) {
    %c0_i32 = arith.constant 0 : i32
    %c0_i32_0 = arith.constant 0 : i32
    %c0_i32_1 = arith.constant 0 : i32
    %c0_i32_2 = arith.constant 0 : i32
    return %c0_i32, %c0_i32_0, %c0_i32_1 : i32, i32, i32
  }
  func.func @transform_5(%arg0: i32) -> (i32, i32, i32) {
    %c0_i32 = arith.constant 0 : i32
    %c0_i32_0 = arith.constant 0 : i32
    %c0_i32_1 = arith.constant 0 : i32
    %c0_i32_2 = arith.constant 0 : i32
    return %c0_i32, %c0_i32_0, %c0_i32_1 : i32, i32, i32
  }
  func.func @transform_6(%arg0: i32) -> (i32, i32, i32, i32) {
    %c0_i32 = arith.constant 0 : i32
    %c0_i32_0 = arith.constant 0 : i32
    %c0_i32_1 = arith.constant 0 : i32
    %c0_i32_2 = arith.constant 0 : i32
    return %arg0, %c0_i32, %c0_i32_0, %c0_i32_1 : i32, i32, i32, i32
  }
}

</mosaic_0001>

<llo_original>
// kernel: cnn_down_stack.1
$region0: #{cnn_down_stack.1}
  #allocation0 [shape = 'u32[]', space=smem, size = 0x4, offset = 0x4, fixed_abs, tag = 'smem constant byte address 0x4 - core index']
  #allocation1 [shape = 'u32[144,128]{1,0:T(1,128)}', space=vmem, size = 0x12000, scoped, tag = 'internal scratch']
  #allocation2 [shape = 'f32[1,18,10,4]{3,2,1,0:T(8,128)}', space=vmem, size = 0x24000, scoped, tag = 'scratch operand']
  #allocation3 [shape = 'f32[1,18,10,4]{3,2,1,0:T(8,128)}', space=vmem, size = 0x24000, scoped, tag = 'scratch operand']
  #allocation4 [shape = 'f32[1,10,10,16]{3,2,1,0:T(8,128)}', space=vmem, size = 0x14000, scoped, tag = 'scratch operand']
  #allocation5 [shape = 'f32[256,36]{1,0:T(8,128)}', space=vmem, size = 0x20000, scoped, tag = 'scratch operand']
  #allocation6 [shape = 'f32[64,144]{1,0:T(8,128)}', space=vmem, size = 0x10000, scoped, tag = 'scratch operand']
  #allocation7 [shape = 'f32[1,16,8,16]{3,2,1,0:T(8,128)}', space=vmem, size = 0x10000, scoped, tag = 'scratch operand']
  #allocation8 [shape = 'f32[1,8,8,16]{3,2,1,0:T(8,128)}', space=vmem, size = 0x8000, scoped, tag = 'scratch operand']
  %s0 = inlined_call_operand.vmem [shape: f32[2,16,8,4], index: 0, kind: input, shape index: {}]
  %s1 = inlined_call_operand.vmem [shape: f32[2,16,8,4], index: 1, kind: input, shape index: {}]
  %s2 = inlined_call_operand.vmem [shape: f32[36,16], index: 2, kind: input, shape index: {}]
  %s3 = inlined_call_operand.vmem [shape: f32[1,16], index: 3, kind: input, shape index: {}]
  %s4 = inlined_call_operand.vmem [shape: f32[4,144,16], index: 4, kind: input, shape index: {}]
  %s5 = inlined_call_operand.vmem [shape: f32[4,1,16], index: 5, kind: input, shape index: {}]
  %s6 = inlined_call_operand.hbm [shape: f32[2,8,8,16], index: 6, kind: output, shape index: {}]
  %s7 = sld [smem:[#allocation0]]
  $region57: #{cnn_down_stack.1} parent=0
    _
  %s9 = ssub.s32 1, %s7
  %s10 = scalar_select 0, %s9, %s7
  $region1: #{cnn_down_stack.1} parent=0
    #allocation9 [shape = 'u8[65536]{0}', space=vmem, size = 0x10000, scoped, tag = 'output window, operand 0']
    #allocation10 [shape = 's32[2]{0}', space=sflag, size = 0x8, scoped, tag = 'scoped memory for cnn_down_stack.1']
    %11 = vsyncpa [#allocation10], 0
    %s12 = scalar_lea.sflag [#allocation10], 1
    %13 = vsyncpa %s12, 0
    loop: start=0, step=1, limit=4
    $region2: #{cnn_down_stack.1} parent=1 // loop_pre_header
      _
    $region3: #{cnn_down_stack.1} parent=1 // loop_header
      %s15 = sphi 0, %s19
      %p16 = scmp.ge.s32.totalorder %s15, 4
      %s25 = sphi 0, %s27
      %s28 = sphi 0, %s25
      %s29 = sphi 0, %s28
      %s45 = sphi 0, %s29
      %s51 = sphi 0, %s53
      %s54 = sphi 0, %s51
      %s55 = sphi 0, %s54
      %s71 = sphi 0, %s55
      %s75 = sphi 0, %s75
      %s77 = sphi 0, %s75
      %s78 = sphi 0, %s77
      %s92 = sphi 0, %s78
      %s96 = sphi 0, %s96
      %s98 = sphi 0, %s96
      %s99 = sphi 0, %s98
      %s113 = sphi 0, %s99
      %s117 = sphi 0, %s117
      %s119 = sphi 0, %s117
      %s120 = sphi 0, %s119
      %s134 = sphi 0, %s120
      %s138 = sphi 0, %s138
      %s140 = sphi 0, %s138
      %s141 = sphi 0, %s140
      %s155 = sphi 0, %s141
      %s161 = sphi 0, %s163
      %s164 = sphi 0, %s161
      %s165 = sphi 0, %s164
      %s181 = sphi 0, %s165
    $region4: #{cnn_down_stack.1} parent=1 // loop_header_branch
      %18 = sbr.rel (%p16) target = $region8
    $region5: #{cnn_down_stack.1} parent=1 // loop_body
      %s20 = ssub.s32 %s15, 1
      %s21 = ssub.s32 %s15, 2
      %s22 = sadd.s32 %s15, 1
      %s23 = ssub.s32 %s15, %s22
      %p24 = scmp.eq.s32.totalorder %s23, 0
      %s26 = sadd.s32 %s25, 1
      %s27 = scalar_select %p24, %s25, %s26
      %p30 = pneg %p24
      %p31 = scmp.eq.s32.totalorder %s15, 1
      %p32 = por %p30, %p31
      %p33 = scmp.ne.s32.totalorder %s25, %s28
      %p34 = scmp.eq.s32.totalorder %s15, 0
      %p35 = por %p33, %p34
      %p36 = scmp.ne.s32.totalorder %s25, %s28
      %p37 = scmp.eq.s32.totalorder %s20, 1
      %p38 = por %p36, %p37
      %p39 = scmp.ne.s32.totalorder %s28, %s29
      %p40 = scmp.eq.s32.totalorder %s20, 0
      %p41 = por %p39, %p40
      %p42 = scmp.ne.s32.totalorder %s28, %s29
      %p43 = scmp.eq.s32.totalorder %s21, 1
      %p44 = por %p42, %p43
      %p46 = scmp.ne.s32.totalorder %s29, %s45
      %p47 = scmp.eq.s32.totalorder %s21, 0
      %p48 = por %p46, %p47
      %s49 = ssub.s32 %s15, %s22
      %p50 = scmp.eq.s32.totalorder %s49, 0
      %s52 = sadd.s32 %s51, 1
      %s53 = scalar_select %p50, %s51, %s52
      %p56 = pneg %p50
      %p57 = scmp.eq.s32.totalorder %s15, 1
      %p58 = por %p56, %p57
      %p59 = scmp.ne.s32.totalorder %s51, %s54
      %p60 = scmp.eq.s32.totalorder %s15, 0
      %p61 = por %p59, %p60
      %p62 = scmp.ne.s32.totalorder %s51, %s54
      %p63 = scmp.eq.s32.totalorder %s20, 1
      %p64 = por %p62, %p63
      %p65 = scmp.ne.s32.totalorder %s54, %s55
      %p66 = scmp.eq.s32.totalorder %s20, 0
      %p67 = por %p65, %p66
      %p68 = scmp.ne.s32.totalorder %s54, %s55
      %p69 = scmp.eq.s32.totalorder %s21, 1
      %p70 = por %p68, %p69
      %p72 = scmp.ne.s32.totalorder %s55, %s71
      %p73 = scmp.eq.s32.totalorder %s21, 0
      %p74 = por %p72, %p73
      %s76 = sadd.s32 %s75, 1
      %p79 = scmp.eq.s32.totalorder %s15, 1
      %p80 = scmp.ne.s32.totalorder %s75, %s77
      %p81 = scmp.eq.s32.totalorder %s15, 0
      %p82 = por %p80, %p81
      %p83 = scmp.ne.s32.totalorder %s75, %s77
      %p84 = scmp.eq.s32.totalorder %s20, 1
      %p85 = por %p83, %p84
      %p86 = scmp.ne.s32.totalorder %s77, %s78
      %p87 = scmp.eq.s32.totalorder %s20, 0
      %p88 = por %p86, %p87
      %p89 = scmp.ne.s32.totalorder %s77, %s78
      %p90 = scmp.eq.s32.totalorder %s21, 1
      %p91 = por %p89, %p90
      %p93 = scmp.ne.s32.totalorder %s78, %s92
      %p94 = scmp.eq.s32.totalorder %s21, 0
      %p95 = por %p93, %p94
      %s97 = sadd.s32 %s96, 1
      %p100 = scmp.eq.s32.totalorder %s15, 1
      %p101 = scmp.ne.s32.totalorder %s96, %s98
      %p102 = scmp.eq.s32.totalorder %s15, 0
      %p103 = por %p101, %p102
      %p104 = scmp.ne.s32.totalorder %s96, %s98
      %p105 = scmp.eq.s32.totalorder %s20, 1
      %p106 = por %p104, %p105
      %p107 = scmp.ne.s32.totalorder %s98, %s99
      %p108 = scmp.eq.s32.totalorder %s20, 0
      %p109 = por %p107, %p108
      %p110 = scmp.ne.s32.totalorder %s98, %s99
      %p111 = scmp.eq.s32.totalorder %s21, 1
      %p112 = por %p110, %p111
      %p114 = scmp.ne.s32.totalorder %s99, %s113
      %p115 = scmp.eq.s32.totalorder %s21, 0
      %p116 = por %p114, %p115
      %s118 = sadd.s32 %s117, 1
      %p121 = scmp.eq.s32.totalorder %s15, 1
      %p122 = scmp.ne.s32.totalorder %s117, %s119
      %p123 = scmp.eq.s32.totalorder %s15, 0
      %p124 = por %p122, %p123
      %p125 = scmp.ne.s32.totalorder %s117, %s119
      %p126 = scmp.eq.s32.totalorder %s20, 1
      %p127 = por %p125, %p126
      %p128 = scmp.ne.s32.totalorder %s119, %s120
      %p129 = scmp.eq.s32.totalorder %s20, 0
      %p130 = por %p128, %p129
      %p131 = scmp.ne.s32.totalorder %s119, %s120
      %p132 = scmp.eq.s32.totalorder %s21, 1
      %p133 = por %p131, %p132
      %p135 = scmp.ne.s32.totalorder %s120, %s134
      %p136 = scmp.eq.s32.totalorder %s21, 0
      %p137 = por %p135, %p136
      %s139 = sadd.s32 %s138, 1
      %p142 = scmp.eq.s32.totalorder %s15, 1
      %p143 = scmp.ne.s32.totalorder %s138, %s140
      %p144 = scmp.eq.s32.totalorder %s15, 0
      %p145 = por %p143, %p144
      %p146 = scmp.ne.s32.totalorder %s138, %s140
      %p147 = scmp.eq.s32.totalorder %s20, 1
      %p148 = por %p146, %p147
      %p149 = scmp.ne.s32.totalorder %s140, %s141
      %p150 = scmp.eq.s32.totalorder %s20, 0
      %p151 = por %p149, %p150
      %p152 = scmp.ne.s32.totalorder %s140, %s141
      %p153 = scmp.eq.s32.totalorder %s21, 1
      %p154 = por %p152, %p153
      %p156 = scmp.ne.s32.totalorder %s141, %s155
      %p157 = scmp.eq.s32.totalorder %s21, 0
      %p158 = por %p156, %p157
      %s159 = ssub.s32 %s15, %s22
      %p160 = scmp.eq.s32.totalorder %s159, 0
      %s162 = sadd.s32 %s161, 1
      %s163 = scalar_select %p160, %s161, %s162
      %p166 = pneg %p160
      %p167 = scmp.eq.s32.totalorder %s15, 1
      %p168 = por %p166, %p167
      %p169 = scmp.ne.s32.totalorder %s161, %s164
      %p170 = scmp.eq.s32.totalorder %s15, 0
      %p171 = por %p169, %p170
      %p172 = scmp.ne.s32.totalorder %s161, %s164
      %p173 = scmp.eq.s32.totalorder %s20, 1
      %p174 = por %p172, %p173
      %p175 = scmp.ne.s32.totalorder %s164, %s165
      %p176 = scmp.eq.s32.totalorder %s20, 0
      %p177 = por %p175, %p176
      %p178 = scmp.ne.s32.totalorder %s164, %s165
      %p179 = scmp.eq.s32.totalorder %s21, 1
      %p180 = por %p178, %p179
      %p182 = scmp.ne.s32.totalorder %s165, %s181
      %p183 = scmp.eq.s32.totalorder %s21, 0
      %p184 = por %p182, %p183
      %p185 = scmp.le.s32.totalorder 1, %s15
      %p186 = scmp.lt.s32.totalorder %s15, 3
      %p187 = pnand %p185, %p186
      %p188 = pneg %p187
      // Predicated region
      $region9: #{cnn_down_stack.1} parent=5 // pred_check
        _
      $region10: #{cnn_down_stack.1} parent=5 // pred_check_branch
        %190 = sbr.rel (%p187) target = $region12
      $region11: #{cnn_down_stack.1} parent=5 // pred_region
        %s191 = ssub.s32 %s15, 1
        // Predicated region
        $region13: #{cnn_down_stack.1} parent=11 // pred_check
          %p192 = pneg %p88
        $region14: #{cnn_down_stack.1} parent=11 // pred_check_branch
          %194 = sbr.rel (%p192) target = $region16
        $region15: #{cnn_down_stack.1} parent=11 // pred_region
          _
        $region16: #{cnn_down_stack.1} parent=11 // pred_fallthru
          _
        // Predicated region
        $region17: #{cnn_down_stack.1} parent=11 // pred_check
          %p195 = pneg %p109
        $region18: #{cnn_down_stack.1} parent=11 // pred_check_branch
          %197 = sbr.rel (%p195) target = $region20
        $region19: #{cnn_down_stack.1} parent=11 // pred_region
          _
        $region20: #{cnn_down_stack.1} parent=11 // pred_fallthru
          _
        // Predicated region
        $region21: #{cnn_down_stack.1} parent=11 // pred_check
          %p198 = pneg %p130
        $region22: #{cnn_down_stack.1} parent=11 // pred_check_branch
          %200 = sbr.rel (%p198) target = $region24
        $region23: #{cnn_down_stack.1} parent=11 // pred_region
          _
        $region24: #{cnn_down_stack.1} parent=11 // pred_fallthru
          _
        // Predicated region
        $region25: #{cnn_down_stack.1} parent=11 // pred_check
          %p201 = pneg %p151
        $region26: #{cnn_down_stack.1} parent=11 // pred_check_branch
          %203 = sbr.rel (%p201) target = $region28
        $region27: #{cnn_down_stack.1} parent=11 // pred_region
          _
        $region28: #{cnn_down_stack.1} parent=11 // pred_fallthru
          _
      $region12: #{cnn_down_stack.1} parent=5 // pred_fallthru
        _
      %p204 = scmp.lt.s32.totalorder %s15, 2
      // Predicated region
      $region29: #{cnn_down_stack.1} parent=5 // pred_check
        %p205 = pneg %p204
      $region30: #{cnn_down_stack.1} parent=5 // pred_check_branch
        %207 = sbr.rel (%p205) target = $region32
      $region31: #{cnn_down_stack.1} parent=5 // pred_region
        // Predicated region
        $region33: #{cnn_down_stack.1} parent=31 // pred_check
          %p208 = pneg %p35
        $region34: #{cnn_down_stack.1} parent=31 // pred_check_branch
          %210 = sbr.rel (%p208) target = $region36
        $region35: #{cnn_down_stack.1} parent=31 // pred_region
          %p211 = scmp.lt.s32.totalorder %s15, 1
          %s212 = scalar_select %p211, %s15, 1
          %s213 = smul.addr %s212, 16
          %s214 = smul.addr %s213, 8
          %s215 = scalar_lea.vmem %s0, %s214
        $region36: #{cnn_down_stack.1} parent=31 // pred_fallthru
          _
        // Predicated region
        $region37: #{cnn_down_stack.1} parent=31 // pred_check
          %p216 = pneg %p61
        $region38: #{cnn_down_stack.1} parent=31 // pred_check_branch
          %218 = sbr.rel (%p216) target = $region40
        $region39: #{cnn_down_stack.1} parent=31 // pred_region
          %p219 = scmp.lt.s32.totalorder %s15, 1
          %s220 = scalar_select %p219, %s15, 1
          %s221 = smul.addr %s220, 16
          %s222 = smul.addr %s221, 8
          %s223 = scalar_lea.vmem %s1, %s222
        $region40: #{cnn_down_stack.1} parent=31 // pred_fallthru
          _
      $region32: #{cnn_down_stack.1} parent=5 // pred_fallthru
        _
      %p224 = scmp.le.s32.totalorder 1, %s15
      %p225 = scmp.lt.s32.totalorder %s15, 3
      %p226 = pnand %p224, %p225
      %p227 = pneg %p226
      // Predicated region
      $region41: #{cnn_down_stack.1} parent=5 // pred_check
        _
      $region42: #{cnn_down_stack.1} parent=5 // pred_check_branch
        %229 = sbr.rel (%p226) target = $region44
      $region43: #{cnn_down_stack.1} parent=5 // pred_region
        %s230 = ssub.s32 %s15, 1
        %p231 = scmp.lt.s32.totalorder %s20, 1
        %s232 = scalar_select %p231, %s20, 1
        %s233 = smul.addr %s232, 16
        %s234 = smul.addr %s233, 8
        %s235 = scalar_lea.vmem %s0, %s234
        %p236 = pneg %p41
        %p237 = pneg %p38
        %p238 = scmp.lt.s32.totalorder %s20, 1
        %s239 = scalar_select %p238, %s20, 1
        %s240 = smul.addr %s239, 16
        %s241 = smul.addr %s240, 8
        %s242 = scalar_lea.vmem %s1, %s241
        %p243 = pneg %p67
        %p244 = pneg %p64
        %p245 = pneg %p88
        %p246 = pneg %p85
        %p247 = pneg %p109
        %p248 = pneg %p106
        %p249 = pneg %p130
        %p250 = pneg %p127
        %p251 = pneg %p151
        %p252 = pneg %p148
        %p253 = pneg %p177
        %p254 = pneg %p174
        %s255 = sand.u32 %s164, 1
        %s256 = scalar_lea.sflag [#allocation10], %s255
        %s257 = sand.u32 %s164, 1
        %s258 = smul.addr %s257, 64
        %s259 = scalar_lea.vmem [#allocation9], %s258
        %p260 = scmp.lt.s32.totalorder %s20, 1
        %s261 = scalar_select %p260, %s20, 1
        %s262 = smul.addr %s261, 16
        %s263 = smul.addr %s262, 8
        %s264 = scalar_lea.vmem %s0, %s263
        %p265 = scmp.lt.s32.totalorder %s20, 1
        %s266 = scalar_select %p265, %s20, 1
        %s267 = smul.addr %s266, 16
        %s268 = smul.addr %s267, 8
        %s269 = scalar_lea.vmem %s1, %s268
        %vm270 = vcmask 31744
        %271 = vst.msk [vmem:[#allocation2] sm:$0xff] %vm270, 0.0
        %vm272 = vcmask 25600
        %273 = vst.msk [vmem:[#allocation2 + $0x8] sm:$0x3] %vm272, 0.0
        %s274 = scalar_lea.vmem [#allocation2], 272
        %275 = vst.msk [vmem:[%s274] sm:$0xff] %vm270, 0.0
        %276 = vst.msk [vmem:[%s274 + $0x8] sm:$0x3] %vm272, 0.0
        %vm277 = vcmask 24576
        %278 = vst.msk [vmem:[#allocation2] sm:$0x1] %vm277, 0.0
        %279 = vst.msk [vmem:[#allocation2 + $0x10] sm:$0x1] %vm277, 0.0
        %280 = vst.msk [vmem:[#allocation2 + $0x20] sm:$0x1] %vm277, 0.0
        %281 = vst.msk [vmem:[#allocation2 + $0x30] sm:$0x1] %vm277, 0.0
        %282 = vst.msk [vmem:[#allocation2 + $0x40] sm:$0x1] %vm277, 0.0
        %283 = vst.msk [vmem:[#allocation2 + $0x50] sm:$0x1] %vm277, 0.0
        %284 = vst.msk [vmem:[#allocation2 + $0x60] sm:$0x1] %vm277, 0.0
        %285 = vst.msk [vmem:[#allocation2 + $0x70] sm:$0x1] %vm277, 0.0
        %286 = vst.msk [vmem:[#allocation2 + $0x80] sm:$0x1] %vm277, 0.0
        %287 = vst.msk [vmem:[#allocation2 + $0x90] sm:$0x1] %vm277, 0.0
        %288 = vst.msk [vmem:[#allocation2 + $0xa0] sm:$0x1] %vm277, 0.0
        %289 = vst.msk [vmem:[#allocation2 + $0xb0] sm:$0x1] %vm277, 0.0
        %290 = vst.msk [vmem:[#allocation2 + $0xc0] sm:$0x1] %vm277, 0.0
        %291 = vst.msk [vmem:[#allocation2 + $0xd0] sm:$0x1] %vm277, 0.0
        %292 = vst.msk [vmem:[#allocation2 + $0xe0] sm:$0x1] %vm277, 0.0
        %293 = vst.msk [vmem:[#allocation2 + $0xf0] sm:$0x1] %vm277, 0.0
        %294 = vst.msk [vmem:[#allocation2 + $0x100] sm:$0x1] %vm277, 0.0
        %295 = vst.msk [vmem:[#allocation2 + $0x110] sm:$0x1] %vm277, 0.0
        %296 = vst.msk [vmem:[#allocation2 + $0x9] sm:$0x1] %vm277, 0.0
        %297 = vst.msk [vmem:[#allocation2 + $0x19] sm:$0x1] %vm277, 0.0
        %298 = vst.msk [vmem:[#allocation2 + $0x29] sm:$0x1] %vm277, 0.0
        %299 = vst.msk [vmem:[#allocation2 + $0x39] sm:$0x1] %vm277, 0.0
        %300 = vst.msk [vmem:[#allocation2 + $0x49] sm:$0x1] %vm277, 0.0
        %301 = vst.msk [vmem:[#allocation2 + $0x59] sm:$0x1] %vm277, 0.0
        %302 = vst.msk [vmem:[#allocation2 + $0x69] sm:$0x1] %vm277, 0.0
        %303 = vst.msk [vmem:[#allocation2 + $0x79] sm:$0x1] %vm277, 0.0
        %304 = vst.msk [vmem:[#allocation2 + $0x89] sm:$0x1] %vm277, 0.0
        %305 = vst.msk [vmem:[#allocation2 + $0x99] sm:$0x1] %vm277, 0.0
        %306 = vst.msk [vmem:[#allocation2 + $0xa9] sm:$0x1] %vm277, 0.0
        %307 = vst.msk [vmem:[#allocation2 + $0xb9] sm:$0x1] %vm277, 0.0
        %308 = vst.msk [vmem:[#allocation2 + $0xc9] sm:$0x1] %vm277, 0.0
        %309 = vst.msk [vmem:[#allocation2 + $0xd9] sm:$0x1] %vm277, 0.0
        %310 = vst.msk [vmem:[#allocation2 + $0xe9] sm:$0x1] %vm277, 0.0
        %311 = vst.msk [vmem:[#allocation2 + $0xf9] sm:$0x1] %vm277, 0.0
        %312 = vst.msk [vmem:[#allocation2 + $0x109] sm:$0x1] %vm277, 0.0
        %313 = vst.msk [vmem:[#allocation2 + $0x119] sm:$0x1] %vm277, 0.0
        %314 = vst.msk [vmem:[#allocation3] sm:$0xff] %vm270, 0.0
        %315 = vst.msk [vmem:[#allocation3 + $0x8] sm:$0x3] %vm272, 0.0
        %s316 = scalar_lea.vmem [#allocation3], 272
        %317 = vst.msk [vmem:[%s316] sm:$0xff] %vm270, 0.0
        %318 = vst.msk [vmem:[%s316 + $0x8] sm:$0x3] %vm272, 0.0
        %319 = vst.msk [vmem:[#allocation3] sm:$0x1] %vm277, 0.0
        %320 = vst.msk [vmem:[#allocation3 + $0x10] sm:$0x1] %vm277, 0.0
        %321 = vst.msk [vmem:[#allocation3 + $0x20] sm:$0x1] %vm277, 0.0
        %322 = vst.msk [vmem:[#allocation3 + $0x30] sm:$0x1] %vm277, 0.0
        %323 = vst.msk [vmem:[#allocation3 + $0x40] sm:$0x1] %vm277, 0.0
        %324 = vst.msk [vmem:[#allocation3 + $0x50] sm:$0x1] %vm277, 0.0
        %325 = vst.msk [vmem:[#allocation3 + $0x60] sm:$0x1] %vm277, 0.0
        %326 = vst.msk [vmem:[#allocation3 + $0x70] sm:$0x1] %vm277, 0.0
        %327 = vst.msk [vmem:[#allocation3 + $0x80] sm:$0x1] %vm277, 0.0
        %328 = vst.msk [vmem:[#allocation3 + $0x90] sm:$0x1] %vm277, 0.0
        %329 = vst.msk [vmem:[#allocation3 + $0xa0] sm:$0x1] %vm277, 0.0
        %330 = vst.msk [vmem:[#allocation3 + $0xb0] sm:$0x1] %vm277, 0.0
        %331 = vst.msk [vmem:[#allocation3 + $0xc0] sm:$0x1] %vm277, 0.0
        %332 = vst.msk [vmem:[#allocation3 + $0xd0] sm:$0x1] %vm277, 0.0
        %333 = vst.msk [vmem:[#allocation3 + $0xe0] sm:$0x1] %vm277, 0.0
        %334 = vst.msk [vmem:[#allocation3 + $0xf0] sm:$0x1] %vm277, 0.0
        %335 = vst.msk [vmem:[#allocation3 + $0x100] sm:$0x1] %vm277, 0.0
        %336 = vst.msk [vmem:[#allocation3 + $0x110] sm:$0x1] %vm277, 0.0
        %337 = vst.msk [vmem:[#allocation3 + $0x9] sm:$0x1] %vm277, 0.0
        %338 = vst.msk [vmem:[#allocation3 + $0x19] sm:$0x1] %vm277, 0.0
        %339 = vst.msk [vmem:[#allocation3 + $0x29] sm:$0x1] %vm277, 0.0
        %340 = vst.msk [vmem:[#allocation3 + $0x39] sm:$0x1] %vm277, 0.0
        %341 = vst.msk [vmem:[#allocation3 + $0x49] sm:$0x1] %vm277, 0.0
        %342 = vst.msk [vmem:[#allocation3 + $0x59] sm:$0x1] %vm277, 0.0
        %343 = vst.msk [vmem:[#allocation3 + $0x69] sm:$0x1] %vm277, 0.0
        %344 = vst.msk [vmem:[#allocation3 + $0x79] sm:$0x1] %vm277, 0.0
        %345 = vst.msk [vmem:[#allocation3 + $0x89] sm:$0x1] %vm277, 0.0
        %346 = vst.msk [vmem:[#allocation3 + $0x99] sm:$0x1] %vm277, 0.0
        %347 = vst.msk [vmem:[#allocation3 + $0xa9] sm:$0x1] %vm277, 0.0
        %348 = vst.msk [vmem:[#allocation3 + $0xb9] sm:$0x1] %vm277, 0.0
        %349 = vst.msk [vmem:[#allocation3 + $0xc9] sm:$0x1] %vm277, 0.0
        %350 = vst.msk [vmem:[#allocation3 + $0xd9] sm:$0x1] %vm277, 0.0
        %351 = vst.msk [vmem:[#allocation3 + $0xe9] sm:$0x1] %vm277, 0.0
        %352 = vst.msk [vmem:[#allocation3 + $0xf9] sm:$0x1] %vm277, 0.0
        %353 = vst.msk [vmem:[#allocation3 + $0x109] sm:$0x1] %vm277, 0.0
        %354 = vst.msk [vmem:[#allocation3 + $0x119] sm:$0x1] %vm277, 0.0
        %vm355 = vcmask 130048
        %356 = vst.msk [vmem:[#allocation4] sm:$0xff] %vm355, 0.0
        %vm357 = vcmask 123904
        %358 = vst.msk [vmem:[#allocation4 + $0x8] sm:$0x3] %vm357, 0.0
        %s359 = scalar_lea.vmem [#allocation4], 144
        %360 = vst.msk [vmem:[%s359] sm:$0xff] %vm355, 0.0
        %361 = vst.msk [vmem:[%s359 + $0x8] sm:$0x3] %vm357, 0.0
        %vm362 = vcmask 122880
        %363 = vst.msk [vmem:[#allocation4] sm:$0x1] %vm362, 0.0
        %364 = vst.msk [vmem:[#allocation4 + $0x10] sm:$0x1] %vm362, 0.0
        %365 = vst.msk [vmem:[#allocation4 + $0x20] sm:$0x1] %vm362, 0.0
        %366 = vst.msk [vmem:[#allocation4 + $0x30] sm:$0x1] %vm362, 0.0
        %367 = vst.msk [vmem:[#allocation4 + $0x40] sm:$0x1] %vm362, 0.0
        %368 = vst.msk [vmem:[#allocation4 + $0x50] sm:$0x1] %vm362, 0.0
        %369 = vst.msk [vmem:[#allocation4 + $0x60] sm:$0x1] %vm362, 0.0
        %370 = vst.msk [vmem:[#allocation4 + $0x70] sm:$0x1] %vm362, 0.0
        %371 = vst.msk [vmem:[#allocation4 + $0x80] sm:$0x1] %vm362, 0.0
        %372 = vst.msk [vmem:[#allocation4 + $0x90] sm:$0x1] %vm362, 0.0
        %373 = vst.msk [vmem:[#allocation4 + $0x9] sm:$0x1] %vm362, 0.0
        %374 = vst.msk [vmem:[#allocation4 + $0x19] sm:$0x1] %vm362, 0.0
        %375 = vst.msk [vmem:[#allocation4 + $0x29] sm:$0x1] %vm362, 0.0
        %376 = vst.msk [vmem:[#allocation4 + $0x39] sm:$0x1] %vm362, 0.0
        %377 = vst.msk [vmem:[#allocation4 + $0x49] sm:$0x1] %vm362, 0.0
        %378 = vst.msk [vmem:[#allocation4 + $0x59] sm:$0x1] %vm362, 0.0
        %379 = vst.msk [vmem:[#allocation4 + $0x69] sm:$0x1] %vm362, 0.0
        %380 = vst.msk [vmem:[#allocation4 + $0x79] sm:$0x1] %vm362, 0.0
        %381 = vst.msk [vmem:[#allocation4 + $0x89] sm:$0x1] %vm362, 0.0
        %382 = vst.msk [vmem:[#allocation4 + $0x99] sm:$0x1] %vm362, 0.0
        %v383 = vld [vmem:[%s264] sm:$0xff]
        %v384 = vld [vmem:[%s264 + $0x8] sm:$0xff]
        %v385 = vld [vmem:[%s264 + $0x10] sm:$0xff]
        %v386 = vld [vmem:[%s264 + $0x18] sm:$0xff]
        %v387 = vld [vmem:[%s264 + $0x20] sm:$0xff]
        %v388 = vld [vmem:[%s264 + $0x28] sm:$0xff]
        %v389 = vld [vmem:[%s264 + $0x30] sm:$0xff]
        %v390 = vld [vmem:[%s264 + $0x38] sm:$0xff]
        %v391 = vld [vmem:[%s264 + $0x40] sm:$0xff]
        %v392 = vld [vmem:[%s264 + $0x48] sm:$0xff]
        %v393 = vld [vmem:[%s264 + $0x50] sm:$0xff]
        %v394 = vld [vmem:[%s264 + $0x58] sm:$0xff]
        %v395 = vld [vmem:[%s264 + $0x60] sm:$0xff]
        %v396 = vld [vmem:[%s264 + $0x68] sm:$0xff]
        %v397 = vld [vmem:[%s264 + $0x70] sm:$0xff]
        %v398 = vld [vmem:[%s264 + $0x78] sm:$0xff]
        %s399 = scalar_lea.vmem [#allocation2], 16
        %400 = vst.msk [vmem:[%s399 + $0x1] sm:$0xff] %vm270, %v383
        %401 = vst.msk [vmem:[%s399 + $0x11] sm:$0xff] %vm270, %v384
        %402 = vst.msk [vmem:[%s399 + $0x21] sm:$0xff] %vm270, %v385
        %403 = vst.msk [vmem:[%s399 + $0x31] sm:$0xff] %vm270, %v386
        %404 = vst.msk [vmem:[%s399 + $0x41] sm:$0xff] %vm270, %v387
        %405 = vst.msk [vmem:[%s399 + $0x51] sm:$0xff] %vm270, %v388
        %406 = vst.msk [vmem:[%s399 + $0x61] sm:$0xff] %vm270, %v389
        %407 = vst.msk [vmem:[%s399 + $0x71] sm:$0xff] %vm270, %v390
        %408 = vst.msk [vmem:[%s399 + $0x81] sm:$0xff] %vm270, %v391
        %409 = vst.msk [vmem:[%s399 + $0x91] sm:$0xff] %vm270, %v392
        %410 = vst.msk [vmem:[%s399 + $0xa1] sm:$0xff] %vm270, %v393
        %411 = vst.msk [vmem:[%s399 + $0xb1] sm:$0xff] %vm270, %v394
        %412 = vst.msk [vmem:[%s399 + $0xc1] sm:$0xff] %vm270, %v395
        %413 = vst.msk [vmem:[%s399 + $0xd1] sm:$0xff] %vm270, %v396
        %414 = vst.msk [vmem:[%s399 + $0xe1] sm:$0xff] %vm270, %v397
        %415 = vst.msk [vmem:[%s399 + $0xf1] sm:$0xff] %vm270, %v398
        %v416 = vld [vmem:[%s269] sm:$0xff]
        %v417 = vld [vmem:[%s269 + $0x8] sm:$0xff]
        %v418 = vld [vmem:[%s269 + $0x10] sm:$0xff]
        %v419 = vld [vmem:[%s269 + $0x18] sm:$0xff]
        %v420 = vld [vmem:[%s269 + $0x20] sm:$0xff]
        %v421 = vld [vmem:[%s269 + $0x28] sm:$0xff]
        %v422 = vld [vmem:[%s269 + $0x30] sm:$0xff]
        %v423 = vld [vmem:[%s269 + $0x38] sm:$0xff]
        %v424 = vld [vmem:[%s269 + $0x40] sm:$0xff]
        %v425 = vld [vmem:[%s269 + $0x48] sm:$0xff]
        %v426 = vld [vmem:[%s269 + $0x50] sm:$0xff]
        %v427 = vld [vmem:[%s269 + $0x58] sm:$0xff]
        %v428 = vld [vmem:[%s269 + $0x60] sm:$0xff]
        %v429 = vld [vmem:[%s269 + $0x68] sm:$0xff]
        %v430 = vld [vmem:[%s269 + $0x70] sm:$0xff]
        %v431 = vld [vmem:[%s269 + $0x78] sm:$0xff]
        %s432 = scalar_lea.vmem [#allocation3], 16
        %433 = vst.msk [vmem:[%s432 + $0x1] sm:$0xff] %vm270, %v416
        %434 = vst.msk [vmem:[%s432 + $0x11] sm:$0xff] %vm270, %v417
        %435 = vst.msk [vmem:[%s432 + $0x21] sm:$0xff] %vm270, %v418
        %436 = vst.msk [vmem:[%s432 + $0x31] sm:$0xff] %vm270, %v419
        %437 = vst.msk [vmem:[%s432 + $0x41] sm:$0xff] %vm270, %v420
        %438 = vst.msk [vmem:[%s432 + $0x51] sm:$0xff] %vm270, %v421
        %439 = vst.msk [vmem:[%s432 + $0x61] sm:$0xff] %vm270, %v422
        %440 = vst.msk [vmem:[%s432 + $0x71] sm:$0xff] %vm270, %v423
        %441 = vst.msk [vmem:[%s432 + $0x81] sm:$0xff] %vm270, %v424
        %442 = vst.msk [vmem:[%s432 + $0x91] sm:$0xff] %vm270, %v425
        %443 = vst.msk [vmem:[%s432 + $0xa1] sm:$0xff] %vm270, %v426
        %444 = vst.msk [vmem:[%s432 + $0xb1] sm:$0xff] %vm270, %v427
        %445 = vst.msk [vmem:[%s432 + $0xc1] sm:$0xff] %vm270, %v428
        %446 = vst.msk [vmem:[%s432 + $0xd1] sm:$0xff] %vm270, %v429
        %447 = vst.msk [vmem:[%s432 + $0xe1] sm:$0xff] %vm270, %v430
        %448 = vst.msk [vmem:[%s432 + $0xf1] sm:$0xff] %vm270, %v431
        %v449 = vld [vmem:[#allocation3] sm:$0xff]
        %v450 = vld [vmem:[#allocation3 + $0x10] sm:$0xff]
        %v451 = vld [vmem:[#allocation3 + $0x20] sm:$0xff]
        %v452 = vld [vmem:[#allocation3 + $0x30] sm:$0xff]
        %v453 = vld [vmem:[#allocation3 + $0x40] sm:$0xff]
        %v454 = vld [vmem:[#allocation3 + $0x50] sm:$0xff]
        %v455 = vld [vmem:[#allocation3 + $0x60] sm:$0xff]
        %v456 = vld [vmem:[#allocation3 + $0x70] sm:$0xff]
        %v457 = vld [vmem:[#allocation3 + $0x80] sm:$0xff]
        %v458 = vld [vmem:[#allocation3 + $0x90] sm:$0xff]
        %v459 = vld [vmem:[#allocation3 + $0xa0] sm:$0xff]
        %v460 = vld [vmem:[#allocation3 + $0xb0] sm:$0xff]
        %v461 = vld [vmem:[#allocation3 + $0xc0] sm:$0xff]
        %v462 = vld [vmem:[#allocation3 + $0xd0] sm:$0xff]
        %v463 = vld [vmem:[#allocation3 + $0xe0] sm:$0xff]
        %v464 = vld [vmem:[#allocation3 + $0xf0] sm:$0xff]
        %465 = vst.msk [vmem:[#allocation5] sm:$0xff] %vm270, %v449
        %466 = vst.msk [vmem:[#allocation5 + $0x8] sm:$0xff] %vm270, %v450
        %467 = vst.msk [vmem:[#allocation5 + $0x10] sm:$0xff] %vm270, %v451
        %468 = vst.msk [vmem:[#allocation5 + $0x18] sm:$0xff] %vm270, %v452
        %469 = vst.msk [vmem:[#allocation5 + $0x20] sm:$0xff] %vm270, %v453
        %470 = vst.msk [vmem:[#allocation5 + $0x28] sm:$0xff] %vm270, %v454
        %471 = vst.msk [vmem:[#allocation5 + $0x30] sm:$0xff] %vm270, %v455
        %472 = vst.msk [vmem:[#allocation5 + $0x38] sm:$0xff] %vm270, %v456
        %473 = vst.msk [vmem:[#allocation5 + $0x40] sm:$0xff] %vm270, %v457
        %474 = vst.msk [vmem:[#allocation5 + $0x48] sm:$0xff] %vm270, %v458
        %475 = vst.msk [vmem:[#allocation5 + $0x50] sm:$0xff] %vm270, %v459
        %476 = vst.msk [vmem:[#allocation5 + $0x58] sm:$0xff] %vm270, %v460
        %477 = vst.msk [vmem:[#allocation5 + $0x60] sm:$0xff] %vm270, %v461
        %478 = vst.msk [vmem:[#allocation5 + $0x68] sm:$0xff] %vm270, %v462
        %479 = vst.msk [vmem:[#allocation5 + $0x70] sm:$0xff] %vm270, %v463
        %480 = vst.msk [vmem:[#allocation5 + $0x78] sm:$0xff] %vm270, %v464
        %v481 = vld [vmem:[#allocation2 + $0x1] sm:$0xff]
        %v482 = vld [vmem:[#allocation2 + $0x11] sm:$0xff]
        %v483 = vld [vmem:[#allocation2 + $0x21] sm:$0xff]
        %v484 = vld [vmem:[#allocation2 + $0x31] sm:$0xff]
        %v485 = vld [vmem:[#allocation2 + $0x41] sm:$0xff]
        %v486 = vld [vmem:[#allocation2 + $0x51] sm:$0xff]
        %v487 = vld [vmem:[#allocation2 + $0x61] sm:$0xff]
        %v488 = vld [vmem:[#allocation2 + $0x71] sm:$0xff]
        %v489 = vld [vmem:[#allocation2 + $0x81] sm:$0xff]
        %v490 = vld [vmem:[#allocation2 + $0x91] sm:$0xff]
        %v491 = vld [vmem:[#allocation2 + $0xa1] sm:$0xff]
        %v492 = vld [vmem:[#allocation2 + $0xb1] sm:$0xff]
        %v493 = vld [vmem:[#allocation2 + $0xc1] sm:$0xff]
        %v494 = vld [vmem:[#allocation2 + $0xd1] sm:$0xff]
        %v495 = vld [vmem:[#allocation2 + $0xe1] sm:$0xff]
        %v496 = vld [vmem:[#allocation2 + $0xf1] sm:$0xff]
        %497 = vst.msk [vmem:[#allocation5 + $0x80] sm:$0xff] %vm270, %v481
        %498 = vst.msk [vmem:[#allocation5 + $0x88] sm:$0xff] %vm270, %v482
        %499 = vst.msk [vmem:[#allocation5 + $0x90] sm:$0xff] %vm270, %v483
        %500 = vst.msk [vmem:[#allocation5 + $0x98] sm:$0xff] %vm270, %v484
        %501 = vst.msk [vmem:[#allocation5 + $0xa0] sm:$0xff] %vm270, %v485
        %502 = vst.msk [vmem:[#allocation5 + $0xa8] sm:$0xff] %vm270, %v486
        %503 = vst.msk [vmem:[#allocation5 + $0xb0] sm:$0xff] %vm270, %v487
        %504 = vst.msk [vmem:[#allocation5 + $0xb8] sm:$0xff] %vm270, %v488
        %505 = vst.msk [vmem:[#allocation5 + $0xc0] sm:$0xff] %vm270, %v489
        %506 = vst.msk [vmem:[#allocation5 + $0xc8] sm:$0xff] %vm270, %v490
        %507 = vst.msk [vmem:[#allocation5 + $0xd0] sm:$0xff] %vm270, %v491
        %508 = vst.msk [vmem:[#allocation5 + $0xd8] sm:$0xff] %vm270, %v492
        %509 = vst.msk [vmem:[#allocation5 + $0xe0] sm:$0xff] %vm270, %v493
        %510 = vst.msk [vmem:[#allocation5 + $0xe8] sm:$0xff] %vm270, %v494
        %511 = vst.msk [vmem:[#allocation5 + $0xf0] sm:$0xff] %vm270, %v495
        %512 = vst.msk [vmem:[#allocation5 + $0xf8] sm:$0xff] %vm270, %v496
        %v513 = vld [vmem:[#allocation2 + $0x1] sm:$0xff]
        %v514 = vld [vmem:[#allocation2 + $0x11] sm:$0xff]
        %v515 = vld [vmem:[#allocation2 + $0x21] sm:$0xff]
        %v516 = vld [vmem:[#allocation2 + $0x31] sm:$0xff]
        %v517 = vld [vmem:[#allocation2 + $0x41] sm:$0xff]
        %v518 = vld [vmem:[#allocation2 + $0x51] sm:$0xff]
        %v519 = vld [vmem:[#allocation2 + $0x61] sm:$0xff]
        %v520 = vld [vmem:[#allocation2 + $0x71] sm:$0xff]
        %v521 = vld [vmem:[#allocation2 + $0x81] sm:$0xff]
        %v522 = vld [vmem:[#allocation2 + $0x91] sm:$0xff]
        %v523 = vld [vmem:[#allocation2 + $0xa1] sm:$0xff]
        %v524 = vld [vmem:[#allocation2 + $0xb1] sm:$0xff]
        %v525 = vld [vmem:[#allocation2 + $0xc1] sm:$0xff]
        %v526 = vld [vmem:[#allocation2 + $0xd1] sm:$0xff]
        %v527 = vld [vmem:[#allocation2 + $0xe1] sm:$0xff]
        %v528 = vld [vmem:[#allocation2 + $0xf1] sm:$0xff]
        %545 = vrot.lane.b32.xlu0 %v513, 4
        %v546 = vpop.permute.xlu0 %545
        %547 = vrot.lane.b32.xlu0 %v514, 4
        %v548 = vpop.permute.xlu0 %547
        %549 = vrot.lane.b32.xlu0 %v515, 4
        %v550 = vpop.permute.xlu0 %549
        %551 = vrot.lane.b32.xlu0 %v516, 4
        %v552 = vpop.permute.xlu0 %551
        %553 = vrot.lane.b32.xlu0 %v517, 4
        %v554 = vpop.permute.xlu0 %553
        %555 = vrot.lane.b32.xlu0 %v518, 4
        %v556 = vpop.permute.xlu0 %555
        %557 = vrot.lane.b32.xlu0 %v519, 4
        %v558 = vpop.permute.xlu0 %557
        %559 = vrot.lane.b32.xlu0 %v520, 4
        %v560 = vpop.permute.xlu0 %559
        %561 = vrot.lane.b32.xlu0 %v521, 4
        %v562 = vpop.permute.xlu0 %561
        %563 = vrot.lane.b32.xlu0 %v522, 4
        %v564 = vpop.permute.xlu0 %563
        %565 = vrot.lane.b32.xlu0 %v523, 4
        %v566 = vpop.permute.xlu0 %565
        %567 = vrot.lane.b32.xlu0 %v524, 4
        %v568 = vpop.permute.xlu0 %567
        %569 = vrot.lane.b32.xlu0 %v525, 4
        %v570 = vpop.permute.xlu0 %569
        %571 = vrot.lane.b32.xlu0 %v526, 4
        %v572 = vpop.permute.xlu0 %571
        %573 = vrot.lane.b32.xlu0 %v527, 4
        %v574 = vpop.permute.xlu0 %573
        %575 = vrot.lane.b32.xlu0 %v528, 4
        %v576 = vpop.permute.xlu0 %575
        %vm593 = vcmask 64544
        %594 = vst.msk [vmem:[#allocation5] sm:$0xff] %vm593, %v546
        %595 = vst.msk [vmem:[#allocation5 + $0x8] sm:$0xff] %vm593, %v548
        %596 = vst.msk [vmem:[#allocation5 + $0x10] sm:$0xff] %vm593, %v550
        %597 = vst.msk [vmem:[#allocation5 + $0x18] sm:$0xff] %vm593, %v552
        %598 = vst.msk [vmem:[#allocation5 + $0x20] sm:$0xff] %vm593, %v554
        %599 = vst.msk [vmem:[#allocation5 + $0x28] sm:$0xff] %vm593, %v556
        %600 = vst.msk [vmem:[#allocation5 + $0x30] sm:$0xff] %vm593, %v558
        %601 = vst.msk [vmem:[#allocation5 + $0x38] sm:$0xff] %vm593, %v560
        %602 = vst.msk [vmem:[#allocation5 + $0x40] sm:$0xff] %vm593, %v562
        %603 = vst.msk [vmem:[#allocation5 + $0x48] sm:$0xff] %vm593, %v564
        %604 = vst.msk [vmem:[#allocation5 + $0x50] sm:$0xff] %vm593, %v566
        %605 = vst.msk [vmem:[#allocation5 + $0x58] sm:$0xff] %vm593, %v568
        %606 = vst.msk [vmem:[#allocation5 + $0x60] sm:$0xff] %vm593, %v570
        %607 = vst.msk [vmem:[#allocation5 + $0x68] sm:$0xff] %vm593, %v572
        %608 = vst.msk [vmem:[#allocation5 + $0x70] sm:$0xff] %vm593, %v574
        %609 = vst.msk [vmem:[#allocation5 + $0x78] sm:$0xff] %vm593, %v576
        %v610 = vld [vmem:[#allocation3 + $0x1] sm:$0xff]
        %v611 = vld [vmem:[#allocation3 + $0x11] sm:$0xff]
        %v612 = vld [vmem:[#allocation3 + $0x21] sm:$0xff]
        %v613 = vld [vmem:[#allocation3 + $0x31] sm:$0xff]
        %v614 = vld [vmem:[#allocation3 + $0x41] sm:$0xff]
        %v615 = vld [vmem:[#allocation3 + $0x51] sm:$0xff]
        %v616 = vld [vmem:[#allocation3 + $0x61] sm:$0xff]
        %v617 = vld [vmem:[#allocation3 + $0x71] sm:$0xff]
        %v618 = vld [vmem:[#allocation3 + $0x81] sm:$0xff]
        %v619 = vld [vmem:[#allocation3 + $0x91] sm:$0xff]
        %v620 = vld [vmem:[#allocation3 + $0xa1] sm:$0xff]
        %v621 = vld [vmem:[#allocation3 + $0xb1] sm:$0xff]
        %v622 = vld [vmem:[#allocation3 + $0xc1] sm:$0xff]
        %v623 = vld [vmem:[#allocation3 + $0xd1] sm:$0xff]
        %v624 = vld [vmem:[#allocation3 + $0xe1] sm:$0xff]
        %v625 = vld [vmem:[#allocation3 + $0xf1] sm:$0xff]
        %642 = vrot.lane.b32.xlu0 %v610, 4
        %v643 = vpop.permute.xlu0 %642
        %644 = vrot.lane.b32.xlu0 %v611, 4
        %v645 = vpop.permute.xlu0 %644
        %646 = vrot.lane.b32.xlu0 %v612, 4
        %v647 = vpop.permute.xlu0 %646
        %648 = vrot.lane.b32.xlu0 %v613, 4
        %v649 = vpop.permute.xlu0 %648
        %650 = vrot.lane.b32.xlu0 %v614, 4
        %v651 = vpop.permute.xlu0 %650
        %652 = vrot.lane.b32.xlu0 %v615, 4
        %v653 = vpop.permute.xlu0 %652
        %654 = vrot.lane.b32.xlu0 %v616, 4
        %v655 = vpop.permute.xlu0 %654
        %656 = vrot.lane.b32.xlu0 %v617, 4
        %v657 = vpop.permute.xlu0 %656
        %658 = vrot.lane.b32.xlu0 %v618, 4
        %v659 = vpop.permute.xlu0 %658
        %660 = vrot.lane.b32.xlu0 %v619, 4
        %v661 = vpop.permute.xlu0 %660
        %662 = vrot.lane.b32.xlu0 %v620, 4
        %v663 = vpop.permute.xlu0 %662
        %664 = vrot.lane.b32.xlu0 %v621, 4
        %v665 = vpop.permute.xlu0 %664
        %666 = vrot.lane.b32.xlu0 %v622, 4
        %v667 = vpop.permute.xlu0 %666
        %668 = vrot.lane.b32.xlu0 %v623, 4
        %v669 = vpop.permute.xlu0 %668
        %670 = vrot.lane.b32.xlu0 %v624, 4
        %v671 = vpop.permute.xlu0 %670
        %672 = vrot.lane.b32.xlu0 %v625, 4
        %v673 = vpop.permute.xlu0 %672
        %690 = vst.msk [vmem:[#allocation5 + $0x80] sm:$0xff] %vm593, %v643
        %691 = vst.msk [vmem:[#allocation5 + $0x88] sm:$0xff] %vm593, %v645
        %692 = vst.msk [vmem:[#allocation5 + $0x90] sm:$0xff] %vm593, %v647
        %693 = vst.msk [vmem:[#allocation5 + $0x98] sm:$0xff] %vm593, %v649
        %694 = vst.msk [vmem:[#allocation5 + $0xa0] sm:$0xff] %vm593, %v651
        %695 = vst.msk [vmem:[#allocation5 + $0xa8] sm:$0xff] %vm593, %v653
        %696 = vst.msk [vmem:[#allocation5 + $0xb0] sm:$0xff] %vm593, %v655
        %697 = vst.msk [vmem:[#allocation5 + $0xb8] sm:$0xff] %vm593, %v657
        %698 = vst.msk [vmem:[#allocation5 + $0xc0] sm:$0xff] %vm593, %v659
        %699 = vst.msk [vmem:[#allocation5 + $0xc8] sm:$0xff] %vm593, %v661
        %700 = vst.msk [vmem:[#allocation5 + $0xd0] sm:$0xff] %vm593, %v663
        %701 = vst.msk [vmem:[#allocation5 + $0xd8] sm:$0xff] %vm593, %v665
        %702 = vst.msk [vmem:[#allocation5 + $0xe0] sm:$0xff] %vm593, %v667
        %703 = vst.msk [vmem:[#allocation5 + $0xe8] sm:$0xff] %vm593, %v669
        %704 = vst.msk [vmem:[#allocation5 + $0xf0] sm:$0xff] %vm593, %v671
        %705 = vst.msk [vmem:[#allocation5 + $0xf8] sm:$0xff] %vm593, %v673
        %v706 = vld [vmem:[#allocation3 + $0x1] sm:$0xff]
        %v707 = vld [vmem:[#allocation3 + $0x11] sm:$0xff]
        %v708 = vld [vmem:[#allocation3 + $0x21] sm:$0xff]
        %v709 = vld [vmem:[#allocation3 + $0x31] sm:$0xff]
        %v710 = vld [vmem:[#allocation3 + $0x41] sm:$0xff]
        %v711 = vld [vmem:[#allocation3 + $0x51] sm:$0xff]
        %v712 = vld [vmem:[#allocation3 + $0x61] sm:$0xff]
        %v713 = vld [vmem:[#allocation3 + $0x71] sm:$0xff]
        %v714 = vld [vmem:[#allocation3 + $0x81] sm:$0xff]
        %v715 = vld [vmem:[#allocation3 + $0x91] sm:$0xff]
        %v716 = vld [vmem:[#allocation3 + $0xa1] sm:$0xff]
        %v717 = vld [vmem:[#allocation3 + $0xb1] sm:$0xff]
        %v718 = vld [vmem:[#allocation3 + $0xc1] sm:$0xff]
        %v719 = vld [vmem:[#allocation3 + $0xd1] sm:$0xff]
        %v720 = vld [vmem:[#allocation3 + $0xe1] sm:$0xff]
        %v721 = vld [vmem:[#allocation3 + $0xf1] sm:$0xff]
        %738 = vrot.lane.b32.xlu0 %v706, 8
        %v739 = vpop.permute.xlu0 %738
        %740 = vrot.lane.b32.xlu0 %v707, 8
        %v741 = vpop.permute.xlu0 %740
        %742 = vrot.lane.b32.xlu0 %v708, 8
        %v743 = vpop.permute.xlu0 %742
        %744 = vrot.lane.b32.xlu0 %v709, 8
        %v745 = vpop.permute.xlu0 %744
        %746 = vrot.lane.b32.xlu0 %v710, 8
        %v747 = vpop.permute.xlu0 %746
        %748 = vrot.lane.b32.xlu0 %v711, 8
        %v749 = vpop.permute.xlu0 %748
        %750 = vrot.lane.b32.xlu0 %v712, 8
        %v751 = vpop.permute.xlu0 %750
        %752 = vrot.lane.b32.xlu0 %v713, 8
        %v753 = vpop.permute.xlu0 %752
        %754 = vrot.lane.b32.xlu0 %v714, 8
        %v755 = vpop.permute.xlu0 %754
        %756 = vrot.lane.b32.xlu0 %v715, 8
        %v757 = vpop.permute.xlu0 %756
        %758 = vrot.lane.b32.xlu0 %v716, 8
        %v759 = vpop.permute.xlu0 %758
        %760 = vrot.lane.b32.xlu0 %v717, 8
        %v761 = vpop.permute.xlu0 %760
        %762 = vrot.lane.b32.xlu0 %v718, 8
        %v763 = vpop.permute.xlu0 %762
        %764 = vrot.lane.b32.xlu0 %v719, 8
        %v765 = vpop.permute.xlu0 %764
        %766 = vrot.lane.b32.xlu0 %v720, 8
        %v767 = vpop.permute.xlu0 %766
        %768 = vrot.lane.b32.xlu0 %v721, 8
        %v769 = vpop.permute.xlu0 %768
        %vm786 = vcmask 97344
        %787 = vst.msk [vmem:[#allocation5] sm:$0xff] %vm786, %v739
        %788 = vst.msk [vmem:[#allocation5 + $0x8] sm:$0xff] %vm786, %v741
        %789 = vst.msk [vmem:[#allocation5 + $0x10] sm:$0xff] %vm786, %v743
        %790 = vst.msk [vmem:[#allocation5 + $0x18] sm:$0xff] %vm786, %v745
        %791 = vst.msk [vmem:[#allocation5 + $0x20] sm:$0xff] %vm786, %v747
        %792 = vst.msk [vmem:[#allocation5 + $0x28] sm:$0xff] %vm786, %v749
        %793 = vst.msk [vmem:[#allocation5 + $0x30] sm:$0xff] %vm786, %v751
        %794 = vst.msk [vmem:[#allocation5 + $0x38] sm:$0xff] %vm786, %v753
        %795 = vst.msk [vmem:[#allocation5 + $0x40] sm:$0xff] %vm786, %v755
        %796 = vst.msk [vmem:[#allocation5 + $0x48] sm:$0xff] %vm786, %v757
        %797 = vst.msk [vmem:[#allocation5 + $0x50] sm:$0xff] %vm786, %v759
        %798 = vst.msk [vmem:[#allocation5 + $0x58] sm:$0xff] %vm786, %v761
        %799 = vst.msk [vmem:[#allocation5 + $0x60] sm:$0xff] %vm786, %v763
        %800 = vst.msk [vmem:[#allocation5 + $0x68] sm:$0xff] %vm786, %v765
        %801 = vst.msk [vmem:[#allocation5 + $0x70] sm:$0xff] %vm786, %v767
        %802 = vst.msk [vmem:[#allocation5 + $0x78] sm:$0xff] %vm786, %v769
        %v803 = vld [vmem:[#allocation2 + $0x2] sm:$0xff]
        %v804 = vld [vmem:[#allocation2 + $0x12] sm:$0xff]
        %v805 = vld [vmem:[#allocation2 + $0x22] sm:$0xff]
        %v806 = vld [vmem:[#allocation2 + $0x32] sm:$0xff]
        %v807 = vld [vmem:[#allocation2 + $0x42] sm:$0xff]
        %v808 = vld [vmem:[#allocation2 + $0x52] sm:$0xff]
        %v809 = vld [vmem:[#allocation2 + $0x62] sm:$0xff]
        %v810 = vld [vmem:[#allocation2 + $0x72] sm:$0xff]
        %v811 = vld [vmem:[#allocation2 + $0x82] sm:$0xff]
        %v812 = vld [vmem:[#allocation2 + $0x92] sm:$0xff]
        %v813 = vld [vmem:[#allocation2 + $0xa2] sm:$0xff]
        %v814 = vld [vmem:[#allocation2 + $0xb2] sm:$0xff]
        %v815 = vld [vmem:[#allocation2 + $0xc2] sm:$0xff]
        %v816 = vld [vmem:[#allocation2 + $0xd2] sm:$0xff]
        %v817 = vld [vmem:[#allocation2 + $0xe2] sm:$0xff]
        %v818 = vld [vmem:[#allocation2 + $0xf2] sm:$0xff]
        %835 = vrot.lane.b32.xlu0 %v803, 8
        %v836 = vpop.permute.xlu0 %835
        %837 = vrot.lane.b32.xlu0 %v804, 8
        %v838 = vpop.permute.xlu0 %837
        %839 = vrot.lane.b32.xlu0 %v805, 8
        %v840 = vpop.permute.xlu0 %839
        %841 = vrot.lane.b32.xlu0 %v806, 8
        %v842 = vpop.permute.xlu0 %841
        %843 = vrot.lane.b32.xlu0 %v807, 8
        %v844 = vpop.permute.xlu0 %843
        %845 = vrot.lane.b32.xlu0 %v808, 8
        %v846 = vpop.permute.xlu0 %845
        %847 = vrot.lane.b32.xlu0 %v809, 8
        %v848 = vpop.permute.xlu0 %847
        %849 = vrot.lane.b32.xlu0 %v810, 8
        %v850 = vpop.permute.xlu0 %849
        %851 = vrot.lane.b32.xlu0 %v811, 8
        %v852 = vpop.permute.xlu0 %851
        %853 = vrot.lane.b32.xlu0 %v812, 8
        %v854 = vpop.permute.xlu0 %853
        %855 = vrot.lane.b32.xlu0 %v813, 8
        %v856 = vpop.permute.xlu0 %855
        %857 = vrot.lane.b32.xlu0 %v814, 8
        %v858 = vpop.permute.xlu0 %857
        %859 = vrot.lane.b32.xlu0 %v815, 8
        %v860 = vpop.permute.xlu0 %859
        %861 = vrot.lane.b32.xlu0 %v816, 8
        %v862 = vpop.permute.xlu0 %861
        %863 = vrot.lane.b32.xlu0 %v817, 8
        %v864 = vpop.permute.xlu0 %863
        %865 = vrot.lane.b32.xlu0 %v818, 8
        %v866 = vpop.permute.xlu0 %865
        %883 = vst.msk [vmem:[#allocation5 + $0x80] sm:$0xff] %vm786, %v836
        %884 = vst.msk [vmem:[#allocation5 + $0x88] sm:$0xff] %vm786, %v838
        %885 = vst.msk [vmem:[#allocation5 + $0x90] sm:$0xff] %vm786, %v840
        %886 = vst.msk [vmem:[#allocation5 + $0x98] sm:$0xff] %vm786, %v842
        %887 = vst.msk [vmem:[#allocation5 + $0xa0] sm:$0xff] %vm786, %v844
        %888 = vst.msk [vmem:[#allocation5 + $0xa8] sm:$0xff] %vm786, %v846
        %889 = vst.msk [vmem:[#allocation5 + $0xb0] sm:$0xff] %vm786, %v848
        %890 = vst.msk [vmem:[#allocation5 + $0xb8] sm:$0xff] %vm786, %v850
        %891 = vst.msk [vmem:[#allocation5 + $0xc0] sm:$0xff] %vm786, %v852
        %892 = vst.msk [vmem:[#allocation5 + $0xc8] sm:$0xff] %vm786, %v854
        %893 = vst.msk [vmem:[#allocation5 + $0xd0] sm:$0xff] %vm786, %v856
        %894 = vst.msk [vmem:[#allocation5 + $0xd8] sm:$0xff] %vm786, %v858
        %895 = vst.msk [vmem:[#allocation5 + $0xe0] sm:$0xff] %vm786, %v860
        %896 = vst.msk [vmem:[#allocation5 + $0xe8] sm:$0xff] %vm786, %v862
        %897 = vst.msk [vmem:[#allocation5 + $0xf0] sm:$0xff] %vm786, %v864
        %898 = vst.msk [vmem:[#allocation5 + $0xf8] sm:$0xff] %vm786, %v866
        %v899 = vld [vmem:[%s432] sm:$0xff]
        %v900 = vld [vmem:[%s432 + $0x10] sm:$0xff]
        %v901 = vld [vmem:[%s432 + $0x20] sm:$0xff]
        %v902 = vld [vmem:[%s432 + $0x30] sm:$0xff]
        %v903 = vld [vmem:[%s432 + $0x40] sm:$0xff]
        %v904 = vld [vmem:[%s432 + $0x50] sm:$0xff]
        %v905 = vld [vmem:[%s432 + $0x60] sm:$0xff]
        %v906 = vld [vmem:[%s432 + $0x70] sm:$0xff]
        %v907 = vld [vmem:[%s432 + $0x80] sm:$0xff]
        %v908 = vld [vmem:[%s432 + $0x90] sm:$0xff]
        %v909 = vld [vmem:[%s432 + $0xa0] sm:$0xff]
        %v910 = vld [vmem:[%s432 + $0xb0] sm:$0xff]
        %v911 = vld [vmem:[%s432 + $0xc0] sm:$0xff]
        %v912 = vld [vmem:[%s432 + $0xd0] sm:$0xff]
        %v913 = vld [vmem:[%s432 + $0xe0] sm:$0xff]
        %v914 = vld [vmem:[%s432 + $0xf0] sm:$0xff]
        %931 = vrot.lane.b32.xlu0 %v899, 12
        %v932 = vpop.permute.xlu0 %931
        %933 = vrot.lane.b32.xlu0 %v900, 12
        %v934 = vpop.permute.xlu0 %933
        %935 = vrot.lane.b32.xlu0 %v901, 12
        %v936 = vpop.permute.xlu0 %935
        %937 = vrot.lane.b32.xlu0 %v902, 12
        %v938 = vpop.permute.xlu0 %937
        %939 = vrot.lane.b32.xlu0 %v903, 12
        %v940 = vpop.permute.xlu0 %939
        %941 = vrot.lane.b32.xlu0 %v904, 12
        %v942 = vpop.permute.xlu0 %941
        %943 = vrot.lane.b32.xlu0 %v905, 12
        %v944 = vpop.permute.xlu0 %943
        %945 = vrot.lane.b32.xlu0 %v906, 12
        %v946 = vpop.permute.xlu0 %945
        %947 = vrot.lane.b32.xlu0 %v907, 12
        %v948 = vpop.permute.xlu0 %947
        %949 = vrot.lane.b32.xlu0 %v908, 12
        %v950 = vpop.permute.xlu0 %949
        %951 = vrot.lane.b32.xlu0 %v909, 12
        %v952 = vpop.permute.xlu0 %951
        %953 = vrot.lane.b32.xlu0 %v910, 12
        %v954 = vpop.permute.xlu0 %953
        %955 = vrot.lane.b32.xlu0 %v911, 12
        %v956 = vpop.permute.xlu0 %955
        %957 = vrot.lane.b32.xlu0 %v912, 12
        %v958 = vpop.permute.xlu0 %957
        %959 = vrot.lane.b32.xlu0 %v913, 12
        %v960 = vpop.permute.xlu0 %959
        %961 = vrot.lane.b32.xlu0 %v914, 12
        %v962 = vpop.permute.xlu0 %961
        %vm979 = vcmask 130144
        %980 = vst.msk [vmem:[#allocation5] sm:$0xff] %vm979, %v932
        %981 = vst.msk [vmem:[#allocation5 + $0x8] sm:$0xff] %vm979, %v934
        %982 = vst.msk [vmem:[#allocation5 + $0x10] sm:$0xff] %vm979, %v936
        %983 = vst.msk [vmem:[#allocation5 + $0x18] sm:$0xff] %vm979, %v938
        %984 = vst.msk [vmem:[#allocation5 + $0x20] sm:$0xff] %vm979, %v940
        %985 = vst.msk [vmem:[#allocation5 + $0x28] sm:$0xff] %vm979, %v942
        %986 = vst.msk [vmem:[#allocation5 + $0x30] sm:$0xff] %vm979, %v944
        %987 = vst.msk [vmem:[#allocation5 + $0x38] sm:$0xff] %vm979, %v946
        %988 = vst.msk [vmem:[#allocation5 + $0x40] sm:$0xff] %vm979, %v948
        %989 = vst.msk [vmem:[#allocation5 + $0x48] sm:$0xff] %vm979, %v950
        %990 = vst.msk [vmem:[#allocation5 + $0x50] sm:$0xff] %vm979, %v952
        %991 = vst.msk [vmem:[#allocation5 + $0x58] sm:$0xff] %vm979, %v954
        %992 = vst.msk [vmem:[#allocation5 + $0x60] sm:$0xff] %vm979, %v956
        %993 = vst.msk [vmem:[#allocation5 + $0x68] sm:$0xff] %vm979, %v958
        %994 = vst.msk [vmem:[#allocation5 + $0x70] sm:$0xff] %vm979, %v960
        %995 = vst.msk [vmem:[#allocation5 + $0x78] sm:$0xff] %vm979, %v962
        %v996 = vld [vmem:[%s399 + $0x1] sm:$0xff]
        %v997 = vld [vmem:[%s399 + $0x11] sm:$0xff]
        %v998 = vld [vmem:[%s399 + $0x21] sm:$0xff]
        %v999 = vld [vmem:[%s399 + $0x31] sm:$0xff]
        %v1000 = vld [vmem:[%s399 + $0x41] sm:$0xff]
        %v1001 = vld [vmem:[%s399 + $0x51] sm:$0xff]
        %v1002 = vld [vmem:[%s399 + $0x61] sm:$0xff]
        %v1003 = vld [vmem:[%s399 + $0x71] sm:$0xff]
        %v1004 = vld [vmem:[%s399 + $0x81] sm:$0xff]
        %v1005 = vld [vmem:[%s399 + $0x91] sm:$0xff]
        %v1006 = vld [vmem:[%s399 + $0xa1] sm:$0xff]
        %v1007 = vld [vmem:[%s399 + $0xb1] sm:$0xff]
        %v1008 = vld [vmem:[%s399 + $0xc1] sm:$0xff]
        %v1009 = vld [vmem:[%s399 + $0xd1] sm:$0xff]
        %v1010 = vld [vmem:[%s399 + $0xe1] sm:$0xff]
        %v1011 = vld [vmem:[%s399 + $0xf1] sm:$0xff]
        %1028 = vrot.lane.b32.xlu0 %v996, 12
        %v1029 = vpop.permute.xlu0 %1028
        %1030 = vrot.lane.b32.xlu0 %v997, 12
        %v1031 = vpop.permute.xlu0 %1030
        %1032 = vrot.lane.b32.xlu0 %v998, 12
        %v1033 = vpop.permute.xlu0 %1032
        %1034 = vrot.lane.b32.xlu0 %v999, 12
        %v1035 = vpop.permute.xlu0 %1034
        %1036 = vrot.lane.b32.xlu0 %v1000, 12
        %v1037 = vpop.permute.xlu0 %1036
        %1038 = vrot.lane.b32.xlu0 %v1001, 12
        %v1039 = vpop.permute.xlu0 %1038
        %1040 = vrot.lane.b32.xlu0 %v1002, 12
        %v1041 = vpop.permute.xlu0 %1040
        %1042 = vrot.lane.b32.xlu0 %v1003, 12
        %v1043 = vpop.permute.xlu0 %1042
        %1044 = vrot.lane.b32.xlu0 %v1004, 12
        %v1045 = vpop.permute.xlu0 %1044
        %1046 = vrot.lane.b32.xlu0 %v1005, 12
        %v1047 = vpop.permute.xlu0 %1046
        %1048 = vrot.lane.b32.xlu0 %v1006, 12
        %v1049 = vpop.permute.xlu0 %1048
        %1050 = vrot.lane.b32.xlu0 %v1007, 12
        %v1051 = vpop.permute.xlu0 %1050
        %1052 = vrot.lane.b32.xlu0 %v1008, 12
        %v1053 = vpop.permute.xlu0 %1052
        %1054 = vrot.lane.b32.xlu0 %v1009, 12
        %v1055 = vpop.permute.xlu0 %1054
        %1056 = vrot.lane.b32.xlu0 %v1010, 12
        %v1057 = vpop.permute.xlu0 %1056
        %1058 = vrot.lane.b32.xlu0 %v1011, 12
        %v1059 = vpop.permute.xlu0 %1058
        %1076 = vst.msk [vmem:[#allocation5 + $0x80] sm:$0xff] %vm979, %v1029
        %1077 = vst.msk [vmem:[#allocation5 + $0x88] sm:$0xff] %vm979, %v1031
        %1078 = vst.msk [vmem:[#allocation5 + $0x90] sm:$0xff] %vm979, %v1033
        %1079 = vst.msk [vmem:[#allocation5 + $0x98] sm:$0xff] %vm979, %v1035
        %1080 = vst.msk [vmem:[#allocation5 + $0xa0] sm:$0xff] %vm979, %v1037
        %1081 = vst.msk [vmem:[#allocation5 + $0xa8] sm:$0xff] %vm979, %v1039
        %1082 = vst.msk [vmem:[#allocation5 + $0xb0] sm:$0xff] %vm979, %v1041
        %1083 = vst.msk [vmem:[#allocation5 + $0xb8] sm:$0xff] %vm979, %v1043
        %1084 = vst.msk [vmem:[#allocation5 + $0xc0] sm:$0xff] %vm979, %v1045
        %1085 = vst.msk [vmem:[#allocation5 + $0xc8] sm:$0xff] %vm979, %v1047
        %1086 = vst.msk [vmem:[#allocation5 + $0xd0] sm:$0xff] %vm979, %v1049
        %1087 = vst.msk [vmem:[#allocation5 + $0xd8] sm:$0xff] %vm979, %v1051
        %1088 = vst.msk [vmem:[#allocation5 + $0xe0] sm:$0xff] %vm979, %v1053
        %1089 = vst.msk [vmem:[#allocation5 + $0xe8] sm:$0xff] %vm979, %v1055
        %1090 = vst.msk [vmem:[#allocation5 + $0xf0] sm:$0xff] %vm979, %v1057
        %1091 = vst.msk [vmem:[#allocation5 + $0xf8] sm:$0xff] %vm979, %v1059
        %v1092 = vld [vmem:[%s399 + $0x1] sm:$0xff]
        %v1093 = vld [vmem:[%s399 + $0x11] sm:$0xff]
        %v1094 = vld [vmem:[%s399 + $0x21] sm:$0xff]
        %v1095 = vld [vmem:[%s399 + $0x31] sm:$0xff]
        %v1096 = vld [vmem:[%s399 + $0x41] sm:$0xff]
        %v1097 = vld [vmem:[%s399 + $0x51] sm:$0xff]
        %v1098 = vld [vmem:[%s399 + $0x61] sm:$0xff]
        %v1099 = vld [vmem:[%s399 + $0x71] sm:$0xff]
        %v1100 = vld [vmem:[%s399 + $0x81] sm:$0xff]
        %v1101 = vld [vmem:[%s399 + $0x91] sm:$0xff]
        %v1102 = vld [vmem:[%s399 + $0xa1] sm:$0xff]
        %v1103 = vld [vmem:[%s399 + $0xb1] sm:$0xff]
        %v1104 = vld [vmem:[%s399 + $0xc1] sm:$0xff]
        %v1105 = vld [vmem:[%s399 + $0xd1] sm:$0xff]
        %v1106 = vld [vmem:[%s399 + $0xe1] sm:$0xff]
        %v1107 = vld [vmem:[%s399 + $0xf1] sm:$0xff]
        %1124 = vrot.lane.b32.xlu0 %v1092, 16
        %v1125 = vpop.permute.xlu0 %1124
        %1126 = vrot.lane.b32.xlu0 %v1093, 16
        %v1127 = vpop.permute.xlu0 %1126
        %1128 = vrot.lane.b32.xlu0 %v1094, 16
        %v1129 = vpop.permute.xlu0 %1128
        %1130 = vrot.lane.b32.xlu0 %v1095, 16
        %v1131 = vpop.permute.xlu0 %1130
        %1132 = vrot.lane.b32.xlu0 %v1096, 16
        %v1133 = vpop.permute.xlu0 %1132
        %1134 = vrot.lane.b32.xlu0 %v1097, 16
        %v1135 = vpop.permute.xlu0 %1134
        %1136 = vrot.lane.b32.xlu0 %v1098, 16
        %v1137 = vpop.permute.xlu0 %1136
        %1138 = vrot.lane.b32.xlu0 %v1099, 16
        %v1139 = vpop.permute.xlu0 %1138
        %1140 = vrot.lane.b32.xlu0 %v1100, 16
        %v1141 = vpop.permute.xlu0 %1140
        %1142 = vrot.lane.b32.xlu0 %v1101, 16
        %v1143 = vpop.permute.xlu0 %1142
        %1144 = vrot.lane.b32.xlu0 %v1102, 16
        %v1145 = vpop.permute.xlu0 %1144
        %1146 = vrot.lane.b32.xlu0 %v1103, 16
        %v1147 = vpop.permute.xlu0 %1146
        %1148 = vrot.lane.b32.xlu0 %v1104, 16
        %v1149 = vpop.permute.xlu0 %1148
        %1150 = vrot.lane.b32.xlu0 %v1105, 16
        %v1151 = vpop.permute.xlu0 %1150
        %1152 = vrot.lane.b32.xlu0 %v1106, 16
        %v1153 = vpop.permute.xlu0 %1152
        %1154 = vrot.lane.b32.xlu0 %v1107, 16
        %v1155 = vpop.permute.xlu0 %1154
        %vm1172 = vcmask 162944
        %1173 = vst.msk [vmem:[#allocation5] sm:$0xff] %vm1172, %v1125
        %1174 = vst.msk [vmem:[#allocation5 + $0x8] sm:$0xff] %vm1172, %v1127
        %1175 = vst.msk [vmem:[#allocation5 + $0x10] sm:$0xff] %vm1172, %v1129
        %1176 = vst.msk [vmem:[#allocation5 + $0x18] sm:$0xff] %vm1172, %v1131
        %1177 = vst.msk [vmem:[#allocation5 + $0x20] sm:$0xff] %vm1172, %v1133
        %1178 = vst.msk [vmem:[#allocation5 + $0x28] sm:$0xff] %vm1172, %v1135
        %1179 = vst.msk [vmem:[#allocation5 + $0x30] sm:$0xff] %vm1172, %v1137
        %1180 = vst.msk [vmem:[#allocation5 + $0x38] sm:$0xff] %vm1172, %v1139
        %1181 = vst.msk [vmem:[#allocation5 + $0x40] sm:$0xff] %vm1172, %v1141
        %1182 = vst.msk [vmem:[#allocation5 + $0x48] sm:$0xff] %vm1172, %v1143
        %1183 = vst.msk [vmem:[#allocation5 + $0x50] sm:$0xff] %vm1172, %v1145
        %1184 = vst.msk [vmem:[#allocation5 + $0x58] sm:$0xff] %vm1172, %v1147
        %1185 = vst.msk [vmem:[#allocation5 + $0x60] sm:$0xff] %vm1172, %v1149
        %1186 = vst.msk [vmem:[#allocation5 + $0x68] sm:$0xff] %vm1172, %v1151
        %1187 = vst.msk [vmem:[#allocation5 + $0x70] sm:$0xff] %vm1172, %v1153
        %1188 = vst.msk [vmem:[#allocation5 + $0x78] sm:$0xff] %vm1172, %v1155
        %v1189 = vld [vmem:[%s432 + $0x1] sm:$0xff]
        %v1190 = vld [vmem:[%s432 + $0x11] sm:$0xff]
        %v1191 = vld [vmem:[%s432 + $0x21] sm:$0xff]
        %v1192 = vld [vmem:[%s432 + $0x31] sm:$0xff]
        %v1193 = vld [vmem:[%s432 + $0x41] sm:$0xff]
        %v1194 = vld [vmem:[%s432 + $0x51] sm:$0xff]
        %v1195 = vld [vmem:[%s432 + $0x61] sm:$0xff]
        %v1196 = vld [vmem:[%s432 + $0x71] sm:$0xff]
        %v1197 = vld [vmem:[%s432 + $0x81] sm:$0xff]
        %v1198 = vld [vmem:[%s432 + $0x91] sm:$0xff]
        %v1199 = vld [vmem:[%s432 + $0xa1] sm:$0xff]
        %v1200 = vld [vmem:[%s432 + $0xb1] sm:$0xff]
        %v1201 = vld [vmem:[%s432 + $0xc1] sm:$0xff]
        %v1202 = vld [vmem:[%s432 + $0xd1] sm:$0xff]
        %v1203 = vld [vmem:[%s432 + $0xe1] sm:$0xff]
        %v1204 = vld [vmem:[%s432 + $0xf1] sm:$0xff]
        %1221 = vrot.lane.b32.xlu0 %v1189, 16
        %v1222 = vpop.permute.xlu0 %1221
        %1223 = vrot.lane.b32.xlu0 %v1190, 16
        %v1224 = vpop.permute.xlu0 %1223
        %1225 = vrot.lane.b32.xlu0 %v1191, 16
        %v1226 = vpop.permute.xlu0 %1225
        %1227 = vrot.lane.b32.xlu0 %v1192, 16
        %v1228 = vpop.permute.xlu0 %1227
        %1229 = vrot.lane.b32.xlu0 %v1193, 16
        %v1230 = vpop.permute.xlu0 %1229
        %1231 = vrot.lane.b32.xlu0 %v1194, 16
        %v1232 = vpop.permute.xlu0 %1231
        %1233 = vrot.lane.b32.xlu0 %v1195, 16
        %v1234 = vpop.permute.xlu0 %1233
        %1235 = vrot.lane.b32.xlu0 %v1196, 16
        %v1236 = vpop.permute.xlu0 %1235
        %1237 = vrot.lane.b32.xlu0 %v1197, 16
        %v1238 = vpop.permute.xlu0 %1237
        %1239 = vrot.lane.b32.xlu0 %v1198, 16
        %v1240 = vpop.permute.xlu0 %1239
        %1241 = vrot.lane.b32.xlu0 %v1199, 16
        %v1242 = vpop.permute.xlu0 %1241
        %1243 = vrot.lane.b32.xlu0 %v1200, 16
        %v1244 = vpop.permute.xlu0 %1243
        %1245 = vrot.lane.b32.xlu0 %v1201, 16
        %v1246 = vpop.permute.xlu0 %1245
        %1247 = vrot.lane.b32.xlu0 %v1202, 16
        %v1248 = vpop.permute.xlu0 %1247
        %1249 = vrot.lane.b32.xlu0 %v1203, 16
        %v1250 = vpop.permute.xlu0 %1249
        %1251 = vrot.lane.b32.xlu0 %v1204, 16
        %v1252 = vpop.permute.xlu0 %1251
        %1269 = vst.msk [vmem:[#allocation5 + $0x80] sm:$0xff] %vm1172, %v1222
        %1270 = vst.msk [vmem:[#allocation5 + $0x88] sm:$0xff] %vm1172, %v1224
        %1271 = vst.msk [vmem:[#allocation5 + $0x90] sm:$0xff] %vm1172, %v1226
        %1272 = vst.msk [vmem:[#allocation5 + $0x98] sm:$0xff] %vm1172, %v1228
        %1273 = vst.msk [vmem:[#allocation5 + $0xa0] sm:$0xff] %vm1172, %v1230
        %1274 = vst.msk [vmem:[#allocation5 + $0xa8] sm:$0xff] %vm1172, %v1232
        %1275 = vst.msk [vmem:[#allocation5 + $0xb0] sm:$0xff] %vm1172, %v1234
        %1276 = vst.msk [vmem:[#allocation5 + $0xb8] sm:$0xff] %vm1172, %v1236
        %1277 = vst.msk [vmem:[#allocation5 + $0xc0] sm:$0xff] %vm1172, %v1238
        %1278 = vst.msk [vmem:[#allocation5 + $0xc8] sm:$0xff] %vm1172, %v1240
        %1279 = vst.msk [vmem:[#allocation5 + $0xd0] sm:$0xff] %vm1172, %v1242
        %1280 = vst.msk [vmem:[#allocation5 + $0xd8] sm:$0xff] %vm1172, %v1244
        %1281 = vst.msk [vmem:[#allocation5 + $0xe0] sm:$0xff] %vm1172, %v1246
        %1282 = vst.msk [vmem:[#allocation5 + $0xe8] sm:$0xff] %vm1172, %v1248
        %1283 = vst.msk [vmem:[#allocation5 + $0xf0] sm:$0xff] %vm1172, %v1250
        %1284 = vst.msk [vmem:[#allocation5 + $0xf8] sm:$0xff] %vm1172, %v1252
        %v1285 = vld [vmem:[%s432 + $0x1] sm:$0xff]
        %v1286 = vld [vmem:[%s432 + $0x11] sm:$0xff]
        %v1287 = vld [vmem:[%s432 + $0x21] sm:$0xff]
        %v1288 = vld [vmem:[%s432 + $0x31] sm:$0xff]
        %v1289 = vld [vmem:[%s432 + $0x41] sm:$0xff]
        %v1290 = vld [vmem:[%s432 + $0x51] sm:$0xff]
        %v1291 = vld [vmem:[%s432 + $0x61] sm:$0xff]
        %v1292 = vld [vmem:[%s432 + $0x71] sm:$0xff]
        %v1293 = vld [vmem:[%s432 + $0x81] sm:$0xff]
        %v1294 = vld [vmem:[%s432 + $0x91] sm:$0xff]
        %v1295 = vld [vmem:[%s432 + $0xa1] sm:$0xff]
        %v1296 = vld [vmem:[%s432 + $0xb1] sm:$0xff]
        %v1297 = vld [vmem:[%s432 + $0xc1] sm:$0xff]
        %v1298 = vld [vmem:[%s432 + $0xd1] sm:$0xff]
        %v1299 = vld [vmem:[%s432 + $0xe1] sm:$0xff]
        %v1300 = vld [vmem:[%s432 + $0xf1] sm:$0xff]
        %1317 = vrot.lane.b32.xlu0 %v1285, 20
        %v1318 = vpop.permute.xlu0 %1317
        %1319 = vrot.lane.b32.xlu0 %v1286, 20
        %v1320 = vpop.permute.xlu0 %1319
        %1321 = vrot.lane.b32.xlu0 %v1287, 20
        %v1322 = vpop.permute.xlu0 %1321
        %1323 = vrot.lane.b32.xlu0 %v1288, 20
        %v1324 = vpop.permute.xlu0 %1323
        %1325 = vrot.lane.b32.xlu0 %v1289, 20
        %v1326 = vpop.permute.xlu0 %1325
        %1327 = vrot.lane.b32.xlu0 %v1290, 20
        %v1328 = vpop.permute.xlu0 %1327
        %1329 = vrot.lane.b32.xlu0 %v1291, 20
        %v1330 = vpop.permute.xlu0 %1329
        %1331 = vrot.lane.b32.xlu0 %v1292, 20
        %v1332 = vpop.permute.xlu0 %1331
        %1333 = vrot.lane.b32.xlu0 %v1293, 20
        %v1334 = vpop.permute.xlu0 %1333
        %1335 = vrot.lane.b32.xlu0 %v1294, 20
        %v1336 = vpop.permute.xlu0 %1335
        %1337 = vrot.lane.b32.xlu0 %v1295, 20
        %v1338 = vpop.permute.xlu0 %1337
        %1339 = vrot.lane.b32.xlu0 %v1296, 20
        %v1340 = vpop.permute.xlu0 %1339
        %1341 = vrot.lane.b32.xlu0 %v1297, 20
        %v1342 = vpop.permute.xlu0 %1341
        %1343 = vrot.lane.b32.xlu0 %v1298, 20
        %v1344 = vpop.permute.xlu0 %1343
        %1345 = vrot.lane.b32.xlu0 %v1299, 20
        %v1346 = vpop.permute.xlu0 %1345
        %1347 = vrot.lane.b32.xlu0 %v1300, 20
        %v1348 = vpop.permute.xlu0 %1347
        %vm1365 = vcmask 195744
        %1366 = vst.msk [vmem:[#allocation5] sm:$0xff] %vm1365, %v1318
        %1367 = vst.msk [vmem:[#allocation5 + $0x8] sm:$0xff] %vm1365, %v1320
        %1368 = vst.msk [vmem:[#allocation5 + $0x10] sm:$0xff] %vm1365, %v1322
        %1369 = vst.msk [vmem:[#allocation5 + $0x18] sm:$0xff] %vm1365, %v1324
        %1370 = vst.msk [vmem:[#allocation5 + $0x20] sm:$0xff] %vm1365, %v1326
        %1371 = vst.msk [vmem:[#allocation5 + $0x28] sm:$0xff] %vm1365, %v1328
        %1372 = vst.msk [vmem:[#allocation5 + $0x30] sm:$0xff] %vm1365, %v1330
        %1373 = vst.msk [vmem:[#allocation5 + $0x38] sm:$0xff] %vm1365, %v1332
        %1374 = vst.msk [vmem:[#allocation5 + $0x40] sm:$0xff] %vm1365, %v1334
        %1375 = vst.msk [vmem:[#allocation5 + $0x48] sm:$0xff] %vm1365, %v1336
        %1376 = vst.msk [vmem:[#allocation5 + $0x50] sm:$0xff] %vm1365, %v1338
        %1377 = vst.msk [vmem:[#allocation5 + $0x58] sm:$0xff] %vm1365, %v1340
        %1378 = vst.msk [vmem:[#allocation5 + $0x60] sm:$0xff] %vm1365, %v1342
        %1379 = vst.msk [vmem:[#allocation5 + $0x68] sm:$0xff] %vm1365, %v1344
        %1380 = vst.msk [vmem:[#allocation5 + $0x70] sm:$0xff] %vm1365, %v1346
        %1381 = vst.msk [vmem:[#allocation5 + $0x78] sm:$0xff] %vm1365, %v1348
        %v1382 = vld [vmem:[%s399 + $0x2] sm:$0xff]
        %v1383 = vld [vmem:[%s399 + $0x12] sm:$0xff]
        %v1384 = vld [vmem:[%s399 + $0x22] sm:$0xff]
        %v1385 = vld [vmem:[%s399 + $0x32] sm:$0xff]
        %v1386 = vld [vmem:[%s399 + $0x42] sm:$0xff]
        %v1387 = vld [vmem:[%s399 + $0x52] sm:$0xff]
        %v1388 = vld [vmem:[%s399 + $0x62] sm:$0xff]
        %v1389 = vld [vmem:[%s399 + $0x72] sm:$0xff]
        %v1390 = vld [vmem:[%s399 + $0x82] sm:$0xff]
        %v1391 = vld [vmem:[%s399 + $0x92] sm:$0xff]
        %v1392 = vld [vmem:[%s399 + $0xa2] sm:$0xff]
        %v1393 = vld [vmem:[%s399 + $0xb2] sm:$0xff]
        %v1394 = vld [vmem:[%s399 + $0xc2] sm:$0xff]
        %v1395 = vld [vmem:[%s399 + $0xd2] sm:$0xff]
        %v1396 = vld [vmem:[%s399 + $0xe2] sm:$0xff]
        %v1397 = vld [vmem:[%s399 + $0xf2] sm:$0xff]
        %1414 = vrot.lane.b32.xlu0 %v1382, 20
        %v1415 = vpop.permute.xlu0 %1414
        %1416 = vrot.lane.b32.xlu0 %v1383, 20
        %v1417 = vpop.permute.xlu0 %1416
        %1418 = vrot.lane.b32.xlu0 %v1384, 20
        %v1419 = vpop.permute.xlu0 %1418
        %1420 = vrot.lane.b32.xlu0 %v1385, 20
        %v1421 = vpop.permute.xlu0 %1420
        %1422 = vrot.lane.b32.xlu0 %v1386, 20
        %v1423 = vpop.permute.xlu0 %1422
        %1424 = vrot.lane.b32.xlu0 %v1387, 20
        %v1425 = vpop.permute.xlu0 %1424
        %1426 = vrot.lane.b32.xlu0 %v1388, 20
        %v1427 = vpop.permute.xlu0 %1426
        %1428 = vrot.lane.b32.xlu0 %v1389, 20
        %v1429 = vpop.permute.xlu0 %1428
        %1430 = vrot.lane.b32.xlu0 %v1390, 20
        %v1431 = vpop.permute.xlu0 %1430
        %1432 = vrot.lane.b32.xlu0 %v1391, 20
        %v1433 = vpop.permute.xlu0 %1432
        %1434 = vrot.lane.b32.xlu0 %v1392, 20
        %v1435 = vpop.permute.xlu0 %1434
        %1436 = vrot.lane.b32.xlu0 %v1393, 20
        %v1437 = vpop.permute.xlu0 %1436
        %1438 = vrot.lane.b32.xlu0 %v1394, 20
        %v1439 = vpop.permute.xlu0 %1438
        %1440 = vrot.lane.b32.xlu0 %v1395, 20
        %v1441 = vpop.permute.xlu0 %1440
        %1442 = vrot.lane.b32.xlu0 %v1396, 20
        %v1443 = vpop.permute.xlu0 %1442
        %1444 = vrot.lane.b32.xlu0 %v1397, 20
        %v1445 = vpop.permute.xlu0 %1444
        %1462 = vst.msk [vmem:[#allocation5 + $0x80] sm:$0xff] %vm1365, %v1415
        %1463 = vst.msk [vmem:[#allocation5 + $0x88] sm:$0xff] %vm1365, %v1417
        %1464 = vst.msk [vmem:[#allocation5 + $0x90] sm:$0xff] %vm1365, %v1419
        %1465 = vst.msk [vmem:[#allocation5 + $0x98] sm:$0xff] %vm1365, %v1421
        %1466 = vst.msk [vmem:[#allocation5 + $0xa0] sm:$0xff] %vm1365, %v1423
        %1467 = vst.msk [vmem:[#allocation5 + $0xa8] sm:$0xff] %vm1365, %v1425
        %1468 = vst.msk [vmem:[#allocation5 + $0xb0] sm:$0xff] %vm1365, %v1427
        %1469 = vst.msk [vmem:[#allocation5 + $0xb8] sm:$0xff] %vm1365, %v1429
        %1470 = vst.msk [vmem:[#allocation5 + $0xc0] sm:$0xff] %vm1365, %v1431
        %1471 = vst.msk [vmem:[#allocation5 + $0xc8] sm:$0xff] %vm1365, %v1433
        %1472 = vst.msk [vmem:[#allocation5 + $0xd0] sm:$0xff] %vm1365, %v1435
        %1473 = vst.msk [vmem:[#allocation5 + $0xd8] sm:$0xff] %vm1365, %v1437
        %1474 = vst.msk [vmem:[#allocation5 + $0xe0] sm:$0xff] %vm1365, %v1439
        %1475 = vst.msk [vmem:[#allocation5 + $0xe8] sm:$0xff] %vm1365, %v1441
        %1476 = vst.msk [vmem:[#allocation5 + $0xf0] sm:$0xff] %vm1365, %v1443
        %1477 = vst.msk [vmem:[#allocation5 + $0xf8] sm:$0xff] %vm1365, %v1445
        %s1478 = scalar_lea.vmem [#allocation3], 32
        %v1479 = vld [vmem:[%s1478] sm:$0xff]
        %v1480 = vld [vmem:[%s1478 + $0x10] sm:$0xff]
        %v1481 = vld [vmem:[%s1478 + $0x20] sm:$0xff]
        %v1482 = vld [vmem:[%s1478 + $0x30] sm:$0xff]
        %v1483 = vld [vmem:[%s1478 + $0x40] sm:$0xff]
        %v1484 = vld [vmem:[%s1478 + $0x50] sm:$0xff]
        %v1485 = vld [vmem:[%s1478 + $0x60] sm:$0xff]
        %v1486 = vld [vmem:[%s1478 + $0x70] sm:$0xff]
        %v1487 = vld [vmem:[%s1478 + $0x80] sm:$0xff]
        %v1488 = vld [vmem:[%s1478 + $0x90] sm:$0xff]
        %v1489 = vld [vmem:[%s1478 + $0xa0] sm:$0xff]
        %v1490 = vld [vmem:[%s1478 + $0xb0] sm:$0xff]
        %v1491 = vld [vmem:[%s1478 + $0xc0] sm:$0xff]
        %v1492 = vld [vmem:[%s1478 + $0xd0] sm:$0xff]
        %v1493 = vld [vmem:[%s1478 + $0xe0] sm:$0xff]
        %v1494 = vld [vmem:[%s1478 + $0xf0] sm:$0xff]
        %1511 = vrot.lane.b32.xlu0 %v1479, 24
        %v1512 = vpop.permute.xlu0 %1511
        %1513 = vrot.lane.b32.xlu0 %v1480, 24
        %v1514 = vpop.permute.xlu0 %1513
        %1515 = vrot.lane.b32.xlu0 %v1481, 24
        %v1516 = vpop.permute.xlu0 %1515
        %1517 = vrot.lane.b32.xlu0 %v1482, 24
        %v1518 = vpop.permute.xlu0 %1517
        %1519 = vrot.lane.b32.xlu0 %v1483, 24
        %v1520 = vpop.permute.xlu0 %1519
        %1521 = vrot.lane.b32.xlu0 %v1484, 24
        %v1522 = vpop.permute.xlu0 %1521
        %1523 = vrot.lane.b32.xlu0 %v1485, 24
        %v1524 = vpop.permute.xlu0 %1523
        %1525 = vrot.lane.b32.xlu0 %v1486, 24
        %v1526 = vpop.permute.xlu0 %1525
        %1527 = vrot.lane.b32.xlu0 %v1487, 24
        %v1528 = vpop.permute.xlu0 %1527
        %1529 = vrot.lane.b32.xlu0 %v1488, 24
        %v1530 = vpop.permute.xlu0 %1529
        %1531 = vrot.lane.b32.xlu0 %v1489, 24
        %v1532 = vpop.permute.xlu0 %1531
        %1533 = vrot.lane.b32.xlu0 %v1490, 24
        %v1534 = vpop.permute.xlu0 %1533
        %1535 = vrot.lane.b32.xlu0 %v1491, 24
        %v1536 = vpop.permute.xlu0 %1535
        %1537 = vrot.lane.b32.xlu0 %v1492, 24
        %v1538 = vpop.permute.xlu0 %1537
        %1539 = vrot.lane.b32.xlu0 %v1493, 24
        %v1540 = vpop.permute.xlu0 %1539
        %1541 = vrot.lane.b32.xlu0 %v1494, 24
        %v1542 = vpop.permute.xlu0 %1541
        %vm1559 = vcmask 228544
        %1560 = vst.msk [vmem:[#allocation5] sm:$0xff] %vm1559, %v1512
        %1561 = vst.msk [vmem:[#allocation5 + $0x8] sm:$0xff] %vm1559, %v1514
        %1562 = vst.msk [vmem:[#allocation5 + $0x10] sm:$0xff] %vm1559, %v1516
        %1563 = vst.msk [vmem:[#allocation5 + $0x18] sm:$0xff] %vm1559, %v1518
        %1564 = vst.msk [vmem:[#allocation5 + $0x20] sm:$0xff] %vm1559, %v1520
        %1565 = vst.msk [vmem:[#allocation5 + $0x28] sm:$0xff] %vm1559, %v1522
        %1566 = vst.msk [vmem:[#allocation5 + $0x30] sm:$0xff] %vm1559, %v1524
        %1567 = vst.msk [vmem:[#allocation5 + $0x38] sm:$0xff] %vm1559, %v1526
        %1568 = vst.msk [vmem:[#allocation5 + $0x40] sm:$0xff] %vm1559, %v1528
        %1569 = vst.msk [vmem:[#allocation5 + $0x48] sm:$0xff] %vm1559, %v1530
        %1570 = vst.msk [vmem:[#allocation5 + $0x50] sm:$0xff] %vm1559, %v1532
        %1571 = vst.msk [vmem:[#allocation5 + $0x58] sm:$0xff] %vm1559, %v1534
        %1572 = vst.msk [vmem:[#allocation5 + $0x60] sm:$0xff] %vm1559, %v1536
        %1573 = vst.msk [vmem:[#allocation5 + $0x68] sm:$0xff] %vm1559, %v1538
        %1574 = vst.msk [vmem:[#allocation5 + $0x70] sm:$0xff] %vm1559, %v1540
        %1575 = vst.msk [vmem:[#allocation5 + $0x78] sm:$0xff] %vm1559, %v1542
        %s1576 = scalar_lea.vmem [#allocation2], 32
        %v1577 = vld [vmem:[%s1576 + $0x1] sm:$0xff]
        %v1578 = vld [vmem:[%s1576 + $0x11] sm:$0xff]
        %v1579 = vld [vmem:[%s1576 + $0x21] sm:$0xff]
        %v1580 = vld [vmem:[%s1576 + $0x31] sm:$0xff]
        %v1581 = vld [vmem:[%s1576 + $0x41] sm:$0xff]
        %v1582 = vld [vmem:[%s1576 + $0x51] sm:$0xff]
        %v1583 = vld [vmem:[%s1576 + $0x61] sm:$0xff]
        %v1584 = vld [vmem:[%s1576 + $0x71] sm:$0xff]
        %v1585 = vld [vmem:[%s1576 + $0x81] sm:$0xff]
        %v1586 = vld [vmem:[%s1576 + $0x91] sm:$0xff]
        %v1587 = vld [vmem:[%s1576 + $0xa1] sm:$0xff]
        %v1588 = vld [vmem:[%s1576 + $0xb1] sm:$0xff]
        %v1589 = vld [vmem:[%s1576 + $0xc1] sm:$0xff]
        %v1590 = vld [vmem:[%s1576 + $0xd1] sm:$0xff]
        %v1591 = vld [vmem:[%s1576 + $0xe1] sm:$0xff]
        %v1592 = vld [vmem:[%s1576 + $0xf1] sm:$0xff]
        %1609 = vrot.lane.b32.xlu0 %v1577, 24
        %v1610 = vpop.permute.xlu0 %1609
        %1611 = vrot.lane.b32.xlu0 %v1578, 24
        %v1612 = vpop.permute.xlu0 %1611
        %1613 = vrot.lane.b32.xlu0 %v1579, 24
        %v1614 = vpop.permute.xlu0 %1613
        %1615 = vrot.lane.b32.xlu0 %v1580, 24
        %v1616 = vpop.permute.xlu0 %1615
        %1617 = vrot.lane.b32.xlu0 %v1581, 24
        %v1618 = vpop.permute.xlu0 %1617
        %1619 = vrot.lane.b32.xlu0 %v1582, 24
        %v1620 = vpop.permute.xlu0 %1619
        %1621 = vrot.lane.b32.xlu0 %v1583, 24
        %v1622 = vpop.permute.xlu0 %1621
        %1623 = vrot.lane.b32.xlu0 %v1584, 24
        %v1624 = vpop.permute.xlu0 %1623
        %1625 = vrot.lane.b32.xlu0 %v1585, 24
        %v1626 = vpop.permute.xlu0 %1625
        %1627 = vrot.lane.b32.xlu0 %v1586, 24
        %v1628 = vpop.permute.xlu0 %1627
        %1629 = vrot.lane.b32.xlu0 %v1587, 24
        %v1630 = vpop.permute.xlu0 %1629
        %1631 = vrot.lane.b32.xlu0 %v1588, 24
        %v1632 = vpop.permute.xlu0 %1631
        %1633 = vrot.lane.b32.xlu0 %v1589, 24
        %v1634 = vpop.permute.xlu0 %1633
        %1635 = vrot.lane.b32.xlu0 %v1590, 24
        %v1636 = vpop.permute.xlu0 %1635
        %1637 = vrot.lane.b32.xlu0 %v1591, 24
        %v1638 = vpop.permute.xlu0 %1637
        %1639 = vrot.lane.b32.xlu0 %v1592, 24
        %v1640 = vpop.permute.xlu0 %1639
        %1657 = vst.msk [vmem:[#allocation5 + $0x80] sm:$0xff] %vm1559, %v1610
        %1658 = vst.msk [vmem:[#allocation5 + $0x88] sm:$0xff] %vm1559, %v1612
        %1659 = vst.msk [vmem:[#allocation5 + $0x90] sm:$0xff] %vm1559, %v1614
        %1660 = vst.msk [vmem:[#allocation5 + $0x98] sm:$0xff] %vm1559, %v1616
        %1661 = vst.msk [vmem:[#allocation5 + $0xa0] sm:$0xff] %vm1559, %v1618
        %1662 = vst.msk [vmem:[#allocation5 + $0xa8] sm:$0xff] %vm1559, %v1620
        %1663 = vst.msk [vmem:[#allocation5 + $0xb0] sm:$0xff] %vm1559, %v1622
        %1664 = vst.msk [vmem:[#allocation5 + $0xb8] sm:$0xff] %vm1559, %v1624
        %1665 = vst.msk [vmem:[#allocation5 + $0xc0] sm:$0xff] %vm1559, %v1626
        %1666 = vst.msk [vmem:[#allocation5 + $0xc8] sm:$0xff] %vm1559, %v1628
        %1667 = vst.msk [vmem:[#allocation5 + $0xd0] sm:$0xff] %vm1559, %v1630
        %1668 = vst.msk [vmem:[#allocation5 + $0xd8] sm:$0xff] %vm1559, %v1632
        %1669 = vst.msk [vmem:[#allocation5 + $0xe0] sm:$0xff] %vm1559, %v1634
        %1670 = vst.msk [vmem:[#allocation5 + $0xe8] sm:$0xff] %vm1559, %v1636
        %1671 = vst.msk [vmem:[#allocation5 + $0xf0] sm:$0xff] %vm1559, %v1638
        %1672 = vst.msk [vmem:[#allocation5 + $0xf8] sm:$0xff] %vm1559, %v1640
        %v1673 = vld [vmem:[%s1576 + $0x1] sm:$0xff]
        %v1674 = vld [vmem:[%s1576 + $0x11] sm:$0xff]
        %v1675 = vld [vmem:[%s1576 + $0x21] sm:$0xff]
        %v1676 = vld [vmem:[%s1576 + $0x31] sm:$0xff]
        %v1677 = vld [vmem:[%s1576 + $0x41] sm:$0xff]
        %v1678 = vld [vmem:[%s1576 + $0x51] sm:$0xff]
        %v1679 = vld [vmem:[%s1576 + $0x61] sm:$0xff]
        %v1680 = vld [vmem:[%s1576 + $0x71] sm:$0xff]
        %v1681 = vld [vmem:[%s1576 + $0x81] sm:$0xff]
        %v1682 = vld [vmem:[%s1576 + $0x91] sm:$0xff]
        %v1683 = vld [vmem:[%s1576 + $0xa1] sm:$0xff]
        %v1684 = vld [vmem:[%s1576 + $0xb1] sm:$0xff]
        %v1685 = vld [vmem:[%s1576 + $0xc1] sm:$0xff]
        %v1686 = vld [vmem:[%s1576 + $0xd1] sm:$0xff]
        %v1687 = vld [vmem:[%s1576 + $0xe1] sm:$0xff]
        %v1688 = vld [vmem:[%s1576 + $0xf1] sm:$0xff]
        %1705 = vrot.lane.b32.xlu0 %v1673, 28
        %v1706 = vpop.permute.xlu0 %1705
        %1707 = vrot.lane.b32.xlu0 %v1674, 28
        %v1708 = vpop.permute.xlu0 %1707
        %1709 = vrot.lane.b32.xlu0 %v1675, 28
        %v1710 = vpop.permute.xlu0 %1709
        %1711 = vrot.lane.b32.xlu0 %v1676, 28
        %v1712 = vpop.permute.xlu0 %1711
        %1713 = vrot.lane.b32.xlu0 %v1677, 28
        %v1714 = vpop.permute.xlu0 %1713
        %1715 = vrot.lane.b32.xlu0 %v1678, 28
        %v1716 = vpop.permute.xlu0 %1715
        %1717 = vrot.lane.b32.xlu0 %v1679, 28
        %v1718 = vpop.permute.xlu0 %1717
        %1719 = vrot.lane.b32.xlu0 %v1680, 28
        %v1720 = vpop.permute.xlu0 %1719
        %1721 = vrot.lane.b32.xlu0 %v1681, 28
        %v1722 = vpop.permute.xlu0 %1721
        %1723 = vrot.lane.b32.xlu0 %v1682, 28
        %v1724 = vpop.permute.xlu0 %1723
        %1725 = vrot.lane.b32.xlu0 %v1683, 28
        %v1726 = vpop.permute.xlu0 %1725
        %1727 = vrot.lane.b32.xlu0 %v1684, 28
        %v1728 = vpop.permute.xlu0 %1727
        %1729 = vrot.lane.b32.xlu0 %v1685, 28
        %v1730 = vpop.permute.xlu0 %1729
        %1731 = vrot.lane.b32.xlu0 %v1686, 28
        %v1732 = vpop.permute.xlu0 %1731
        %1733 = vrot.lane.b32.xlu0 %v1687, 28
        %v1734 = vpop.permute.xlu0 %1733
        %1735 = vrot.lane.b32.xlu0 %v1688, 28
        %v1736 = vpop.permute.xlu0 %1735
        %vm1753 = vcmask 261344
        %1754 = vst.msk [vmem:[#allocation5] sm:$0xff] %vm1753, %v1706
        %1755 = vst.msk [vmem:[#allocation5 + $0x8] sm:$0xff] %vm1753, %v1708
        %1756 = vst.msk [vmem:[#allocation5 + $0x10] sm:$0xff] %vm1753, %v1710
        %1757 = vst.msk [vmem:[#allocation5 + $0x18] sm:$0xff] %vm1753, %v1712
        %1758 = vst.msk [vmem:[#allocation5 + $0x20] sm:$0xff] %vm1753, %v1714
        %1759 = vst.msk [vmem:[#allocation5 + $0x28] sm:$0xff] %vm1753, %v1716
        %1760 = vst.msk [vmem:[#allocation5 + $0x30] sm:$0xff] %vm1753, %v1718
        %1761 = vst.msk [vmem:[#allocation5 + $0x38] sm:$0xff] %vm1753, %v1720
        %1762 = vst.msk [vmem:[#allocation5 + $0x40] sm:$0xff] %vm1753, %v1722
        %1763 = vst.msk [vmem:[#allocation5 + $0x48] sm:$0xff] %vm1753, %v1724
        %1764 = vst.msk [vmem:[#allocation5 + $0x50] sm:$0xff] %vm1753, %v1726
        %1765 = vst.msk [vmem:[#allocation5 + $0x58] sm:$0xff] %vm1753, %v1728
        %1766 = vst.msk [vmem:[#allocation5 + $0x60] sm:$0xff] %vm1753, %v1730
        %1767 = vst.msk [vmem:[#allocation5 + $0x68] sm:$0xff] %vm1753, %v1732
        %1768 = vst.msk [vmem:[#allocation5 + $0x70] sm:$0xff] %vm1753, %v1734
        %1769 = vst.msk [vmem:[#allocation5 + $0x78] sm:$0xff] %vm1753, %v1736
        %v1770 = vld [vmem:[%s1478 + $0x1] sm:$0xff]
        %v1771 = vld [vmem:[%s1478 + $0x11] sm:$0xff]
        %v1772 = vld [vmem:[%s1478 + $0x21] sm:$0xff]
        %v1773 = vld [vmem:[%s1478 + $0x31] sm:$0xff]
        %v1774 = vld [vmem:[%s1478 + $0x41] sm:$0xff]
        %v1775 = vld [vmem:[%s1478 + $0x51] sm:$0xff]
        %v1776 = vld [vmem:[%s1478 + $0x61] sm:$0xff]
        %v1777 = vld [vmem:[%s1478 + $0x71] sm:$0xff]
        %v1778 = vld [vmem:[%s1478 + $0x81] sm:$0xff]
        %v1779 = vld [vmem:[%s1478 + $0x91] sm:$0xff]
        %v1780 = vld [vmem:[%s1478 + $0xa1] sm:$0xff]
        %v1781 = vld [vmem:[%s1478 + $0xb1] sm:$0xff]
        %v1782 = vld [vmem:[%s1478 + $0xc1] sm:$0xff]
        %v1783 = vld [vmem:[%s1478 + $0xd1] sm:$0xff]
        %v1784 = vld [vmem:[%s1478 + $0xe1] sm:$0xff]
        %v1785 = vld [vmem:[%s1478 + $0xf1] sm:$0xff]
        %1802 = vrot.lane.b32.xlu0 %v1770, 28
        %v1803 = vpop.permute.xlu0 %1802
        %1804 = vrot.lane.b32.xlu0 %v1771, 28
        %v1805 = vpop.permute.xlu0 %1804
        %1806 = vrot.lane.b32.xlu0 %v1772, 28
        %v1807 = vpop.permute.xlu0 %1806
        %1808 = vrot.lane.b32.xlu0 %v1773, 28
        %v1809 = vpop.permute.xlu0 %1808
        %1810 = vrot.lane.b32.xlu0 %v1774, 28
        %v1811 = vpop.permute.xlu0 %1810
        %1812 = vrot.lane.b32.xlu0 %v1775, 28
        %v1813 = vpop.permute.xlu0 %1812
        %1814 = vrot.lane.b32.xlu0 %v1776, 28
        %v1815 = vpop.permute.xlu0 %1814
        %1816 = vrot.lane.b32.xlu0 %v1777, 28
        %v1817 = vpop.permute.xlu0 %1816
        %1818 = vrot.lane.b32.xlu0 %v1778, 28
        %v1819 = vpop.permute.xlu0 %1818
        %1820 = vrot.lane.b32.xlu0 %v1779, 28
        %v1821 = vpop.permute.xlu0 %1820
        %1822 = vrot.lane.b32.xlu0 %v1780, 28
        %v1823 = vpop.permute.xlu0 %1822
        %1824 = vrot.lane.b32.xlu0 %v1781, 28
        %v1825 = vpop.permute.xlu0 %1824
        %1826 = vrot.lane.b32.xlu0 %v1782, 28
        %v1827 = vpop.permute.xlu0 %1826
        %1828 = vrot.lane.b32.xlu0 %v1783, 28
        %v1829 = vpop.permute.xlu0 %1828
        %1830 = vrot.lane.b32.xlu0 %v1784, 28
        %v1831 = vpop.permute.xlu0 %1830
        %1832 = vrot.lane.b32.xlu0 %v1785, 28
        %v1833 = vpop.permute.xlu0 %1832
        %1850 = vst.msk [vmem:[#allocation5 + $0x80] sm:$0xff] %vm1753, %v1803
        %1851 = vst.msk [vmem:[#allocation5 + $0x88] sm:$0xff] %vm1753, %v1805
        %1852 = vst.msk [vmem:[#allocation5 + $0x90] sm:$0xff] %vm1753, %v1807
        %1853 = vst.msk [vmem:[#allocation5 + $0x98] sm:$0xff] %vm1753, %v1809
        %1854 = vst.msk [vmem:[#allocation5 + $0xa0] sm:$0xff] %vm1753, %v1811
        %1855 = vst.msk [vmem:[#allocation5 + $0xa8] sm:$0xff] %vm1753, %v1813
        %1856 = vst.msk [vmem:[#allocation5 + $0xb0] sm:$0xff] %vm1753, %v1815
        %1857 = vst.msk [vmem:[#allocation5 + $0xb8] sm:$0xff] %vm1753, %v1817
        %1858 = vst.msk [vmem:[#allocation5 + $0xc0] sm:$0xff] %vm1753, %v1819
        %1859 = vst.msk [vmem:[#allocation5 + $0xc8] sm:$0xff] %vm1753, %v1821
        %1860 = vst.msk [vmem:[#allocation5 + $0xd0] sm:$0xff] %vm1753, %v1823
        %1861 = vst.msk [vmem:[#allocation5 + $0xd8] sm:$0xff] %vm1753, %v1825
        %1862 = vst.msk [vmem:[#allocation5 + $0xe0] sm:$0xff] %vm1753, %v1827
        %1863 = vst.msk [vmem:[#allocation5 + $0xe8] sm:$0xff] %vm1753, %v1829
        %1864 = vst.msk [vmem:[#allocation5 + $0xf0] sm:$0xff] %vm1753, %v1831
        %1865 = vst.msk [vmem:[#allocation5 + $0xf8] sm:$0xff] %vm1753, %v1833
        %v1866 = vld [vmem:[%s1478 + $0x1] sm:$0xff]
        %v1867 = vld [vmem:[%s1478 + $0x11] sm:$0xff]
        %v1868 = vld [vmem:[%s1478 + $0x21] sm:$0xff]
        %v1869 = vld [vmem:[%s1478 + $0x31] sm:$0xff]
        %v1870 = vld [vmem:[%s1478 + $0x41] sm:$0xff]
        %v1871 = vld [vmem:[%s1478 + $0x51] sm:$0xff]
        %v1872 = vld [vmem:[%s1478 + $0x61] sm:$0xff]
        %v1873 = vld [vmem:[%s1478 + $0x71] sm:$0xff]
        %v1874 = vld [vmem:[%s1478 + $0x81] sm:$0xff]
        %v1875 = vld [vmem:[%s1478 + $0x91] sm:$0xff]
        %v1876 = vld [vmem:[%s1478 + $0xa1] sm:$0xff]
        %v1877 = vld [vmem:[%s1478 + $0xb1] sm:$0xff]
        %v1878 = vld [vmem:[%s1478 + $0xc1] sm:$0xff]
        %v1879 = vld [vmem:[%s1478 + $0xd1] sm:$0xff]
        %v1880 = vld [vmem:[%s1478 + $0xe1] sm:$0xff]
        %v1881 = vld [vmem:[%s1478 + $0xf1] sm:$0xff]
        %1898 = vrot.lane.b32.xlu0 %v1866, 32
        %v1899 = vpop.permute.xlu0 %1898
        %1900 = vrot.lane.b32.xlu0 %v1867, 32
        %v1901 = vpop.permute.xlu0 %1900
        %1902 = vrot.lane.b32.xlu0 %v1868, 32
        %v1903 = vpop.permute.xlu0 %1902
        %1904 = vrot.lane.b32.xlu0 %v1869, 32
        %v1905 = vpop.permute.xlu0 %1904
        %1906 = vrot.lane.b32.xlu0 %v1870, 32
        %v1907 = vpop.permute.xlu0 %1906
        %1908 = vrot.lane.b32.xlu0 %v1871, 32
        %v1909 = vpop.permute.xlu0 %1908
        %1910 = vrot.lane.b32.xlu0 %v1872, 32
        %v1911 = vpop.permute.xlu0 %1910
        %1912 = vrot.lane.b32.xlu0 %v1873, 32
        %v1913 = vpop.permute.xlu0 %1912
        %1914 = vrot.lane.b32.xlu0 %v1874, 32
        %v1915 = vpop.permute.xlu0 %1914
        %1916 = vrot.lane.b32.xlu0 %v1875, 32
        %v1917 = vpop.permute.xlu0 %1916
        %1918 = vrot.lane.b32.xlu0 %v1876, 32
        %v1919 = vpop.permute.xlu0 %1918
        %1920 = vrot.lane.b32.xlu0 %v1877, 32
        %v1921 = vpop.permute.xlu0 %1920
        %1922 = vrot.lane.b32.xlu0 %v1878, 32
        %v1923 = vpop.permute.xlu0 %1922
        %1924 = vrot.lane.b32.xlu0 %v1879, 32
        %v1925 = vpop.permute.xlu0 %1924
        %1926 = vrot.lane.b32.xlu0 %v1880, 32
        %v1927 = vpop.permute.xlu0 %1926
        %1928 = vrot.lane.b32.xlu0 %v1881, 32
        %v1929 = vpop.permute.xlu0 %1928
        %vm1946 = vcmask 294144
        %1947 = vst.msk [vmem:[#allocation5] sm:$0xff] %vm1946, %v1899
        %1948 = vst.msk [vmem:[#allocation5 + $0x8] sm:$0xff] %vm1946, %v1901
        %1949 = vst.msk [vmem:[#allocation5 + $0x10] sm:$0xff] %vm1946, %v1903
        %1950 = vst.msk [vmem:[#allocation5 + $0x18] sm:$0xff] %vm1946, %v1905
        %1951 = vst.msk [vmem:[#allocation5 + $0x20] sm:$0xff] %vm1946, %v1907
        %1952 = vst.msk [vmem:[#allocation5 + $0x28] sm:$0xff] %vm1946, %v1909
        %1953 = vst.msk [vmem:[#allocation5 + $0x30] sm:$0xff] %vm1946, %v1911
        %1954 = vst.msk [vmem:[#allocation5 + $0x38] sm:$0xff] %vm1946, %v1913
        %1955 = vst.msk [vmem:[#allocation5 + $0x40] sm:$0xff] %vm1946, %v1915
        %1956 = vst.msk [vmem:[#allocation5 + $0x48] sm:$0xff] %vm1946, %v1917
        %1957 = vst.msk [vmem:[#allocation5 + $0x50] sm:$0xff] %vm1946, %v1919
        %1958 = vst.msk [vmem:[#allocation5 + $0x58] sm:$0xff] %vm1946, %v1921
        %1959 = vst.msk [vmem:[#allocation5 + $0x60] sm:$0xff] %vm1946, %v1923
        %1960 = vst.msk [vmem:[#allocation5 + $0x68] sm:$0xff] %vm1946, %v1925
        %1961 = vst.msk [vmem:[#allocation5 + $0x70] sm:$0xff] %vm1946, %v1927
        %1962 = vst.msk [vmem:[#allocation5 + $0x78] sm:$0xff] %vm1946, %v1929
        %v1963 = vld [vmem:[%s1576 + $0x2] sm:$0xff]
        %v1964 = vld [vmem:[%s1576 + $0x12] sm:$0xff]
        %v1965 = vld [vmem:[%s1576 + $0x22] sm:$0xff]
        %v1966 = vld [vmem:[%s1576 + $0x32] sm:$0xff]
        %v1967 = vld [vmem:[%s1576 + $0x42] sm:$0xff]
        %v1968 = vld [vmem:[%s1576 + $0x52] sm:$0xff]
        %v1969 = vld [vmem:[%s1576 + $0x62] sm:$0xff]
        %v1970 = vld [vmem:[%s1576 + $0x72] sm:$0xff]
        %v1971 = vld [vmem:[%s1576 + $0x82] sm:$0xff]
        %v1972 = vld [vmem:[%s1576 + $0x92] sm:$0xff]
        %v1973 = vld [vmem:[%s1576 + $0xa2] sm:$0xff]
        %v1974 = vld [vmem:[%s1576 + $0xb2] sm:$0xff]
        %v1975 = vld [vmem:[%s1576 + $0xc2] sm:$0xff]
        %v1976 = vld [vmem:[%s1576 + $0xd2] sm:$0xff]
        %v1977 = vld [vmem:[%s1576 + $0xe2] sm:$0xff]
        %v1978 = vld [vmem:[%s1576 + $0xf2] sm:$0xff]
        %1995 = vrot.lane.b32.xlu0 %v1963, 32
        %v1996 = vpop.permute.xlu0 %1995
        %1997 = vrot.lane.b32.xlu0 %v1964, 32
        %v1998 = vpop.permute.xlu0 %1997
        %1999 = vrot.lane.b32.xlu0 %v1965, 32
        %v2000 = vpop.permute.xlu0 %1999
        %2001 = vrot.lane.b32.xlu0 %v1966, 32
        %v2002 = vpop.permute.xlu0 %2001
        %2003 = vrot.lane.b32.xlu0 %v1967, 32
        %v2004 = vpop.permute.xlu0 %2003
        %2005 = vrot.lane.b32.xlu0 %v1968, 32
        %v2006 = vpop.permute.xlu0 %2005
        %2007 = vrot.lane.b32.xlu0 %v1969, 32
        %v2008 = vpop.permute.xlu0 %2007
        %2009 = vrot.lane.b32.xlu0 %v1970, 32
        %v2010 = vpop.permute.xlu0 %2009
        %2011 = vrot.lane.b32.xlu0 %v1971, 32
        %v2012 = vpop.permute.xlu0 %2011
        %2013 = vrot.lane.b32.xlu0 %v1972, 32
        %v2014 = vpop.permute.xlu0 %2013
        %2015 = vrot.lane.b32.xlu0 %v1973, 32
        %v2016 = vpop.permute.xlu0 %2015
        %2017 = vrot.lane.b32.xlu0 %v1974, 32
        %v2018 = vpop.permute.xlu0 %2017
        %2019 = vrot.lane.b32.xlu0 %v1975, 32
        %v2020 = vpop.permute.xlu0 %2019
        %2021 = vrot.lane.b32.xlu0 %v1976, 32
        %v2022 = vpop.permute.xlu0 %2021
        %2023 = vrot.lane.b32.xlu0 %v1977, 32
        %v2024 = vpop.permute.xlu0 %2023
        %2025 = vrot.lane.b32.xlu0 %v1978, 32
        %v2026 = vpop.permute.xlu0 %2025
        %2043 = vst.msk [vmem:[#allocation5 + $0x80] sm:$0xff] %vm1946, %v1996
        %2044 = vst.msk [vmem:[#allocation5 + $0x88] sm:$0xff] %vm1946, %v1998
        %2045 = vst.msk [vmem:[#allocation5 + $0x90] sm:$0xff] %vm1946, %v2000
        %2046 = vst.msk [vmem:[#allocation5 + $0x98] sm:$0xff] %vm1946, %v2002
        %2047 = vst.msk [vmem:[#allocation5 + $0xa0] sm:$0xff] %vm1946, %v2004
        %2048 = vst.msk [vmem:[#allocation5 + $0xa8] sm:$0xff] %vm1946, %v2006
        %2049 = vst.msk [vmem:[#allocation5 + $0xb0] sm:$0xff] %vm1946, %v2008
        %2050 = vst.msk [vmem:[#allocation5 + $0xb8] sm:$0xff] %vm1946, %v2010
        %2051 = vst.msk [vmem:[#allocation5 + $0xc0] sm:$0xff] %vm1946, %v2012
        %2052 = vst.msk [vmem:[#allocation5 + $0xc8] sm:$0xff] %vm1946, %v2014
        %2053 = vst.msk [vmem:[#allocation5 + $0xd0] sm:$0xff] %vm1946, %v2016
        %2054 = vst.msk [vmem:[#allocation5 + $0xd8] sm:$0xff] %vm1946, %v2018
        %2055 = vst.msk [vmem:[#allocation5 + $0xe0] sm:$0xff] %vm1946, %v2020
        %2056 = vst.msk [vmem:[#allocation5 + $0xe8] sm:$0xff] %vm1946, %v2022
        %2057 = vst.msk [vmem:[#allocation5 + $0xf0] sm:$0xff] %vm1946, %v2024
        %2058 = vst.msk [vmem:[#allocation5 + $0xf8] sm:$0xff] %vm1946, %v2026
        %v2059 = vld [vmem:[#allocation5] sm:$0xff]
        %v2060 = vld [vmem:[#allocation5 + $0x8] sm:$0xff]
        %v2061 = vld [vmem:[#allocation5 + $0x10] sm:$0xff]
        %v2062 = vld [vmem:[#allocation5 + $0x18] sm:$0xff]
        %v2063 = vld [vmem:[#allocation5 + $0x20] sm:$0xff]
        %v2064 = vld [vmem:[#allocation5 + $0x28] sm:$0xff]
        %v2065 = vld [vmem:[#allocation5 + $0x30] sm:$0xff]
        %v2066 = vld [vmem:[#allocation5 + $0x38] sm:$0xff]
        %v2067 = vld [vmem:[#allocation5 + $0x40] sm:$0xff]
        %v2068 = vld [vmem:[#allocation5 + $0x48] sm:$0xff]
        %v2069 = vld [vmem:[#allocation5 + $0x50] sm:$0xff]
        %v2070 = vld [vmem:[#allocation5 + $0x58] sm:$0xff]
        %v2071 = vld [vmem:[#allocation5 + $0x60] sm:$0xff]
        %v2072 = vld [vmem:[#allocation5 + $0x68] sm:$0xff]
        %v2073 = vld [vmem:[#allocation5 + $0x70] sm:$0xff]
        %v2074 = vld [vmem:[#allocation5 + $0x78] sm:$0xff]
        %v2075 = vld [vmem:[#allocation5 + $0x80] sm:$0xff]
        %v2076 = vld [vmem:[#allocation5 + $0x88] sm:$0xff]
        %v2077 = vld [vmem:[#allocation5 + $0x90] sm:$0xff]
        %v2078 = vld [vmem:[#allocation5 + $0x98] sm:$0xff]
        %v2079 = vld [vmem:[#allocation5 + $0xa0] sm:$0xff]
        %v2080 = vld [vmem:[#allocation5 + $0xa8] sm:$0xff]
        %v2081 = vld [vmem:[#allocation5 + $0xb0] sm:$0xff]
        %v2082 = vld [vmem:[#allocation5 + $0xb8] sm:$0xff]
        %v2083 = vld [vmem:[#allocation5 + $0xc0] sm:$0xff]
        %v2084 = vld [vmem:[#allocation5 + $0xc8] sm:$0xff]
        %v2085 = vld [vmem:[#allocation5 + $0xd0] sm:$0xff]
        %v2086 = vld [vmem:[#allocation5 + $0xd8] sm:$0xff]
        %v2087 = vld [vmem:[#allocation5 + $0xe0] sm:$0xff]
        %v2088 = vld [vmem:[#allocation5 + $0xe8] sm:$0xff]
        %v2089 = vld [vmem:[#allocation5 + $0xf0] sm:$0xff]
        %v2090 = vld [vmem:[#allocation5 + $0xf8] sm:$0xff]
        %v2091 = vld [vmem:[%s2] sm:$0xff]
        %v2092 = vld [vmem:[%s2 + $0x8] sm:$0xff]
        %v2093 = vld [vmem:[%s2 + $0x10] sm:$0xff]
        %v2094 = vld [vmem:[%s2 + $0x18] sm:$0xff]
        %v2095 = vld [vmem:[%s2 + $0x20] sm:$0xf]
        %v2096 = vld [vmem:[%s3] sm:$0x1]
        %v2098 = vlaneseq
        %v2099 = vshrl.u32 %v2098, 7
        %v2100 = vsub.s32 0, %v2099
        %v2101 = vrot.slane %v2096, %v2100
        %vm2103 = vcmask 293888
        %v2105 = vsel %vm2103, %v2059, 0
        %v2108 = vsel %vm2103, %v2060, 0
        %v2111 = vsel %vm2103, %v2061, 0
        %v2114 = vsel %vm2103, %v2062, 0
        %v2117 = vsel %vm2103, %v2063, 0
        %v2120 = vsel %vm2103, %v2064, 0
        %v2123 = vsel %vm2103, %v2065, 0
        %v2126 = vsel %vm2103, %v2066, 0
        %v2129 = vsel %vm2103, %v2067, 0
        %v2132 = vsel %vm2103, %v2068, 0
        %v2135 = vsel %vm2103, %v2069, 0
        %v2138 = vsel %vm2103, %v2070, 0
        %v2141 = vsel %vm2103, %v2071, 0
        %v2144 = vsel %vm2103, %v2072, 0
        %v2147 = vsel %vm2103, %v2073, 0
        %v2150 = vsel %vm2103, %v2074, 0
        %v2153 = vsel %vm2103, %v2075, 0
        %v2156 = vsel %vm2103, %v2076, 0
        %v2159 = vsel %vm2103, %v2077, 0
        %v2162 = vsel %vm2103, %v2078, 0
        %v2165 = vsel %vm2103, %v2079, 0
        %v2168 = vsel %vm2103, %v2080, 0
        %v2171 = vsel %vm2103, %v2081, 0
        %v2174 = vsel %vm2103, %v2082, 0
        %v2177 = vsel %vm2103, %v2083, 0
        %v2180 = vsel %vm2103, %v2084, 0
        %v2183 = vsel %vm2103, %v2085, 0
        %v2186 = vsel %vm2103, %v2086, 0
        %v2189 = vsel %vm2103, %v2087, 0
        %v2192 = vsel %vm2103, %v2088, 0
        %v2195 = vsel %vm2103, %v2089, 0
        %v2198 = vsel %vm2103, %v2090, 0
        %vm2200 = vcmask 1043456
        %v2202 = vsel %vm2200, %v2095, 0
        %2204 = vmatprep.subr.mxu0 0.0
        %2205 = vmatpush1.msra.mxu0 %v2091
        %2206 = vmatprep.subr.mxu0 0.0
        %2207 = vmatpush1.msra.mxu0 %v2092
        %2208 = vmatprep.subr.mxu0 0.0
        %2209 = vmatpush1.msra.mxu0 %v2093
        %2210 = vmatprep.subr.mxu0 0.0
        %2211 = vmatpush1.msra.mxu0 %v2094
        %2212 = vmatprep.subr.mxu0 0.0
        %2213 = vmatpush1.msra.mxu0 %v2202
        %2214 = vmatprep.subr.mxu0 0.0
        %2215 = vmatpush1.msra.mxu0 0.0
        %2216 = vmatprep.subr.mxu0 0.0
        %2217 = vmatpush1.msra.mxu0 0.0
        %2218 = vmatprep.subr.mxu0 0.0
        %2219 = vmatpush1.msra.mxu0 0.0
        %2220 = vmatprep.subr.mxu0 0.0
        %2221 = vmatpush1.msra.mxu0 0.0
        %2222 = vmatprep.subr.mxu0 0.0
        %2223 = vmatpush1.msra.mxu0 0.0
        %2224 = vmatprep.subr.mxu0 0.0
        %2225 = vmatpush1.msra.mxu0 0.0
        %2226 = vmatprep.subr.mxu0 0.0
        %2227 = vmatpush1.msra.mxu0 0.0
        %2228 = vmatprep.subr.mxu0 0.0
        %2229 = vmatpush1.msra.mxu0 0.0
        %2230 = vmatprep.subr.mxu0 0.0
        %2231 = vmatpush1.msra.mxu0 0.0
        %2232 = vmatprep.subr.mxu0 0.0
        %2233 = vmatpush1.msra.mxu0 0.0
        %2234 = vmatprep.subr.mxu0 0.0
        %2235 = vmatpush1.msra.mxu0 0.0
        %2236 = vmatprep.subr.mxu0 0.0
        %2237 = vmatpush1.msra.mxu0 0.0
        %2238 = vmatprep.subr.mxu0 0.0
        %2239 = vmatpush1.msra.mxu0 0.0
        %2240 = vmatprep.subr.mxu0 0.0
        %2241 = vmatpush1.msra.mxu0 0.0
        %2242 = vmatprep.subr.mxu0 0.0
        %2243 = vmatpush1.msra.mxu0 0.0
        %2244 = vmatprep.subr.mxu0 0.0
        %2245 = vmatpush1.msra.mxu0 0.0
        %2246 = vmatprep.subr.mxu0 0.0
        %2247 = vmatpush1.msra.mxu0 0.0
        %2248 = vmatprep.subr.mxu0 0.0
        %2249 = vmatpush1.msra.mxu0 0.0
        %2250 = vmatprep.subr.mxu0 0.0
        %2251 = vmatpush1.msra.mxu0 0.0
        %2252 = vmatprep.subr.mxu0 0.0
        %2253 = vmatpush1.msra.mxu0 0.0
        %2254 = vmatprep.subr.mxu0 0.0
        %2255 = vmatpush1.msra.mxu0 0.0
        %2256 = vmatprep.subr.mxu0 0.0
        %2257 = vmatpush1.msra.mxu0 0.0
        %2258 = vmatprep.subr.mxu0 0.0
        %2259 = vmatpush1.msra.mxu0 0.0
        %2260 = vmatprep.subr.mxu0 0.0
        %2261 = vmatpush1.msra.mxu0 0.0
        %2262 = vmatprep.subr.mxu0 0.0
        %2263 = vmatpush1.msra.mxu0 0.0
        %2264 = vmatprep.subr.mxu0 0.0
        %2265 = vmatpush1.msra.mxu0 0.0
        %2266 = vmatprep.subr.mxu0 0.0
        %2267 = vmatpush1.msra.mxu0 0.0
        %2268 = vmatprep.mubr.f32.mxu0 0.0
        %2269 = vmatmul.mubr.f32.gmra.mrb[0].mxu0 %v2105
        %v2270 = vpop.f32.mrb[0].mxu0
        %v2271 = vadd.f32 %v2101, %v2270
        %v2272 = vpop.f32.mrb[0].mxu0
        %2273 = vmatprep.mubr.f32.mxu0 0.0
        %2274 = vmatmul.mubr.f32.gmra.mrb[0].mxu0 %v2108
        %v2275 = vpop.f32.mrb[0].mxu0
        %v2276 = vadd.f32 %v2101, %v2275
        %v2277 = vpop.f32.mrb[0].mxu0
        %2278 = vmatprep.mubr.f32.mxu0 0.0
        %2279 = vmatmul.mubr.f32.gmra.mrb[0].mxu0 %v2111
        %v2280 = vpop.f32.mrb[0].mxu0
        %v2281 = vadd.f32 %v2101, %v2280
        %v2282 = vpop.f32.mrb[0].mxu0
        %2283 = vmatprep.mubr.f32.mxu0 0.0
        %2284 = vmatmul.mubr.f32.gmra.mrb[0].mxu0 %v2114
        %v2285 = vpop.f32.mrb[0].mxu0
        %v2286 = vadd.f32 %v2101, %v2285
        %v2287 = vpop.f32.mrb[0].mxu0
        %2288 = vmatprep.mubr.f32.mxu0 0.0
        %2289 = vmatmul.mubr.f32.gmra.mrb[0].mxu0 %v2117
        %v2290 = vpop.f32.mrb[0].mxu0
        %v2291 = vadd.f32 %v2101, %v2290
        %v2292 = vpop.f32.mrb[0].mxu0
        %2293 = vmatprep.mubr.f32.mxu0 0.0
        %2294 = vmatmul.mubr.f32.gmra.mrb[0].mxu0 %v2120
        %v2295 = vpop.f32.mrb[0].mxu0
        %v2296 = vadd.f32 %v2101, %v2295
        %v2297 = vpop.f32.mrb[0].mxu0
        %2298 = vmatprep.mubr.f32.mxu0 0.0
        %2299 = vmatmul.mubr.f32.gmra.mrb[0].mxu0 %v2123
        %v2300 = vpop.f32.mrb[0].mxu0
        %v2301 = vadd.f32 %v2101, %v2300
        %v2302 = vpop.f32.mrb[0].mxu0
        %2303 = vmatprep.mubr.f32.mxu0 0.0
        %2304 = vmatmul.mubr.f32.gmra.mrb[0].mxu0 %v2126
        %v2305 = vpop.f32.mrb[0].mxu0
        %v2306 = vadd.f32 %v2101, %v2305
        %v2307 = vpop.f32.mrb[0].mxu0
        %2308 = vmatprep.mubr.f32.mxu0 0.0
        %2309 = vmatmul.mubr.f32.gmra.mrb[0].mxu0 %v2129
        %v2310 = vpop.f32.mrb[0].mxu0
        %v2311 = vadd.f32 %v2101, %v2310
        %v2312 = vpop.f32.mrb[0].mxu0
        %2313 = vmatprep.mubr.f32.mxu0 0.0
        %2314 = vmatmul.mubr.f32.gmra.mrb[0].mxu0 %v2132
        %v2315 = vpop.f32.mrb[0].mxu0
        %v2316 = vadd.f32 %v2101, %v2315
        %v2317 = vpop.f32.mrb[0].mxu0
        %2318 = vmatprep.mubr.f32.mxu0 0.0
        %2319 = vmatmul.mubr.f32.gmra.mrb[0].mxu0 %v2135
        %v2320 = vpop.f32.mrb[0].mxu0
        %v2321 = vadd.f32 %v2101, %v2320
        %v2322 = vpop.f32.mrb[0].mxu0
        %2323 = vmatprep.mubr.f32.mxu0 0.0
        %2324 = vmatmul.mubr.f32.gmra.mrb[0].mxu0 %v2138
        %v2325 = vpop.f32.mrb[0].mxu0
        %v2326 = vadd.f32 %v2101, %v2325
        %v2327 = vpop.f32.mrb[0].mxu0
        %2328 = vmatprep.mubr.f32.mxu0 0.0
        %2329 = vmatmul.mubr.f32.gmra.mrb[0].mxu0 %v2141
        %v2330 = vpop.f32.mrb[0].mxu0
        %v2331 = vadd.f32 %v2101, %v2330
        %v2332 = vpop.f32.mrb[0].mxu0
        %2333 = vmatprep.mubr.f32.mxu0 0.0
        %2334 = vmatmul.mubr.f32.gmra.mrb[0].mxu0 %v2144
        %v2335 = vpop.f32.mrb[0].mxu0
        %v2336 = vadd.f32 %v2101, %v2335
        %v2337 = vpop.f32.mrb[0].mxu0
        %2338 = vmatprep.mubr.f32.mxu0 0.0
        %2339 = vmatmul.mubr.f32.gmra.mrb[0].mxu0 %v2147
        %v2340 = vpop.f32.mrb[0].mxu0
        %v2341 = vadd.f32 %v2101, %v2340
        %v2342 = vpop.f32.mrb[0].mxu0
        %2343 = vmatprep.mubr.f32.mxu0 0.0
        %2344 = vmatmul.mubr.f32.gmra.mrb[0].mxu0 %v2150
        %v2345 = vpop.f32.mrb[0].mxu0
        %v2346 = vadd.f32 %v2101, %v2345
        %v2347 = vpop.f32.mrb[0].mxu0
        %2348 = vmatprep.mubr.f32.mxu0 0.0
        %2349 = vmatmul.mubr.f32.gmra.mrb[0].mxu0 %v2153
        %v2350 = vpop.f32.mrb[0].mxu0
        %v2351 = vadd.f32 %v2101, %v2350
        %v2352 = vpop.f32.mrb[0].mxu0
        %2353 = vmatprep.mubr.f32.mxu0 0.0
        %2354 = vmatmul.mubr.f32.gmra.mrb[0].mxu0 %v2156
        %v2355 = vpop.f32.mrb[0].mxu0
        %v2356 = vadd.f32 %v2101, %v2355
        %v2357 = vpop.f32.mrb[0].mxu0
        %2358 = vmatprep.mubr.f32.mxu0 0.0
        %2359 = vmatmul.mubr.f32.gmra.mrb[0].mxu0 %v2159
        %v2360 = vpop.f32.mrb[0].mxu0
        %v2361 = vadd.f32 %v2101, %v2360
        %v2362 = vpop.f32.mrb[0].mxu0
        %2363 = vmatprep.mubr.f32.mxu0 0.0
        %2364 = vmatmul.mubr.f32.gmra.mrb[0].mxu0 %v2162
        %v2365 = vpop.f32.mrb[0].mxu0
        %v2366 = vadd.f32 %v2101, %v2365
        %v2367 = vpop.f32.mrb[0].mxu0
        %2368 = vmatprep.mubr.f32.mxu0 0.0
        %2369 = vmatmul.mubr.f32.gmra.mrb[0].mxu0 %v2165
        %v2370 = vpop.f32.mrb[0].mxu0
        %v2371 = vadd.f32 %v2101, %v2370
        %v2372 = vpop.f32.mrb[0].mxu0
        %2373 = vmatprep.mubr.f32.mxu0 0.0
        %2374 = vmatmul.mubr.f32.gmra.mrb[0].mxu0 %v2168
        %v2375 = vpop.f32.mrb[0].mxu0
        %v2376 = vadd.f32 %v2101, %v2375
        %v2377 = vpop.f32.mrb[0].mxu0
        %2378 = vmatprep.mubr.f32.mxu0 0.0
        %2379 = vmatmul.mubr.f32.gmra.mrb[0].mxu0 %v2171
        %v2380 = vpop.f32.mrb[0].mxu0
        %v2381 = vadd.f32 %v2101, %v2380
        %v2382 = vpop.f32.mrb[0].mxu0
        %2383 = vmatprep.mubr.f32.mxu0 0.0
        %2384 = vmatmul.mubr.f32.gmra.mrb[0].mxu0 %v2174
        %v2385 = vpop.f32.mrb[0].mxu0
        %v2386 = vadd.f32 %v2101, %v2385
        %v2387 = vpop.f32.mrb[0].mxu0
        %2388 = vmatprep.mubr.f32.mxu0 0.0
        %2389 = vmatmul.mubr.f32.gmra.mrb[0].mxu0 %v2177
        %v2390 = vpop.f32.mrb[0].mxu0
        %v2391 = vadd.f32 %v2101, %v2390
        %v2392 = vpop.f32.mrb[0].mxu0
        %2393 = vmatprep.mubr.f32.mxu0 0.0
        %2394 = vmatmul.mubr.f32.gmra.mrb[0].mxu0 %v2180
        %v2395 = vpop.f32.mrb[0].mxu0
        %v2396 = vadd.f32 %v2101, %v2395
        %v2397 = vpop.f32.mrb[0].mxu0
        %2398 = vmatprep.mubr.f32.mxu0 0.0
        %2399 = vmatmul.mubr.f32.gmra.mrb[0].mxu0 %v2183
        %v2400 = vpop.f32.mrb[0].mxu0
        %v2401 = vadd.f32 %v2101, %v2400
        %v2402 = vpop.f32.mrb[0].mxu0
        %2403 = vmatprep.mubr.f32.mxu0 0.0
        %2404 = vmatmul.mubr.f32.gmra.mrb[0].mxu0 %v2186
        %v2405 = vpop.f32.mrb[0].mxu0
        %v2406 = vadd.f32 %v2101, %v2405
        %v2407 = vpop.f32.mrb[0].mxu0
        %2408 = vmatprep.mubr.f32.mxu0 0.0
        %2409 = vmatmul.mubr.f32.gmra.mrb[0].mxu0 %v2189
        %v2410 = vpop.f32.mrb[0].mxu0
        %v2411 = vadd.f32 %v2101, %v2410
        %v2412 = vpop.f32.mrb[0].mxu0
        %2413 = vmatprep.mubr.f32.mxu0 0.0
        %2414 = vmatmul.mubr.f32.gmra.mrb[0].mxu0 %v2192
        %v2415 = vpop.f32.mrb[0].mxu0
        %v2416 = vadd.f32 %v2101, %v2415
        %v2417 = vpop.f32.mrb[0].mxu0
        %2418 = vmatprep.mubr.f32.mxu0 0.0
        %2419 = vmatmul.mubr.f32.gmra.mrb[0].mxu0 %v2195
        %v2420 = vpop.f32.mrb[0].mxu0
        %v2421 = vadd.f32 %v2101, %v2420
        %v2422 = vpop.f32.mrb[0].mxu0
        %2423 = vmatprep.mubr.f32.mxu0 0.0
        %2424 = vmatmul.mubr.f32.gmra.mrb[0].mxu0 %v2198
        %v2425 = vpop.f32.mrb[0].mxu0
        %v2426 = vadd.f32 %v2101, %v2425
        %v2427 = vpop.f32.mrb[0].mxu0
        %2428 = vdwg.mxu0
        %v2429 = vmax.f32 %v2271, %v2351
        %v2430 = vmax.f32 %v2276, %v2356
        %v2431 = vmax.f32 %v2281, %v2361
        %v2432 = vmax.f32 %v2286, %v2366
        %v2433 = vmax.f32 %v2291, %v2371
        %v2434 = vmax.f32 %v2296, %v2376
        %v2435 = vmax.f32 %v2301, %v2381
        %v2436 = vmax.f32 %v2306, %v2386
        %v2437 = vmax.f32 %v2311, %v2391
        %v2438 = vmax.f32 %v2316, %v2396
        %v2439 = vmax.f32 %v2321, %v2401
        %v2440 = vmax.f32 %v2326, %v2406
        %v2441 = vmax.f32 %v2331, %v2411
        %v2442 = vmax.f32 %v2336, %v2416
        %v2443 = vmax.f32 %v2341, %v2421
        %v2444 = vmax.f32 %v2346, %v2426
        %2445 = vst.msk [vmem:[#allocation7] sm:$0xff] %vm355, %v2429
        %2446 = vst.msk [vmem:[#allocation7 + $0x8] sm:$0xff] %vm355, %v2430
        %2447 = vst.msk [vmem:[#allocation7 + $0x10] sm:$0xff] %vm355, %v2431
        %2448 = vst.msk [vmem:[#allocation7 + $0x18] sm:$0xff] %vm355, %v2432
        %2449 = vst.msk [vmem:[#allocation7 + $0x20] sm:$0xff] %vm355, %v2433
        %2450 = vst.msk [vmem:[#allocation7 + $0x28] sm:$0xff] %vm355, %v2434
        %2451 = vst.msk [vmem:[#allocation7 + $0x30] sm:$0xff] %vm355, %v2435
        %2452 = vst.msk [vmem:[#allocation7 + $0x38] sm:$0xff] %vm355, %v2436
        %2453 = vst.msk [vmem:[#allocation7 + $0x40] sm:$0xff] %vm355, %v2437
        %2454 = vst.msk [vmem:[#allocation7 + $0x48] sm:$0xff] %vm355, %v2438
        %2455 = vst.msk [vmem:[#allocation7 + $0x50] sm:$0xff] %vm355, %v2439
        %2456 = vst.msk [vmem:[#allocation7 + $0x58] sm:$0xff] %vm355, %v2440
        %2457 = vst.msk [vmem:[#allocation7 + $0x60] sm:$0xff] %vm355, %v2441
        %2458 = vst.msk [vmem:[#allocation7 + $0x68] sm:$0xff] %vm355, %v2442
        %2459 = vst.msk [vmem:[#allocation7 + $0x70] sm:$0xff] %vm355, %v2443
        %2460 = vst.msk [vmem:[#allocation7 + $0x78] sm:$0xff] %vm355, %v2444
        %v2461 = vld [vmem:[#allocation7 + $0x1] sm:$0x7f]
        %v2462 = vld [vmem:[#allocation7 + $0x9] sm:$0x7f]
        %v2463 = vld [vmem:[#allocation7 + $0x11] sm:$0x7f]
        %v2464 = vld [vmem:[#allocation7 + $0x19] sm:$0x7f]
        %v2465 = vld [vmem:[#allocation7 + $0x21] sm:$0x7f]
        %v2466 = vld [vmem:[#allocation7 + $0x29] sm:$0x7f]
        %v2467 = vld [vmem:[#allocation7 + $0x31] sm:$0x7f]
        %v2468 = vld [vmem:[#allocation7 + $0x39] sm:$0x7f]
        %v2469 = vld [vmem:[#allocation7 + $0x41] sm:$0x7f]
        %v2470 = vld [vmem:[#allocation7 + $0x49] sm:$0x7f]
        %v2471 = vld [vmem:[#allocation7 + $0x51] sm:$0x7f]
        %v2472 = vld [vmem:[#allocation7 + $0x59] sm:$0x7f]
        %v2473 = vld [vmem:[#allocation7 + $0x61] sm:$0x7f]
        %v2474 = vld [vmem:[#allocation7 + $0x69] sm:$0x7f]
        %v2475 = vld [vmem:[#allocation7 + $0x71] sm:$0x7f]
        %v2476 = vld [vmem:[#allocation7 + $0x79] sm:$0x7f]
        %v2477 = vmax.f32 %v2461, %v2351
        %v2478 = vmax.f32 %v2462, %v2356
        %v2479 = vmax.f32 %v2463, %v2361
        %v2480 = vmax.f32 %v2464, %v2366
        %v2481 = vmax.f32 %v2465, %v2371
        %v2482 = vmax.f32 %v2466, %v2376
        %v2483 = vmax.f32 %v2467, %v2381
        %v2484 = vmax.f32 %v2468, %v2386
        %v2485 = vmax.f32 %v2469, %v2391
        %v2486 = vmax.f32 %v2470, %v2396
        %v2487 = vmax.f32 %v2471, %v2401
        %v2488 = vmax.f32 %v2472, %v2406
        %v2489 = vmax.f32 %v2473, %v2411
        %v2490 = vmax.f32 %v2474, %v2416
        %v2491 = vmax.f32 %v2475, %v2421
        %v2492 = vmax.f32 %v2476, %v2426
        %vm2493 = vcmask 129024
        %2494 = vst.msk [vmem:[#allocation7 + $0x1] sm:$0x7f] %vm2493, %v2477
        %2495 = vst.msk [vmem:[#allocation7 + $0x9] sm:$0x7f] %vm2493, %v2478
        %2496 = vst.msk [vmem:[#allocation7 + $0x11] sm:$0x7f] %vm2493, %v2479
        %2497 = vst.msk [vmem:[#allocation7 + $0x19] sm:$0x7f] %vm2493, %v2480
        %2498 = vst.msk [vmem:[#allocation7 + $0x21] sm:$0x7f] %vm2493, %v2481
        %2499 = vst.msk [vmem:[#allocation7 + $0x29] sm:$0x7f] %vm2493, %v2482
        %2500 = vst.msk [vmem:[#allocation7 + $0x31] sm:$0x7f] %vm2493, %v2483
        %2501 = vst.msk [vmem:[#allocation7 + $0x39] sm:$0x7f] %vm2493, %v2484
        %2502 = vst.msk [vmem:[#allocation7 + $0x41] sm:$0x7f] %vm2493, %v2485
        %2503 = vst.msk [vmem:[#allocation7 + $0x49] sm:$0x7f] %vm2493, %v2486
        %2504 = vst.msk [vmem:[#allocation7 + $0x51] sm:$0x7f] %vm2493, %v2487
        %2505 = vst.msk [vmem:[#allocation7 + $0x59] sm:$0x7f] %vm2493, %v2488
        %2506 = vst.msk [vmem:[#allocation7 + $0x61] sm:$0x7f] %vm2493, %v2489
        %2507 = vst.msk [vmem:[#allocation7 + $0x69] sm:$0x7f] %vm2493, %v2490
        %2508 = vst.msk [vmem:[#allocation7 + $0x71] sm:$0x7f] %vm2493, %v2491
        %2509 = vst.msk [vmem:[#allocation7 + $0x79] sm:$0x7f] %vm2493, %v2492
        %v2510 = vld [vmem:[#allocation7] sm:$0xff]
        %v2511 = vld [vmem:[#allocation7 + $0x8] sm:$0xff]
        %v2512 = vld [vmem:[#allocation7 + $0x10] sm:$0xff]
        %v2513 = vld [vmem:[#allocation7 + $0x18] sm:$0xff]
        %v2514 = vld [vmem:[#allocation7 + $0x20] sm:$0xff]
        %v2515 = vld [vmem:[#allocation7 + $0x28] sm:$0xff]
        %v2516 = vld [vmem:[#allocation7 + $0x30] sm:$0xff]
        %v2517 = vld [vmem:[#allocation7 + $0x38] sm:$0xff]
        %v2518 = vld [vmem:[#allocation7 + $0x40] sm:$0xff]
        %v2519 = vld [vmem:[#allocation7 + $0x48] sm:$0xff]
        %v2520 = vld [vmem:[#allocation7 + $0x50] sm:$0xff]
        %v2521 = vld [vmem:[#allocation7 + $0x58] sm:$0xff]
        %v2522 = vld [vmem:[#allocation7 + $0x60] sm:$0xff]
        %v2523 = vld [vmem:[#allocation7 + $0x68] sm:$0xff]
        %v2524 = vld [vmem:[#allocation7 + $0x70] sm:$0xff]
        %v2525 = vld [vmem:[#allocation7 + $0x78] sm:$0xff]
        %v2526 = vmax.f32 %v2510, %v2511
        %v2527 = vmax.f32 %v2512, %v2513
        %v2528 = vmax.f32 %v2514, %v2515
        %v2529 = vmax.f32 %v2516, %v2517
        %v2530 = vmax.f32 %v2518, %v2519
        %v2531 = vmax.f32 %v2520, %v2521
        %v2532 = vmax.f32 %v2522, %v2523
        %v2533 = vmax.f32 %v2524, %v2525
        %2534 = vst.msk [vmem:[#allocation8] sm:$0xff] %vm355, %v2526
        %v2535 = vmax.f32 %v2527, %v2511
        %v2536 = vmax.f32 %v2528, %v2513
        %v2537 = vmax.f32 %v2529, %v2515
        %v2538 = vmax.f32 %v2530, %v2517
        %v2539 = vmax.f32 %v2531, %v2519
        %v2540 = vmax.f32 %v2532, %v2521
        %v2541 = vmax.f32 %v2533, %v2523
        %s2542 = scalar_lea.vmem [#allocation8], 8
        %2543 = vst.msk [vmem:[%s2542] sm:$0xff] %vm355, %v2535
        %2544 = vst.msk [vmem:[%s2542 + $0x8] sm:$0xff] %vm355, %v2536
        %2545 = vst.msk [vmem:[%s2542 + $0x10] sm:$0xff] %vm355, %v2537
        %2546 = vst.msk [vmem:[%s2542 + $0x18] sm:$0xff] %vm355, %v2538
        %2547 = vst.msk [vmem:[%s2542 + $0x20] sm:$0xff] %vm355, %v2539
        %2548 = vst.msk [vmem:[%s2542 + $0x28] sm:$0xff] %vm355, %v2540
        %2549 = vst.msk [vmem:[%s2542 + $0x30] sm:$0xff] %vm355, %v2541
        %v2550 = vld [vmem:[#allocation8] sm:$0xff]
        %v2551 = vld [vmem:[#allocation8 + $0x8] sm:$0xff]
        %v2552 = vld [vmem:[#allocation8 + $0x10] sm:$0xff]
        %v2553 = vld [vmem:[#allocation8 + $0x18] sm:$0xff]
        %v2554 = vld [vmem:[#allocation8 + $0x20] sm:$0xff]
        %v2555 = vld [vmem:[#allocation8 + $0x28] sm:$0xff]
        %v2556 = vld [vmem:[#allocation8 + $0x30] sm:$0xff]
        %v2557 = vld [vmem:[#allocation8 + $0x38] sm:$0xff]
        %v2558 = vmax.f32 %v2550, 0.0
        %v2559 = vmax.f32 %v2551, 0.0
        %v2560 = vmax.f32 %v2552, 0.0
        %v2561 = vmax.f32 %v2553, 0.0
        %v2562 = vmax.f32 %v2554, 0.0
        %v2563 = vmax.f32 %v2555, 0.0
        %v2564 = vmax.f32 %v2556, 0.0
        %v2565 = vmax.f32 %v2557, 0.0
        %s2566 = scalar_lea.vmem [#allocation4], 16
        %2567 = vst.msk [vmem:[%s2566 + $0x1] sm:$0xff] %vm355, %v2558
        %2568 = vst.msk [vmem:[%s2566 + $0x11] sm:$0xff] %vm355, %v2559
        %2569 = vst.msk [vmem:[%s2566 + $0x21] sm:$0xff] %vm355, %v2560
        %2570 = vst.msk [vmem:[%s2566 + $0x31] sm:$0xff] %vm355, %v2561
        %2571 = vst.msk [vmem:[%s2566 + $0x41] sm:$0xff] %vm355, %v2562
        %2572 = vst.msk [vmem:[%s2566 + $0x51] sm:$0xff] %vm355, %v2563
        %2573 = vst.msk [vmem:[%s2566 + $0x61] sm:$0xff] %vm355, %v2564
        %2574 = vst.msk [vmem:[%s2566 + $0x71] sm:$0xff] %vm355, %v2565
        %v2575 = vld [vmem:[%s4] sm:$0xff]
        %v2576 = vld [vmem:[%s4 + $0x8] sm:$0xff]
        %v2577 = vld [vmem:[%s4 + $0x10] sm:$0xff]
        %v2578 = vld [vmem:[%s4 + $0x18] sm:$0xff]
        %v2579 = vld [vmem:[%s4 + $0x20] sm:$0xff]
        %v2580 = vld [vmem:[%s4 + $0x28] sm:$0xff]
        %v2581 = vld [vmem:[%s4 + $0x30] sm:$0xff]
        %v2582 = vld [vmem:[%s4 + $0x38] sm:$0xff]
        %v2583 = vld [vmem:[%s4 + $0x40] sm:$0xff]
        %v2584 = vld [vmem:[%s4 + $0x48] sm:$0xff]
        %v2585 = vld [vmem:[%s4 + $0x50] sm:$0xff]
        %v2586 = vld [vmem:[%s4 + $0x58] sm:$0xff]
        %v2587 = vld [vmem:[%s4 + $0x60] sm:$0xff]
        %v2588 = vld [vmem:[%s4 + $0x68] sm:$0xff]
        %v2589 = vld [vmem:[%s4 + $0x70] sm:$0xff]
        %v2590 = vld [vmem:[%s4 + $0x78] sm:$0xff]
        %v2591 = vld [vmem:[%s4 + $0x80] sm:$0xff]
        %v2592 = vld [vmem:[%s4 + $0x88] sm:$0xff]
        %v2593 = vld [vmem:[%s5] sm:$0x1]
        %v2594 = vld [vmem:[#allocation4] sm:$0xff]
        %v2595 = vld [vmem:[#allocation4 + $0x10] sm:$0xff]
        %v2596 = vld [vmem:[#allocation4 + $0x20] sm:$0xff]
        %v2597 = vld [vmem:[#allocation4 + $0x30] sm:$0xff]
        %v2598 = vld [vmem:[#allocation4 + $0x40] sm:$0xff]
        %v2599 = vld [vmem:[#allocation4 + $0x50] sm:$0xff]
        %v2600 = vld [vmem:[#allocation4 + $0x60] sm:$0xff]
        %v2601 = vld [vmem:[#allocation4 + $0x70] sm:$0xff]
        %2602 = vst.msk [vmem:[#allocation6] sm:$0xff] %vm355, %v2594
        %2603 = vst.msk [vmem:[#allocation6 + $0x10] sm:$0xff] %vm355, %v2595
        %2604 = vst.msk [vmem:[#allocation6 + $0x20] sm:$0xff] %vm355, %v2596
        %2605 = vst.msk [vmem:[#allocation6 + $0x30] sm:$0xff] %vm355, %v2597
        %2606 = vst.msk [vmem:[#allocation6 + $0x40] sm:$0xff] %vm355, %v2598
        %2607 = vst.msk [vmem:[#allocation6 + $0x50] sm:$0xff] %vm355, %v2599
        %2608 = vst.msk [vmem:[#allocation6 + $0x60] sm:$0xff] %vm355, %v2600
        %2609 = vst.msk [vmem:[#allocation6 + $0x70] sm:$0xff] %vm355, %v2601
        %v2610 = vld [vmem:[#allocation4 + $0x1] sm:$0xff]
        %v2611 = vld [vmem:[#allocation4 + $0x11] sm:$0xff]
        %v2612 = vld [vmem:[#allocation4 + $0x21] sm:$0xff]
        %v2613 = vld [vmem:[#allocation4 + $0x31] sm:$0xff]
        %v2614 = vld [vmem:[#allocation4 + $0x41] sm:$0xff]
        %v2615 = vld [vmem:[#allocation4 + $0x51] sm:$0xff]
        %v2616 = vld [vmem:[#allocation4 + $0x61] sm:$0xff]
        %v2617 = vld [vmem:[#allocation4 + $0x71] sm:$0xff]
        %2626 = vrot.lane.b32.xlu0 %v2610, 16
        %v2627 = vpop.permute.xlu0 %2626
        %2628 = vrot.lane.b32.xlu0 %v2611, 16
        %v2629 = vpop.permute.xlu0 %2628
        %2630 = vrot.lane.b32.xlu0 %v2612, 16
        %v2631 = vpop.permute.xlu0 %2630
        %2632 = vrot.lane.b32.xlu0 %v2613, 16
        %v2633 = vpop.permute.xlu0 %2632
        %2634 = vrot.lane.b32.xlu0 %v2614, 16
        %v2635 = vpop.permute.xlu0 %2634
        %2636 = vrot.lane.b32.xlu0 %v2615, 16
        %v2637 = vpop.permute.xlu0 %2636
        %2638 = vrot.lane.b32.xlu0 %v2616, 16
        %v2639 = vpop.permute.xlu0 %2638
        %2640 = vrot.lane.b32.xlu0 %v2617, 16
        %v2641 = vpop.permute.xlu0 %2640
        %vm2650 = vcmask 261248
        %2651 = vst.msk [vmem:[#allocation6] sm:$0xff] %vm2650, %v2627
        %2652 = vst.msk [vmem:[#allocation6 + $0x10] sm:$0xff] %vm2650, %v2629
        %2653 = vst.msk [vmem:[#allocation6 + $0x20] sm:$0xff] %vm2650, %v2631
        %2654 = vst.msk [vmem:[#allocation6 + $0x30] sm:$0xff] %vm2650, %v2633
        %2655 = vst.msk [vmem:[#allocation6 + $0x40] sm:$0xff] %vm2650, %v2635
        %2656 = vst.msk [vmem:[#allocation6 + $0x50] sm:$0xff] %vm2650, %v2637
        %2657 = vst.msk [vmem:[#allocation6 + $0x60] sm:$0xff] %vm2650, %v2639
        %2658 = vst.msk [vmem:[#allocation6 + $0x70] sm:$0xff] %vm2650, %v2641
        %v2659 = vld [vmem:[#allocation4 + $0x2] sm:$0xff]
        %v2660 = vld [vmem:[#allocation4 + $0x12] sm:$0xff]
        %v2661 = vld [vmem:[#allocation4 + $0x22] sm:$0xff]
        %v2662 = vld [vmem:[#allocation4 + $0x32] sm:$0xff]
        %v2663 = vld [vmem:[#allocation4 + $0x42] sm:$0xff]
        %v2664 = vld [vmem:[#allocation4 + $0x52] sm:$0xff]
        %v2665 = vld [vmem:[#allocation4 + $0x62] sm:$0xff]
        %v2666 = vld [vmem:[#allocation4 + $0x72] sm:$0xff]
        %2675 = vrot.lane.b32.xlu0 %v2659, 32
        %v2676 = vpop.permute.xlu0 %2675
        %2677 = vrot.lane.b32.xlu0 %v2660, 32
        %v2678 = vpop.permute.xlu0 %2677
        %2679 = vrot.lane.b32.xlu0 %v2661, 32
        %v2680 = vpop.permute.xlu0 %2679
        %2681 = vrot.lane.b32.xlu0 %v2662, 32
        %v2682 = vpop.permute.xlu0 %2681
        %2683 = vrot.lane.b32.xlu0 %v2663, 32
        %v2684 = vpop.permute.xlu0 %2683
        %2685 = vrot.lane.b32.xlu0 %v2664, 32
        %v2686 = vpop.permute.xlu0 %2685
        %2687 = vrot.lane.b32.xlu0 %v2665, 32
        %v2688 = vpop.permute.xlu0 %2687
        %2689 = vrot.lane.b32.xlu0 %v2666, 32
        %v2690 = vpop.permute.xlu0 %2689
        %vm2699 = vcmask 392448
        %2700 = vst.msk [vmem:[#allocation6] sm:$0xff] %vm2699, %v2676
        %2701 = vst.msk [vmem:[#allocation6 + $0x10] sm:$0xff] %vm2699, %v2678
        %2702 = vst.msk [vmem:[#allocation6 + $0x20] sm:$0xff] %vm2699, %v2680
        %2703 = vst.msk [vmem:[#allocation6 + $0x30] sm:$0xff] %vm2699, %v2682
        %2704 = vst.msk [vmem:[#allocation6 + $0x40] sm:$0xff] %vm2699, %v2684
        %2705 = vst.msk [vmem:[#allocation6 + $0x50] sm:$0xff] %vm2699, %v2686
        %2706 = vst.msk [vmem:[#allocation6 + $0x60] sm:$0xff] %vm2699, %v2688
        %2707 = vst.msk [vmem:[#allocation6 + $0x70] sm:$0xff] %vm2699, %v2690
        %v2708 = vld [vmem:[%s2566] sm:$0xff]
        %v2709 = vld [vmem:[%s2566 + $0x10] sm:$0xff]
        %v2710 = vld [vmem:[%s2566 + $0x20] sm:$0xff]
        %v2711 = vld [vmem:[%s2566 + $0x30] sm:$0xff]
        %v2712 = vld [vmem:[%s2566 + $0x40] sm:$0xff]
        %v2713 = vld [vmem:[%s2566 + $0x50] sm:$0xff]
        %v2714 = vld [vmem:[%s2566 + $0x60] sm:$0xff]
        %v2715 = vld [vmem:[%s2566 + $0x70] sm:$0xff]
        %2724 = vrot.lane.b32.xlu0 %v2708, 48
        %v2725 = vpop.permute.xlu0 %2724
        %2726 = vrot.lane.b32.xlu0 %v2709, 48
        %v2727 = vpop.permute.xlu0 %2726
        %2728 = vrot.lane.b32.xlu0 %v2710, 48
        %v2729 = vpop.permute.xlu0 %2728
        %2730 = vrot.lane.b32.xlu0 %v2711, 48
        %v2731 = vpop.permute.xlu0 %2730
        %2732 = vrot.lane.b32.xlu0 %v2712, 48
        %v2733 = vpop.permute.xlu0 %2732
        %2734 = vrot.lane.b32.xlu0 %v2713, 48
        %v2735 = vpop.permute.xlu0 %2734
        %2736 = vrot.lane.b32.xlu0 %v2714, 48
        %v2737 = vpop.permute.xlu0 %2736
        %2738 = vrot.lane.b32.xlu0 %v2715, 48
        %v2739 = vpop.permute.xlu0 %2738
        %vm2748 = vcmask 523648
        %2749 = vst.msk [vmem:[#allocation6] sm:$0xff] %vm2748, %v2725
        %2750 = vst.msk [vmem:[#allocation6 + $0x10] sm:$0xff] %vm2748, %v2727
        %2751 = vst.msk [vmem:[#allocation6 + $0x20] sm:$0xff] %vm2748, %v2729
        %2752 = vst.msk [vmem:[#allocation6 + $0x30] sm:$0xff] %vm2748, %v2731
        %2753 = vst.msk [vmem:[#allocation6 + $0x40] sm:$0xff] %vm2748, %v2733
        %2754 = vst.msk [vmem:[#allocation6 + $0x50] sm:$0xff] %vm2748, %v2735
        %2755 = vst.msk [vmem:[#allocation6 + $0x60] sm:$0xff] %vm2748, %v2737
        %2756 = vst.msk [vmem:[#allocation6 + $0x70] sm:$0xff] %vm2748, %v2739
        %v2757 = vld [vmem:[%s2566 + $0x1] sm:$0xff]
        %v2758 = vld [vmem:[%s2566 + $0x11] sm:$0xff]
        %v2759 = vld [vmem:[%s2566 + $0x21] sm:$0xff]
        %v2760 = vld [vmem:[%s2566 + $0x31] sm:$0xff]
        %v2761 = vld [vmem:[%s2566 + $0x41] sm:$0xff]
        %v2762 = vld [vmem:[%s2566 + $0x51] sm:$0xff]
        %v2763 = vld [vmem:[%s2566 + $0x61] sm:$0xff]
        %v2764 = vld [vmem:[%s2566 + $0x71] sm:$0xff]
        %2773 = vrot.lane.b32.xlu0 %v2757, 64
        %v2774 = vpop.permute.xlu0 %2773
        %2775 = vrot.lane.b32.xlu0 %v2758, 64
        %v2776 = vpop.permute.xlu0 %2775
        %2777 = vrot.lane.b32.xlu0 %v2759, 64
        %v2778 = vpop.permute.xlu0 %2777
        %2779 = vrot.lane.b32.xlu0 %v2760, 64
        %v2780 = vpop.permute.xlu0 %2779
        %2781 = vrot.lane.b32.xlu0 %v2761, 64
        %v2782 = vpop.permute.xlu0 %2781
        %2783 = vrot.lane.b32.xlu0 %v2762, 64
        %v2784 = vpop.permute.xlu0 %2783
        %2785 = vrot.lane.b32.xlu0 %v2763, 64
        %v2786 = vpop.permute.xlu0 %2785
        %2787 = vrot.lane.b32.xlu0 %v2764, 64
        %v2788 = vpop.permute.xlu0 %2787
        %vm2797 = vcmask 654848
        %2798 = vst.msk [vmem:[#allocation6] sm:$0xff] %vm2797, %v2774
        %2799 = vst.msk [vmem:[#allocation6 + $0x10] sm:$0xff] %vm2797, %v2776
        %2800 = vst.msk [vmem:[#allocation6 + $0x20] sm:$0xff] %vm2797, %v2778
        %2801 = vst.msk [vmem:[#allocation6 + $0x30] sm:$0xff] %vm2797, %v2780
        %2802 = vst.msk [vmem:[#allocation6 + $0x40] sm:$0xff] %vm2797, %v2782
        %2803 = vst.msk [vmem:[#allocation6 + $0x50] sm:$0xff] %vm2797, %v2784
        %2804 = vst.msk [vmem:[#allocation6 + $0x60] sm:$0xff] %vm2797, %v2786
        %2805 = vst.msk [vmem:[#allocation6 + $0x70] sm:$0xff] %vm2797, %v2788
        %v2806 = vld [vmem:[%s2566 + $0x2] sm:$0xff]
        %v2807 = vld [vmem:[%s2566 + $0x12] sm:$0xff]
        %v2808 = vld [vmem:[%s2566 + $0x22] sm:$0xff]
        %v2809 = vld [vmem:[%s2566 + $0x32] sm:$0xff]
        %v2810 = vld [vmem:[%s2566 + $0x42] sm:$0xff]
        %v2811 = vld [vmem:[%s2566 + $0x52] sm:$0xff]
        %v2812 = vld [vmem:[%s2566 + $0x62] sm:$0xff]
        %v2813 = vld [vmem:[%s2566 + $0x72] sm:$0xff]
        %2822 = vrot.lane.b32.xlu0 %v2806, 80
        %v2823 = vpop.permute.xlu0 %2822
        %2824 = vrot.lane.b32.xlu0 %v2807, 80
        %v2825 = vpop.permute.xlu0 %2824
        %2826 = vrot.lane.b32.xlu0 %v2808, 80
        %v2827 = vpop.permute.xlu0 %2826
        %2828 = vrot.lane.b32.xlu0 %v2809, 80
        %v2829 = vpop.permute.xlu0 %2828
        %2830 = vrot.lane.b32.xlu0 %v2810, 80
        %v2831 = vpop.permute.xlu0 %2830
        %2832 = vrot.lane.b32.xlu0 %v2811, 80
        %v2833 = vpop.permute.xlu0 %2832
        %2834 = vrot.lane.b32.xlu0 %v2812, 80
        %v2835 = vpop.permute.xlu0 %2834
        %2836 = vrot.lane.b32.xlu0 %v2813, 80
        %v2837 = vpop.permute.xlu0 %2836
        %vm2846 = vcmask 786048
        %2847 = vst.msk [vmem:[#allocation6] sm:$0xff] %vm2846, %v2823
        %2848 = vst.msk [vmem:[#allocation6 + $0x10] sm:$0xff] %vm2846, %v2825
        %2849 = vst.msk [vmem:[#allocation6 + $0x20] sm:$0xff] %vm2846, %v2827
        %2850 = vst.msk [vmem:[#allocation6 + $0x30] sm:$0xff] %vm2846, %v2829
        %2851 = vst.msk [vmem:[#allocation6 + $0x40] sm:$0xff] %vm2846, %v2831
        %2852 = vst.msk [vmem:[#allocation6 + $0x50] sm:$0xff] %vm2846, %v2833
        %2853 = vst.msk [vmem:[#allocation6 + $0x60] sm:$0xff] %vm2846, %v2835
        %2854 = vst.msk [vmem:[#allocation6 + $0x70] sm:$0xff] %vm2846, %v2837
        %s2855 = scalar_lea.vmem [#allocation4], 32
        %v2856 = vld [vmem:[%s2855] sm:$0xff]
        %v2857 = vld [vmem:[%s2855 + $0x10] sm:$0xff]
        %v2858 = vld [vmem:[%s2855 + $0x20] sm:$0xff]
        %v2859 = vld [vmem:[%s2855 + $0x30] sm:$0xff]
        %v2860 = vld [vmem:[%s2855 + $0x40] sm:$0xff]
        %v2861 = vld [vmem:[%s2855 + $0x50] sm:$0xff]
        %v2862 = vld [vmem:[%s2855 + $0x60] sm:$0xff]
        %v2863 = vld [vmem:[%s2855 + $0x70] sm:$0xff]
        %2872 = vrot.lane.b32.xlu0 %v2856, 96
        %v2873 = vpop.permute.xlu0 %2872
        %2874 = vrot.lane.b32.xlu0 %v2857, 96
        %v2875 = vpop.permute.xlu0 %2874
        %2876 = vrot.lane.b32.xlu0 %v2858, 96
        %v2877 = vpop.permute.xlu0 %2876
        %2878 = vrot.lane.b32.xlu0 %v2859, 96
        %v2879 = vpop.permute.xlu0 %2878
        %2880 = vrot.lane.b32.xlu0 %v2860, 96
        %v2881 = vpop.permute.xlu0 %2880
        %2882 = vrot.lane.b32.xlu0 %v2861, 96
        %v2883 = vpop.permute.xlu0 %2882
        %2884 = vrot.lane.b32.xlu0 %v2862, 96
        %v2885 = vpop.permute.xlu0 %2884
        %2886 = vrot.lane.b32.xlu0 %v2863, 96
        %v2887 = vpop.permute.xlu0 %2886
        %vm2896 = vcmask 917248
        %2897 = vst.msk [vmem:[#allocation6] sm:$0xff] %vm2896, %v2873
        %2898 = vst.msk [vmem:[#allocation6 + $0x10] sm:$0xff] %vm2896, %v2875
        %2899 = vst.msk [vmem:[#allocation6 + $0x20] sm:$0xff] %vm2896, %v2877
        %2900 = vst.msk [vmem:[#allocation6 + $0x30] sm:$0xff] %vm2896, %v2879
        %2901 = vst.msk [vmem:[#allocation6 + $0x40] sm:$0xff] %vm2896, %v2881
        %2902 = vst.msk [vmem:[#allocation6 + $0x50] sm:$0xff] %vm2896, %v2883
        %2903 = vst.msk [vmem:[#allocation6 + $0x60] sm:$0xff] %vm2896, %v2885
        %2904 = vst.msk [vmem:[#allocation6 + $0x70] sm:$0xff] %vm2896, %v2887
        %v2905 = vld [vmem:[%s2855 + $0x1] sm:$0xff]
        %v2906 = vld [vmem:[%s2855 + $0x11] sm:$0xff]
        %v2907 = vld [vmem:[%s2855 + $0x21] sm:$0xff]
        %v2908 = vld [vmem:[%s2855 + $0x31] sm:$0xff]
        %v2909 = vld [vmem:[%s2855 + $0x41] sm:$0xff]
        %v2910 = vld [vmem:[%s2855 + $0x51] sm:$0xff]
        %v2911 = vld [vmem:[%s2855 + $0x61] sm:$0xff]
        %v2912 = vld [vmem:[%s2855 + $0x71] sm:$0xff]
        %2921 = vrot.lane.b32.xlu0 %v2905, 112
        %v2922 = vpop.permute.xlu0 %2921
        %2923 = vrot.lane.b32.xlu0 %v2906, 112
        %v2924 = vpop.permute.xlu0 %2923
        %2925 = vrot.lane.b32.xlu0 %v2907, 112
        %v2926 = vpop.permute.xlu0 %2925
        %2927 = vrot.lane.b32.xlu0 %v2908, 112
        %v2928 = vpop.permute.xlu0 %2927
        %2929 = vrot.lane.b32.xlu0 %v2909, 112
        %v2930 = vpop.permute.xlu0 %2929
        %2931 = vrot.lane.b32.xlu0 %v2910, 112
        %v2932 = vpop.permute.xlu0 %2931
        %2933 = vrot.lane.b32.xlu0 %v2911, 112
        %v2934 = vpop.permute.xlu0 %2933
        %2935 = vrot.lane.b32.xlu0 %v2912, 112
        %v2936 = vpop.permute.xlu0 %2935
        %vm2945 = vcmask 1048448
        %2946 = vst.msk [vmem:[#allocation6] sm:$0xff] %vm2945, %v2922
        %2947 = vst.msk [vmem:[#allocation6 + $0x10] sm:$0xff] %vm2945, %v2924
        %2948 = vst.msk [vmem:[#allocation6 + $0x20] sm:$0xff] %vm2945, %v2926
        %2949 = vst.msk [vmem:[#allocation6 + $0x30] sm:$0xff] %vm2945, %v2928
        %2950 = vst.msk [vmem:[#allocation6 + $0x40] sm:$0xff] %vm2945, %v2930
        %2951 = vst.msk [vmem:[#allocation6 + $0x50] sm:$0xff] %vm2945, %v2932
        %2952 = vst.msk [vmem:[#allocation6 + $0x60] sm:$0xff] %vm2945, %v2934
        %2953 = vst.msk [vmem:[#allocation6 + $0x70] sm:$0xff] %vm2945, %v2936
        %v2954 = vld [vmem:[%s2855 + $0x2] sm:$0xff]
        %v2955 = vld [vmem:[%s2855 + $0x12] sm:$0xff]
        %v2956 = vld [vmem:[%s2855 + $0x22] sm:$0xff]
        %v2957 = vld [vmem:[%s2855 + $0x32] sm:$0xff]
        %v2958 = vld [vmem:[%s2855 + $0x42] sm:$0xff]
        %v2959 = vld [vmem:[%s2855 + $0x52] sm:$0xff]
        %v2960 = vld [vmem:[%s2855 + $0x62] sm:$0xff]
        %v2961 = vld [vmem:[%s2855 + $0x72] sm:$0xff]
        %2962 = vst.msk [vmem:[#allocation6 + $0x8] sm:$0xff] %vm355, %v2954
        %2963 = vst.msk [vmem:[#allocation6 + $0x18] sm:$0xff] %vm355, %v2955
        %2964 = vst.msk [vmem:[#allocation6 + $0x28] sm:$0xff] %vm355, %v2956
        %2965 = vst.msk [vmem:[#allocation6 + $0x38] sm:$0xff] %vm355, %v2957
        %2966 = vst.msk [vmem:[#allocation6 + $0x48] sm:$0xff] %vm355, %v2958
        %2967 = vst.msk [vmem:[#allocation6 + $0x58] sm:$0xff] %vm355, %v2959
        %2968 = vst.msk [vmem:[#allocation6 + $0x68] sm:$0xff] %vm355, %v2960
        %2969 = vst.msk [vmem:[#allocation6 + $0x78] sm:$0xff] %vm355, %v2961
        %v2970 = vld [vmem:[#allocation6] sm:$0xff]
        %v2971 = vld [vmem:[#allocation6 + $0x8] sm:$0xff]
        %v2972 = vld [vmem:[#allocation6 + $0x10] sm:$0xff]
        %v2973 = vld [vmem:[#allocation6 + $0x18] sm:$0xff]
        %v2974 = vld [vmem:[#allocation6 + $0x20] sm:$0xff]
        %v2975 = vld [vmem:[#allocation6 + $0x28] sm:$0xff]
        %v2976 = vld [vmem:[#allocation6 + $0x30] sm:$0xff]
        %v2977 = vld [vmem:[#allocation6 + $0x38] sm:$0xff]
        %v2978 = vld [vmem:[#allocation6 + $0x40] sm:$0xff]
        %v2979 = vld [vmem:[#allocation6 + $0x48] sm:$0xff]
        %v2980 = vld [vmem:[#allocation6 + $0x50] sm:$0xff]
        %v2981 = vld [vmem:[#allocation6 + $0x58] sm:$0xff]
        %v2982 = vld [vmem:[#allocation6 + $0x60] sm:$0xff]
        %v2983 = vld [vmem:[#allocation6 + $0x68] sm:$0xff]
        %v2984 = vld [vmem:[#allocation6 + $0x70] sm:$0xff]
        %v2985 = vld [vmem:[#allocation6 + $0x78] sm:$0xff]
        %v2987 = vlaneseq
        %v2988 = vshrl.u32 %v2987, 7
        %v2989 = vsub.s32 0, %v2988
        %v2990 = vrot.slane %v2593, %v2989
        %v2993 = vsel %vm355, %v2971, 0
        %v2996 = vsel %vm355, %v2973, 0
        %v2999 = vsel %vm355, %v2975, 0
        %v3002 = vsel %vm355, %v2977, 0
        %v3005 = vsel %vm355, %v2979, 0
        %v3008 = vsel %vm355, %v2981, 0
        %v3011 = vsel %vm355, %v2983, 0
        %v3014 = vsel %vm355, %v2985, 0
        %3016 = vmatprep.subr.mxu0 0.0
        %3017 = vmatpush1.msra.mxu0 %v2575
        %3018 = vmatprep.subr.mxu0 0.0
        %3019 = vmatpush1.msra.mxu0 %v2576
        %3020 = vmatprep.subr.mxu0 0.0
        %3021 = vmatpush1.msra.mxu0 %v2577
        %3022 = vmatprep.subr.mxu0 0.0
        %3023 = vmatpush1.msra.mxu0 %v2578
        %3024 = vmatprep.subr.mxu0 0.0
        %3025 = vmatpush1.msra.mxu0 %v2579
        %3026 = vmatprep.subr.mxu0 0.0
        %3027 = vmatpush1.msra.mxu0 %v2580
        %3028 = vmatprep.subr.mxu0 0.0
        %3029 = vmatpush1.msra.mxu0 %v2581
        %3030 = vmatprep.subr.mxu0 0.0
        %3031 = vmatpush1.msra.mxu0 %v2582
        %3032 = vmatprep.subr.mxu0 0.0
        %3033 = vmatpush1.msra.mxu0 %v2583
        %3034 = vmatprep.subr.mxu0 0.0
        %3035 = vmatpush1.msra.mxu0 %v2584
        %3036 = vmatprep.subr.mxu0 0.0
        %3037 = vmatpush1.msra.mxu0 %v2585
        %3038 = vmatprep.subr.mxu0 0.0
        %3039 = vmatpush1.msra.mxu0 %v2586
        %3040 = vmatprep.subr.mxu0 0.0
        %3041 = vmatpush1.msra.mxu0 %v2587
        %3042 = vmatprep.subr.mxu0 0.0
        %3043 = vmatpush1.msra.mxu0 %v2588
        %3044 = vmatprep.subr.mxu0 0.0
        %3045 = vmatpush1.msra.mxu0 %v2589
        %3046 = vmatprep.subr.mxu0 0.0
        %3047 = vmatpush1.msra.mxu0 %v2590
        %3048 = vmatprep.subr.mxu0 0.0
        %3049 = vmatpush1.msra.mxu0 %v2591
        %3050 = vmatprep.subr.mxu0 0.0
        %3051 = vmatpush1.msra.mxu0 %v2592
        %3052 = vmatprep.subr.mxu0 0.0
        %3053 = vmatpush1.msra.mxu0 0.0
        %3054 = vmatprep.subr.mxu0 0.0
        %3055 = vmatpush1.msra.mxu0 0.0
        %3056 = vmatprep.subr.mxu0 0.0
        %3057 = vmatpush1.msra.mxu0 0.0
        %3058 = vmatprep.subr.mxu0 0.0
        %3059 = vmatpush1.msra.mxu0 0.0
        %3060 = vmatprep.subr.mxu0 0.0
        %3061 = vmatpush1.msra.mxu0 0.0
        %3062 = vmatprep.subr.mxu0 0.0
        %3063 = vmatpush1.msra.mxu0 0.0
        %3064 = vmatprep.subr.mxu0 0.0
        %3065 = vmatpush1.msra.mxu0 0.0
        %3066 = vmatprep.subr.mxu0 0.0
        %3067 = vmatpush1.msra.mxu0 0.0
        %3068 = vmatprep.subr.mxu0 0.0
        %3069 = vmatpush1.msra.mxu0 0.0
        %3070 = vmatprep.subr.mxu0 0.0
        %3071 = vmatpush1.msra.mxu0 0.0
        %3072 = vmatprep.subr.mxu0 0.0
        %3073 = vmatpush1.msra.mxu0 0.0
        %3074 = vmatprep.subr.mxu0 0.0
        %3075 = vmatpush1.msra.mxu0 0.0
        %3076 = vmatprep.subr.mxu0 0.0
        %3077 = vmatpush1.msra.mxu0 0.0
        %3078 = vmatprep.subr.mxu0 0.0
        %3079 = vmatpush1.msra.mxu0 0.0
        %3080 = vmatprep.mubr.f32.mxu0 %v2993
        %3081 = vmatmul.mubr.f32.gmra.mrb[0].mxu0 %v2970
        %v3082 = vpop.f32.mrb[0].mxu0
        %v3083 = vadd.f32 %v2990, %v3082
        %v3084 = vpop.f32.mrb[0].mxu0
        %3085 = vmatprep.mubr.f32.mxu0 %v2996
        %3086 = vmatmul.mubr.f32.gmra.mrb[0].mxu0 %v2972
        %v3087 = vpop.f32.mrb[0].mxu0
        %v3088 = vadd.f32 %v2990, %v3087
        %v3089 = vpop.f32.mrb[0].mxu0
        %3090 = vmatprep.mubr.f32.mxu0 %v2999
        %3091 = vmatmul.mubr.f32.gmra.mrb[0].mxu0 %v2974
        %v3092 = vpop.f32.mrb[0].mxu0
        %v3093 = vadd.f32 %v2990, %v3092
        %v3094 = vpop.f32.mrb[0].mxu0
        %3095 = vmatprep.mubr.f32.mxu0 %v3002
        %3096 = vmatmul.mubr.f32.gmra.mrb[0].mxu0 %v2976
        %v3097 = vpop.f32.mrb[0].mxu0
        %v3098 = vadd.f32 %v2990, %v3097
        %v3099 = vpop.f32.mrb[0].mxu0
        %3100 = vmatprep.mubr.f32.mxu0 %v3005
        %3101 = vmatmul.mubr.f32.gmra.mrb[0].mxu0 %v2978
        %v3102 = vpop.f32.mrb[0].mxu0
        %v3103 = vadd.f32 %v2990, %v3102
        %v3104 = vpop.f32.mrb[0].mxu0
        %3105 = vmatprep.mubr.f32.mxu0 %v3008
        %3106 = vmatmul.mubr.f32.gmra.mrb[0].mxu0 %v2980
        %v3107 = vpop.f32.mrb[0].mxu0
        %v3108 = vadd.f32 %v2990, %v3107
        %v3109 = vpop.f32.mrb[0].mxu0
        %3110 = vmatprep.mubr.f32.mxu0 %v3011
        %3111 = vmatmul.mubr.f32.gmra.mrb[0].mxu0 %v2982
        %v3112 = vpop.f32.mrb[0].mxu0
        %v3113 = vadd.f32 %v2990, %v3112
        %v3114 = vpop.f32.mrb[0].mxu0
        %3115 = vmatprep.mubr.f32.mxu0 %v3014
        %3116 = vmatmul.mubr.f32.gmra.mrb[0].mxu0 %v2984
        %v3117 = vpop.f32.mrb[0].mxu0
        %v3118 = vadd.f32 %v2990, %v3117
        %v3119 = vpop.f32.mrb[0].mxu0
        %3120 = vdwg.mxu0
        %v3121 = vmax.f32 %v3083, 0.0
        %v3122 = vmax.f32 %v3088, 0.0
        %v3123 = vmax.f32 %v3093, 0.0
        %v3124 = vmax.f32 %v3098, 0.0
        %v3125 = vmax.f32 %v3103, 0.0
        %v3126 = vmax.f32 %v3108, 0.0
        %v3127 = vmax.f32 %v3113, 0.0
        %v3128 = vmax.f32 %v3118, 0.0
        %3129 = vst.msk [vmem:[%s2566 + $0x1] sm:$0xff] %vm355, %v3121
        %3130 = vst.msk [vmem:[%s2566 + $0x11] sm:$0xff] %vm355, %v3122
        %3131 = vst.msk [vmem:[%s2566 + $0x21] sm:$0xff] %vm355, %v3123
        %3132 = vst.msk [vmem:[%s2566 + $0x31] sm:$0xff] %vm355, %v3124
        %3133 = vst.msk [vmem:[%s2566 + $0x41] sm:$0xff] %vm355, %v3125
        %3134 = vst.msk [vmem:[%s2566 + $0x51] sm:$0xff] %vm355, %v3126
        %3135 = vst.msk [vmem:[%s2566 + $0x61] sm:$0xff] %vm355, %v3127
        %3136 = vst.msk [vmem:[%s2566 + $0x71] sm:$0xff] %vm355, %v3128
        %s3137 = scalar_lea.vmem %s4, 144
        %v3138 = vld [vmem:[%s3137] sm:$0xff]
        %v3139 = vld [vmem:[%s3137 + $0x8] sm:$0xff]
        %v3140 = vld [vmem:[%s3137 + $0x10] sm:$0xff]
        %v3141 = vld [vmem:[%s3137 + $0x18] sm:$0xff]
        %v3142 = vld [vmem:[%s3137 + $0x20] sm:$0xff]
        %v3143 = vld [vmem:[%s3137 + $0x28] sm:$0xff]
        %v3144 = vld [vmem:[%s3137 + $0x30] sm:$0xff]
        %v3145 = vld [vmem:[%s3137 + $0x38] sm:$0xff]
        %v3146 = vld [vmem:[%s3137 + $0x40] sm:$0xff]
        %v3147 = vld [vmem:[%s3137 + $0x48] sm:$0xff]
        %v3148 = vld [vmem:[%s3137 + $0x50] sm:$0xff]
        %v3149 = vld [vmem:[%s3137 + $0x58] sm:$0xff]
        %v3150 = vld [vmem:[%s3137 + $0x60] sm:$0xff]
        %v3151 = vld [vmem:[%s3137 + $0x68] sm:$0xff]
        %v3152 = vld [vmem:[%s3137 + $0x70] sm:$0xff]
        %v3153 = vld [vmem:[%s3137 + $0x78] sm:$0xff]
        %v3154 = vld [vmem:[%s3137 + $0x80] sm:$0xff]
        %v3155 = vld [vmem:[%s3137 + $0x88] sm:$0xff]
        %s3156 = scalar_lea.vmem %s5, 1
        %v3157 = vld [vmem:[%s3156] sm:$0x1]
        %v3158 = vld [vmem:[#allocation4] sm:$0xff]
        %v3159 = vld [vmem:[#allocation4 + $0x10] sm:$0xff]
        %v3160 = vld [vmem:[#allocation4 + $0x20] sm:$0xff]
        %v3161 = vld [vmem:[#allocation4 + $0x30] sm:$0xff]
        %v3162 = vld [vmem:[#allocation4 + $0x40] sm:$0xff]
        %v3163 = vld [vmem:[#allocation4 + $0x50] sm:$0xff]
        %v3164 = vld [vmem:[#allocation4 + $0x60] sm:$0xff]
        %v3165 = vld [vmem:[#allocation4 + $0x70] sm:$0xff]
        %3166 = vst.msk [vmem:[#allocation6] sm:$0xff] %vm355, %v3158
        %3167 = vst.msk [vmem:[#allocation6 + $0x10] sm:$0xff] %vm355, %v3159
        %3168 = vst.msk [vmem:[#allocation6 + $0x20] sm:$0xff] %vm355, %v3160
        %3169 = vst.msk [vmem:[#allocation6 + $0x30] sm:$0xff] %vm355, %v3161
        %3170 = vst.msk [vmem:[#allocation6 + $0x40] sm:$0xff] %vm355, %v3162
        %3171 = vst.msk [vmem:[#allocation6 + $0x50] sm:$0xff] %vm355, %v3163
        %3172 = vst.msk [vmem:[#allocation6 + $0x60] sm:$0xff] %vm355, %v3164
        %3173 = vst.msk [vmem:[#allocation6 + $0x70] sm:$0xff] %vm355, %v3165
        %v3174 = vld [vmem:[#allocation4 + $0x1] sm:$0xff]
        %v3175 = vld [vmem:[#allocation4 + $0x11] sm:$0xff]
        %v3176 = vld [vmem:[#allocation4 + $0x21] sm:$0xff]
        %v3177 = vld [vmem:[#allocation4 + $0x31] sm:$0xff]
        %v3178 = vld [vmem:[#allocation4 + $0x41] sm:$0xff]
        %v3179 = vld [vmem:[#allocation4 + $0x51] sm:$0xff]
        %v3180 = vld [vmem:[#allocation4 + $0x61] sm:$0xff]
        %v3181 = vld [vmem:[#allocation4 + $0x71] sm:$0xff]
        %3190 = vrot.lane.b32.xlu0 %v3174, 16
        %v3191 = vpop.permute.xlu0 %3190
        %3192 = vrot.lane.b32.xlu0 %v3175, 16
        %v3193 = vpop.permute.xlu0 %3192
        %3194 = vrot.lane.b32.xlu0 %v3176, 16
        %v3195 = vpop.permute.xlu0 %3194
        %3196 = vrot.lane.b32.xlu0 %v3177, 16
        %v3197 = vpop.permute.xlu0 %3196
        %3198 = vrot.lane.b32.xlu0 %v3178, 16
        %v3199 = vpop.permute.xlu0 %3198
        %3200 = vrot.lane.b32.xlu0 %v3179, 16
        %v3201 = vpop.permute.xlu0 %3200
        %3202 = vrot.lane.b32.xlu0 %v3180, 16
        %v3203 = vpop.permute.xlu0 %3202
        %3204 = vrot.lane.b32.xlu0 %v3181, 16
        %v3205 = vpop.permute.xlu0 %3204
        %3214 = vst.msk [vmem:[#allocation6] sm:$0xff] %vm2650, %v3191
        %3215 = vst.msk [vmem:[#allocation6 + $0x10] sm:$0xff] %vm2650, %v3193
        %3216 = vst.msk [vmem:[#allocation6 + $0x20] sm:$0xff] %vm2650, %v3195
        %3217 = vst.msk [vmem:[#allocation6 + $0x30] sm:$0xff] %vm2650, %v3197
        %3218 = vst.msk [vmem:[#allocation6 + $0x40] sm:$0xff] %vm2650, %v3199
        %3219 = vst.msk [vmem:[#allocation6 + $0x50] sm:$0xff] %vm2650, %v3201
        %3220 = vst.msk [vmem:[#allocation6 + $0x60] sm:$0xff] %vm2650, %v3203
        %3221 = vst.msk [vmem:[#allocation6 + $0x70] sm:$0xff] %vm2650, %v3205
        %v3222 = vld [vmem:[#allocation4 + $0x2] sm:$0xff]
        %v3223 = vld [vmem:[#allocation4 + $0x12] sm:$0xff]
        %v3224 = vld [vmem:[#allocation4 + $0x22] sm:$0xff]
        %v3225 = vld [vmem:[#allocation4 + $0x32] sm:$0xff]
        %v3226 = vld [vmem:[#allocation4 + $0x42] sm:$0xff]
        %v3227 = vld [vmem:[#allocation4 + $0x52] sm:$0xff]
        %v3228 = vld [vmem:[#allocation4 + $0x62] sm:$0xff]
        %v3229 = vld [vmem:[#allocation4 + $0x72] sm:$0xff]
        %3238 = vrot.lane.b32.xlu0 %v3222, 32
        %v3239 = vpop.permute.xlu0 %3238
        %3240 = vrot.lane.b32.xlu0 %v3223, 32
        %v3241 = vpop.permute.xlu0 %3240
        %3242 = vrot.lane.b32.xlu0 %v3224, 32
        %v3243 = vpop.permute.xlu0 %3242
        %3244 = vrot.lane.b32.xlu0 %v3225, 32
        %v3245 = vpop.permute.xlu0 %3244
        %3246 = vrot.lane.b32.xlu0 %v3226, 32
        %v3247 = vpop.permute.xlu0 %3246
        %3248 = vrot.lane.b32.xlu0 %v3227, 32
        %v3249 = vpop.permute.xlu0 %3248
        %3250 = vrot.lane.b32.xlu0 %v3228, 32
        %v3251 = vpop.permute.xlu0 %3250
        %3252 = vrot.lane.b32.xlu0 %v3229, 32
        %v3253 = vpop.permute.xlu0 %3252
        %3262 = vst.msk [vmem:[#allocation6] sm:$0xff] %vm2699, %v3239
        %3263 = vst.msk [vmem:[#allocation6 + $0x10] sm:$0xff] %vm2699, %v3241
        %3264 = vst.msk [vmem:[#allocation6 + $0x20] sm:$0xff] %vm2699, %v3243
        %3265 = vst.msk [vmem:[#allocation6 + $0x30] sm:$0xff] %vm2699, %v3245
        %3266 = vst.msk [vmem:[#allocation6 + $0x40] sm:$0xff] %vm2699, %v3247
        %3267 = vst.msk [vmem:[#allocation6 + $0x50] sm:$0xff] %vm2699, %v3249
        %3268 = vst.msk [vmem:[#allocation6 + $0x60] sm:$0xff] %vm2699, %v3251
        %3269 = vst.msk [vmem:[#allocation6 + $0x70] sm:$0xff] %vm2699, %v3253
        %v3270 = vld [vmem:[%s2566] sm:$0xff]
        %v3271 = vld [vmem:[%s2566 + $0x10] sm:$0xff]
        %v3272 = vld [vmem:[%s2566 + $0x20] sm:$0xff]
        %v3273 = vld [vmem:[%s2566 + $0x30] sm:$0xff]
        %v3274 = vld [vmem:[%s2566 + $0x40] sm:$0xff]
        %v3275 = vld [vmem:[%s2566 + $0x50] sm:$0xff]
        %v3276 = vld [vmem:[%s2566 + $0x60] sm:$0xff]
        %v3277 = vld [vmem:[%s2566 + $0x70] sm:$0xff]
        %3286 = vrot.lane.b32.xlu0 %v3270, 48
        %v3287 = vpop.permute.xlu0 %3286
        %3288 = vrot.lane.b32.xlu0 %v3271, 48
        %v3289 = vpop.permute.xlu0 %3288
        %3290 = vrot.lane.b32.xlu0 %v3272, 48
        %v3291 = vpop.permute.xlu0 %3290
        %3292 = vrot.lane.b32.xlu0 %v3273, 48
        %v3293 = vpop.permute.xlu0 %3292
        %3294 = vrot.lane.b32.xlu0 %v3274, 48
        %v3295 = vpop.permute.xlu0 %3294
        %3296 = vrot.lane.b32.xlu0 %v3275, 48
        %v3297 = vpop.permute.xlu0 %3296
        %3298 = vrot.lane.b32.xlu0 %v3276, 48
        %v3299 = vpop.permute.xlu0 %3298
        %3300 = vrot.lane.b32.xlu0 %v3277, 48
        %v3301 = vpop.permute.xlu0 %3300
        %3310 = vst.msk [vmem:[#allocation6] sm:$0xff] %vm2748, %v3287
        %3311 = vst.msk [vmem:[#allocation6 + $0x10] sm:$0xff] %vm2748, %v3289
        %3312 = vst.msk [vmem:[#allocation6 + $0x20] sm:$0xff] %vm2748, %v3291
        %3313 = vst.msk [vmem:[#allocation6 + $0x30] sm:$0xff] %vm2748, %v3293
        %3314 = vst.msk [vmem:[#allocation6 + $0x40] sm:$0xff] %vm2748, %v3295
        %3315 = vst.msk [vmem:[#allocation6 + $0x50] sm:$0xff] %vm2748, %v3297
        %3316 = vst.msk [vmem:[#allocation6 + $0x60] sm:$0xff] %vm2748, %v3299
        %3317 = vst.msk [vmem:[#allocation6 + $0x70] sm:$0xff] %vm2748, %v3301
        %v3318 = vld [vmem:[%s2566 + $0x1] sm:$0xff]
        %v3319 = vld [vmem:[%s2566 + $0x11] sm:$0xff]
        %v3320 = vld [vmem:[%s2566 + $0x21] sm:$0xff]
        %v3321 = vld [vmem:[%s2566 + $0x31] sm:$0xff]
        %v3322 = vld [vmem:[%s2566 + $0x41] sm:$0xff]
        %v3323 = vld [vmem:[%s2566 + $0x51] sm:$0xff]
        %v3324 = vld [vmem:[%s2566 + $0x61] sm:$0xff]
        %v3325 = vld [vmem:[%s2566 + $0x71] sm:$0xff]
        %3334 = vrot.lane.b32.xlu0 %v3318, 64
        %v3335 = vpop.permute.xlu0 %3334
        %3336 = vrot.lane.b32.xlu0 %v3319, 64
        %v3337 = vpop.permute.xlu0 %3336
        %3338 = vrot.lane.b32.xlu0 %v3320, 64
        %v3339 = vpop.permute.xlu0 %3338
        %3340 = vrot.lane.b32.xlu0 %v3321, 64
        %v3341 = vpop.permute.xlu0 %3340
        %3342 = vrot.lane.b32.xlu0 %v3322, 64
        %v3343 = vpop.permute.xlu0 %3342
        %3344 = vrot.lane.b32.xlu0 %v3323, 64
        %v3345 = vpop.permute.xlu0 %3344
        %3346 = vrot.lane.b32.xlu0 %v3324, 64
        %v3347 = vpop.permute.xlu0 %3346
        %3348 = vrot.lane.b32.xlu0 %v3325, 64
        %v3349 = vpop.permute.xlu0 %3348
        %3358 = vst.msk [vmem:[#allocation6] sm:$0xff] %vm2797, %v3335
        %3359 = vst.msk [vmem:[#allocation6 + $0x10] sm:$0xff] %vm2797, %v3337
        %3360 = vst.msk [vmem:[#allocation6 + $0x20] sm:$0xff] %vm2797, %v3339
        %3361 = vst.msk [vmem:[#allocation6 + $0x30] sm:$0xff] %vm2797, %v3341
        %3362 = vst.msk [vmem:[#allocation6 + $0x40] sm:$0xff] %vm2797, %v3343
        %3363 = vst.msk [vmem:[#allocation6 + $0x50] sm:$0xff] %vm2797, %v3345
        %3364 = vst.msk [vmem:[#allocation6 + $0x60] sm:$0xff] %vm2797, %v3347
        %3365 = vst.msk [vmem:[#allocation6 + $0x70] sm:$0xff] %vm2797, %v3349
        %v3366 = vld [vmem:[%s2566 + $0x2] sm:$0xff]
        %v3367 = vld [vmem:[%s2566 + $0x12] sm:$0xff]
        %v3368 = vld [vmem:[%s2566 + $0x22] sm:$0xff]
        %v3369 = vld [vmem:[%s2566 + $0x32] sm:$0xff]
        %v3370 = vld [vmem:[%s2566 + $0x42] sm:$0xff]
        %v3371 = vld [vmem:[%s2566 + $0x52] sm:$0xff]
        %v3372 = vld [vmem:[%s2566 + $0x62] sm:$0xff]
        %v3373 = vld [vmem:[%s2566 + $0x72] sm:$0xff]
        %3382 = vrot.lane.b32.xlu0 %v3366, 80
        %v3383 = vpop.permute.xlu0 %3382
        %3384 = vrot.lane.b32.xlu0 %v3367, 80
        %v3385 = vpop.permute.xlu0 %3384
        %3386 = vrot.lane.b32.xlu0 %v3368, 80
        %v3387 = vpop.permute.xlu0 %3386
        %3388 = vrot.lane.b32.xlu0 %v3369, 80
        %v3389 = vpop.permute.xlu0 %3388
        %3390 = vrot.lane.b32.xlu0 %v3370, 80
        %v3391 = vpop.permute.xlu0 %3390
        %3392 = vrot.lane.b32.xlu0 %v3371, 80
        %v3393 = vpop.permute.xlu0 %3392
        %3394 = vrot.lane.b32.xlu0 %v3372, 80
        %v3395 = vpop.permute.xlu0 %3394
        %3396 = vrot.lane.b32.xlu0 %v3373, 80
        %v3397 = vpop.permute.xlu0 %3396
        %3406 = vst.msk [vmem:[#allocation6] sm:$0xff] %vm2846, %v3383
        %3407 = vst.msk [vmem:[#allocation6 + $0x10] sm:$0xff] %vm2846, %v3385
        %3408 = vst.msk [vmem:[#allocation6 + $0x20] sm:$0xff] %vm2846, %v3387
        %3409 = vst.msk [vmem:[#allocation6 + $0x30] sm:$0xff] %vm2846, %v3389
        %3410 = vst.msk [vmem:[#allocation6 + $0x40] sm:$0xff] %vm2846, %v3391
        %3411 = vst.msk [vmem:[#allocation6 + $0x50] sm:$0xff] %vm2846, %v3393
        %3412 = vst.msk [vmem:[#allocation6 + $0x60] sm:$0xff] %vm2846, %v3395
        %3413 = vst.msk [vmem:[#allocation6 + $0x70] sm:$0xff] %vm2846, %v3397
        %v3414 = vld [vmem:[%s2855] sm:$0xff]
        %v3415 = vld [vmem:[%s2855 + $0x10] sm:$0xff]
        %v3416 = vld [vmem:[%s2855 + $0x20] sm:$0xff]
        %v3417 = vld [vmem:[%s2855 + $0x30] sm:$0xff]
        %v3418 = vld [vmem:[%s2855 + $0x40] sm:$0xff]
        %v3419 = vld [vmem:[%s2855 + $0x50] sm:$0xff]
        %v3420 = vld [vmem:[%s2855 + $0x60] sm:$0xff]
        %v3421 = vld [vmem:[%s2855 + $0x70] sm:$0xff]
        %3430 = vrot.lane.b32.xlu0 %v3414, 96
        %v3431 = vpop.permute.xlu0 %3430
        %3432 = vrot.lane.b32.xlu0 %v3415, 96
        %v3433 = vpop.permute.xlu0 %3432
        %3434 = vrot.lane.b32.xlu0 %v3416, 96
        %v3435 = vpop.permute.xlu0 %3434
        %3436 = vrot.lane.b32.xlu0 %v3417, 96
        %v3437 = vpop.permute.xlu0 %3436
        %3438 = vrot.lane.b32.xlu0 %v3418, 96
        %v3439 = vpop.permute.xlu0 %3438
        %3440 = vrot.lane.b32.xlu0 %v3419, 96
        %v3441 = vpop.permute.xlu0 %3440
        %3442 = vrot.lane.b32.xlu0 %v3420, 96
        %v3443 = vpop.permute.xlu0 %3442
        %3444 = vrot.lane.b32.xlu0 %v3421, 96
        %v3445 = vpop.permute.xlu0 %3444
        %3454 = vst.msk [vmem:[#allocation6] sm:$0xff] %vm2896, %v3431
        %3455 = vst.msk [vmem:[#allocation6 + $0x10] sm:$0xff] %vm2896, %v3433
        %3456 = vst.msk [vmem:[#allocation6 + $0x20] sm:$0xff] %vm2896, %v3435
        %3457 = vst.msk [vmem:[#allocation6 + $0x30] sm:$0xff] %vm2896, %v3437
        %3458 = vst.msk [vmem:[#allocation6 + $0x40] sm:$0xff] %vm2896, %v3439
        %3459 = vst.msk [vmem:[#allocation6 + $0x50] sm:$0xff] %vm2896, %v3441
        %3460 = vst.msk [vmem:[#allocation6 + $0x60] sm:$0xff] %vm2896, %v3443
        %3461 = vst.msk [vmem:[#allocation6 + $0x70] sm:$0xff] %vm2896, %v3445
        %v3462 = vld [vmem:[%s2855 + $0x1] sm:$0xff]
        %v3463 = vld [vmem:[%s2855 + $0x11] sm:$0xff]
        %v3464 = vld [vmem:[%s2855 + $0x21] sm:$0xff]
        %v3465 = vld [vmem:[%s2855 + $0x31] sm:$0xff]
        %v3466 = vld [vmem:[%s2855 + $0x41] sm:$0xff]
        %v3467 = vld [vmem:[%s2855 + $0x51] sm:$0xff]
        %v3468 = vld [vmem:[%s2855 + $0x61] sm:$0xff]
        %v3469 = vld [vmem:[%s2855 + $0x71] sm:$0xff]
        %3478 = vrot.lane.b32.xlu0 %v3462, 112
        %v3479 = vpop.permute.xlu0 %3478
        %3480 = vrot.lane.b32.xlu0 %v3463, 112
        %v3481 = vpop.permute.xlu0 %3480
        %3482 = vrot.lane.b32.xlu0 %v3464, 112
        %v3483 = vpop.permute.xlu0 %3482
        %3484 = vrot.lane.b32.xlu0 %v3465, 112
        %v3485 = vpop.permute.xlu0 %3484
        %3486 = vrot.lane.b32.xlu0 %v3466, 112
        %v3487 = vpop.permute.xlu0 %3486
        %3488 = vrot.lane.b32.xlu0 %v3467, 112
        %v3489 = vpop.permute.xlu0 %3488
        %3490 = vrot.lane.b32.xlu0 %v3468, 112
        %v3491 = vpop.permute.xlu0 %3490
        %3492 = vrot.lane.b32.xlu0 %v3469, 112
        %v3493 = vpop.permute.xlu0 %3492
        %3502 = vst.msk [vmem:[#allocation6] sm:$0xff] %vm2945, %v3479
        %3503 = vst.msk [vmem:[#allocation6 + $0x10] sm:$0xff] %vm2945, %v3481
        %3504 = vst.msk [vmem:[#allocation6 + $0x20] sm:$0xff] %vm2945, %v3483
        %3505 = vst.msk [vmem:[#allocation6 + $0x30] sm:$0xff] %vm2945, %v3485
        %3506 = vst.msk [vmem:[#allocation6 + $0x40] sm:$0xff] %vm2945, %v3487
        %3507 = vst.msk [vmem:[#allocation6 + $0x50] sm:$0xff] %vm2945, %v3489
        %3508 = vst.msk [vmem:[#allocation6 + $0x60] sm:$0xff] %vm2945, %v3491
        %3509 = vst.msk [vmem:[#allocation6 + $0x70] sm:$0xff] %vm2945, %v3493
        %v3510 = vld [vmem:[%s2855 + $0x2] sm:$0xff]
        %v3511 = vld [vmem:[%s2855 + $0x12] sm:$0xff]
        %v3512 = vld [vmem:[%s2855 + $0x22] sm:$0xff]
        %v3513 = vld [vmem:[%s2855 + $0x32] sm:$0xff]
        %v3514 = vld [vmem:[%s2855 + $0x42] sm:$0xff]
        %v3515 = vld [vmem:[%s2855 + $0x52] sm:$0xff]
        %v3516 = vld [vmem:[%s2855 + $0x62] sm:$0xff]
        %v3517 = vld [vmem:[%s2855 + $0x72] sm:$0xff]
        %3518 = vst.msk [vmem:[#allocation6 + $0x8] sm:$0xff] %vm355, %v3510
        %3519 = vst.msk [vmem:[#allocation6 + $0x18] sm:$0xff] %vm355, %v3511
        %3520 = vst.msk [vmem:[#allocation6 + $0x28] sm:$0xff] %vm355, %v3512
        %3521 = vst.msk [vmem:[#allocation6 + $0x38] sm:$0xff] %vm355, %v3513
        %3522 = vst.msk [vmem:[#allocation6 + $0x48] sm:$0xff] %vm355, %v3514
        %3523 = vst.msk [vmem:[#allocation6 + $0x58] sm:$0xff] %vm355, %v3515
        %3524 = vst.msk [vmem:[#allocation6 + $0x68] sm:$0xff] %vm355, %v3516
        %3525 = vst.msk [vmem:[#allocation6 + $0x78] sm:$0xff] %vm355, %v3517
        %v3526 = vld [vmem:[#allocation6] sm:$0xff]
        %v3527 = vld [vmem:[#allocation6 + $0x8] sm:$0xff]
        %v3528 = vld [vmem:[#allocation6 + $0x10] sm:$0xff]
        %v3529 = vld [vmem:[#allocation6 + $0x18] sm:$0xff]
        %v3530 = vld [vmem:[#allocation6 + $0x20] sm:$0xff]
        %v3531 = vld [vmem:[#allocation6 + $0x28] sm:$0xff]
        %v3532 = vld [vmem:[#allocation6 + $0x30] sm:$0xff]
        %v3533 = vld [vmem:[#allocation6 + $0x38] sm:$0xff]
        %v3534 = vld [vmem:[#allocation6 + $0x40] sm:$0xff]
        %v3535 = vld [vmem:[#allocation6 + $0x48] sm:$0xff]
        %v3536 = vld [vmem:[#allocation6 + $0x50] sm:$0xff]
        %v3537 = vld [vmem:[#allocation6 + $0x58] sm:$0xff]
        %v3538 = vld [vmem:[#allocation6 + $0x60] sm:$0xff]
        %v3539 = vld [vmem:[#allocation6 + $0x68] sm:$0xff]
        %v3540 = vld [vmem:[#allocation6 + $0x70] sm:$0xff]
        %v3541 = vld [vmem:[#allocation6 + $0x78] sm:$0xff]
        %v3543 = vlaneseq
        %v3544 = vshrl.u32 %v3543, 7
        %v3545 = vsub.s32 0, %v3544
        %v3546 = vrot.slane %v3157, %v3545
        %v3549 = vsel %vm355, %v3527, 0
        %v3552 = vsel %vm355, %v3529, 0
        %v3555 = vsel %vm355, %v3531, 0
        %v3558 = vsel %vm355, %v3533, 0
        %v3561 = vsel %vm355, %v3535, 0
        %v3564 = vsel %vm355, %v3537, 0
        %v3567 = vsel %vm355, %v3539, 0
        %v3570 = vsel %vm355, %v3541, 0
        %3572 = vmatprep.subr.mxu0 0.0
        %3573 = vmatpush1.msra.mxu0 %v3138
        %3574 = vmatprep.subr.mxu0 0.0
        %3575 = vmatpush1.msra.mxu0 %v3139
        %3576 = vmatprep.subr.mxu0 0.0
        %3577 = vmatpush1.msra.mxu0 %v3140
        %3578 = vmatprep.subr.mxu0 0.0
        %3579 = vmatpush1.msra.mxu0 %v3141
        %3580 = vmatprep.subr.mxu0 0.0
        %3581 = vmatpush1.msra.mxu0 %v3142
        %3582 = vmatprep.subr.mxu0 0.0
        %3583 = vmatpush1.msra.mxu0 %v3143
        %3584 = vmatprep.subr.mxu0 0.0
        %3585 = vmatpush1.msra.mxu0 %v3144
        %3586 = vmatprep.subr.mxu0 0.0
        %3587 = vmatpush1.msra.mxu0 %v3145
        %3588 = vmatprep.subr.mxu0 0.0
        %3589 = vmatpush1.msra.mxu0 %v3146
        %3590 = vmatprep.subr.mxu0 0.0
        %3591 = vmatpush1.msra.mxu0 %v3147
        %3592 = vmatprep.subr.mxu0 0.0
        %3593 = vmatpush1.msra.mxu0 %v3148
        %3594 = vmatprep.subr.mxu0 0.0
        %3595 = vmatpush1.msra.mxu0 %v3149
        %3596 = vmatprep.subr.mxu0 0.0
        %3597 = vmatpush1.msra.mxu0 %v3150
        %3598 = vmatprep.subr.mxu0 0.0
        %3599 = vmatpush1.msra.mxu0 %v3151
        %3600 = vmatprep.subr.mxu0 0.0
        %3601 = vmatpush1.msra.mxu0 %v3152
        %3602 = vmatprep.subr.mxu0 0.0
        %3603 = vmatpush1.msra.mxu0 %v3153
        %3604 = vmatprep.subr.mxu0 0.0
        %3605 = vmatpush1.msra.mxu0 %v3154
        %3606 = vmatprep.subr.mxu0 0.0
        %3607 = vmatpush1.msra.mxu0 %v3155
        %3608 = vmatprep.subr.mxu0 0.0
        %3609 = vmatpush1.msra.mxu0 0.0
        %3610 = vmatprep.subr.mxu0 0.0
        %3611 = vmatpush1.msra.mxu0 0.0
        %3612 = vmatprep.subr.mxu0 0.0
        %3613 = vmatpush1.msra.mxu0 0.0
        %3614 = vmatprep.subr.mxu0 0.0
        %3615 = vmatpush1.msra.mxu0 0.0
        %3616 = vmatprep.subr.mxu0 0.0
        %3617 = vmatpush1.msra.mxu0 0.0
        %3618 = vmatprep.subr.mxu0 0.0
        %3619 = vmatpush1.msra.mxu0 0.0
        %3620 = vmatprep.subr.mxu0 0.0
        %3621 = vmatpush1.msra.mxu0 0.0
        %3622 = vmatprep.subr.mxu0 0.0
        %3623 = vmatpush1.msra.mxu0 0.0
        %3624 = vmatprep.subr.mxu0 0.0
        %3625 = vmatpush1.msra.mxu0 0.0
        %3626 = vmatprep.subr.mxu0 0.0
        %3627 = vmatpush1.msra.mxu0 0.0
        %3628 = vmatprep.subr.mxu0 0.0
        %3629 = vmatpush1.msra.mxu0 0.0
        %3630 = vmatprep.subr.mxu0 0.0
        %3631 = vmatpush1.msra.mxu0 0.0
        %3632 = vmatprep.subr.mxu0 0.0
        %3633 = vmatpush1.msra.mxu0 0.0
        %3634 = vmatprep.subr.mxu0 0.0
        %3635 = vmatpush1.msra.mxu0 0.0
        %3636 = vmatprep.mubr.f32.mxu0 %v3549
        %3637 = vmatmul.mubr.f32.gmra.mrb[0].mxu0 %v3526
        %v3638 = vpop.f32.mrb[0].mxu0
        %v3639 = vadd.f32 %v3546, %v3638
        %v3640 = vpop.f32.mrb[0].mxu0
        %3641 = vmatprep.mubr.f32.mxu0 %v3552
        %3642 = vmatmul.mubr.f32.gmra.mrb[0].mxu0 %v3528
        %v3643 = vpop.f32.mrb[0].mxu0
        %v3644 = vadd.f32 %v3546, %v3643
        %v3645 = vpop.f32.mrb[0].mxu0
        %3646 = vmatprep.mubr.f32.mxu0 %v3555
        %3647 = vmatmul.mubr.f32.gmra.mrb[0].mxu0 %v3530
        %v3648 = vpop.f32.mrb[0].mxu0
        %v3649 = vadd.f32 %v3546, %v3648
        %v3650 = vpop.f32.mrb[0].mxu0
        %3651 = vmatprep.mubr.f32.mxu0 %v3558
        %3652 = vmatmul.mubr.f32.gmra.mrb[0].mxu0 %v3532
        %v3653 = vpop.f32.mrb[0].mxu0
        %v3654 = vadd.f32 %v3546, %v3653
        %v3655 = vpop.f32.mrb[0].mxu0
        %3656 = vmatprep.mubr.f32.mxu0 %v3561
        %3657 = vmatmul.mubr.f32.gmra.mrb[0].mxu0 %v3534
        %v3658 = vpop.f32.mrb[0].mxu0
        %v3659 = vadd.f32 %v3546, %v3658
        %v3660 = vpop.f32.mrb[0].mxu0
        %3661 = vmatprep.mubr.f32.mxu0 %v3564
        %3662 = vmatmul.mubr.f32.gmra.mrb[0].mxu0 %v3536
        %v3663 = vpop.f32.mrb[0].mxu0
        %v3664 = vadd.f32 %v3546, %v3663
        %v3665 = vpop.f32.mrb[0].mxu0
        %3666 = vmatprep.mubr.f32.mxu0 %v3567
        %3667 = vmatmul.mubr.f32.gmra.mrb[0].mxu0 %v3538
        %v3668 = vpop.f32.mrb[0].mxu0
        %v3669 = vadd.f32 %v3546, %v3668
        %v3670 = vpop.f32.mrb[0].mxu0
        %3671 = vmatprep.mubr.f32.mxu0 %v3570
        %3672 = vmatmul.mubr.f32.gmra.mrb[0].mxu0 %v3540
        %v3673 = vpop.f32.mrb[0].mxu0
        %v3674 = vadd.f32 %v3546, %v3673
        %v3675 = vpop.f32.mrb[0].mxu0
        %3676 = vdwg.mxu0
        %v3677 = vld [vmem:[#allocation8] sm:$0xff]
        %v3678 = vld [vmem:[#allocation8 + $0x8] sm:$0xff]
        %v3679 = vld [vmem:[#allocation8 + $0x10] sm:$0xff]
        %v3680 = vld [vmem:[#allocation8 + $0x18] sm:$0xff]
        %v3681 = vld [vmem:[#allocation8 + $0x20] sm:$0xff]
        %v3682 = vld [vmem:[#allocation8 + $0x28] sm:$0xff]
        %v3683 = vld [vmem:[#allocation8 + $0x30] sm:$0xff]
        %v3684 = vld [vmem:[#allocation8 + $0x38] sm:$0xff]
        %v3685 = vadd.f32 %v3677, %v3639
        %v3686 = vadd.f32 %v3678, %v3644
        %v3687 = vadd.f32 %v3679, %v3649
        %v3688 = vadd.f32 %v3680, %v3654
        %v3689 = vadd.f32 %v3681, %v3659
        %v3690 = vadd.f32 %v3682, %v3664
        %v3691 = vadd.f32 %v3683, %v3669
        %v3692 = vadd.f32 %v3684, %v3674
        %3693 = vst.msk [vmem:[#allocation8] sm:$0xff] %vm355, %v3685
        %3694 = vst.msk [vmem:[#allocation8 + $0x8] sm:$0xff] %vm355, %v3686
        %3695 = vst.msk [vmem:[#allocation8 + $0x10] sm:$0xff] %vm355, %v3687
        %3696 = vst.msk [vmem:[#allocation8 + $0x18] sm:$0xff] %vm355, %v3688
        %3697 = vst.msk [vmem:[#allocation8 + $0x20] sm:$0xff] %vm355, %v3689
        %3698 = vst.msk [vmem:[#allocation8 + $0x28] sm:$0xff] %vm355, %v3690
        %3699 = vst.msk [vmem:[#allocation8 + $0x30] sm:$0xff] %vm355, %v3691
        %3700 = vst.msk [vmem:[#allocation8 + $0x38] sm:$0xff] %vm355, %v3692
        %v3701 = vld [vmem:[#allocation8] sm:$0xff]
        %v3702 = vld [vmem:[#allocation8 + $0x8] sm:$0xff]
        %v3703 = vld [vmem:[#allocation8 + $0x10] sm:$0xff]
        %v3704 = vld [vmem:[#allocation8 + $0x18] sm:$0xff]
        %v3705 = vld [vmem:[#allocation8 + $0x20] sm:$0xff]
        %v3706 = vld [vmem:[#allocation8 + $0x28] sm:$0xff]
        %v3707 = vld [vmem:[#allocation8 + $0x30] sm:$0xff]
        %v3708 = vld [vmem:[#allocation8 + $0x38] sm:$0xff]
        %v3709 = vmax.f32 %v3701, 0.0
        %v3710 = vmax.f32 %v3702, 0.0
        %v3711 = vmax.f32 %v3703, 0.0
        %v3712 = vmax.f32 %v3704, 0.0
        %v3713 = vmax.f32 %v3705, 0.0
        %v3714 = vmax.f32 %v3706, 0.0
        %v3715 = vmax.f32 %v3707, 0.0
        %v3716 = vmax.f32 %v3708, 0.0
        %3717 = vst.msk [vmem:[%s2566 + $0x1] sm:$0xff] %vm355, %v3709
        %3718 = vst.msk [vmem:[%s2566 + $0x11] sm:$0xff] %vm355, %v3710
        %3719 = vst.msk [vmem:[%s2566 + $0x21] sm:$0xff] %vm355, %v3711
        %3720 = vst.msk [vmem:[%s2566 + $0x31] sm:$0xff] %vm355, %v3712
        %3721 = vst.msk [vmem:[%s2566 + $0x41] sm:$0xff] %vm355, %v3713
        %3722 = vst.msk [vmem:[%s2566 + $0x51] sm:$0xff] %vm355, %v3714
        %3723 = vst.msk [vmem:[%s2566 + $0x61] sm:$0xff] %vm355, %v3715
        %3724 = vst.msk [vmem:[%s2566 + $0x71] sm:$0xff] %vm355, %v3716
        %s3725 = scalar_lea.vmem %s4, 288
        %v3726 = vld [vmem:[%s3725] sm:$0xff]
        %v3727 = vld [vmem:[%s3725 + $0x8] sm:$0xff]
        %v3728 = vld [vmem:[%s3725 + $0x10] sm:$0xff]
        %v3729 = vld [vmem:[%s3725 + $0x18] sm:$0xff]
        %v3730 = vld [vmem:[%s3725 + $0x20] sm:$0xff]
        %v3731 = vld [vmem:[%s3725 + $0x28] sm:$0xff]
        %v3732 = vld [vmem:[%s3725 + $0x30] sm:$0xff]
        %v3733 = vld [vmem:[%s3725 + $0x38] sm:$0xff]
        %v3734 = vld [vmem:[%s3725 + $0x40] sm:$0xff]
        %v3735 = vld [vmem:[%s3725 + $0x48] sm:$0xff]
        %v3736 = vld [vmem:[%s3725 + $0x50] sm:$0xff]
        %v3737 = vld [vmem:[%s3725 + $0x58] sm:$0xff]
        %v3738 = vld [vmem:[%s3725 + $0x60] sm:$0xff]
        %v3739 = vld [vmem:[%s3725 + $0x68] sm:$0xff]
        %v3740 = vld [vmem:[%s3725 + $0x70] sm:$0xff]
        %v3741 = vld [vmem:[%s3725 + $0x78] sm:$0xff]
        %v3742 = vld [vmem:[%s3725 + $0x80] sm:$0xff]
        %v3743 = vld [vmem:[%s3725 + $0x88] sm:$0xff]
        %s3744 = scalar_lea.vmem %s5, 2
        %v3745 = vld [vmem:[%s3744] sm:$0x1]
        %v3746 = vld [vmem:[#allocation4] sm:$0xff]
        %v3747 = vld [vmem:[#allocation4 + $0x10] sm:$0xff]
        %v3748 = vld [vmem:[#allocation4 + $0x20] sm:$0xff]
        %v3749 = vld [vmem:[#allocation4 + $0x30] sm:$0xff]
        %v3750 = vld [vmem:[#allocation4 + $0x40] sm:$0xff]
        %v3751 = vld [vmem:[#allocation4 + $0x50] sm:$0xff]
        %v3752 = vld [vmem:[#allocation4 + $0x60] sm:$0xff]
        %v3753 = vld [vmem:[#allocation4 + $0x70] sm:$0xff]
        %3754 = vst.msk [vmem:[#allocation6] sm:$0xff] %vm355, %v3746
        %3755 = vst.msk [vmem:[#allocation6 + $0x10] sm:$0xff] %vm355, %v3747
        %3756 = vst.msk [vmem:[#allocation6 + $0x20] sm:$0xff] %vm355, %v3748
        %3757 = vst.msk [vmem:[#allocation6 + $0x30] sm:$0xff] %vm355, %v3749
        %3758 = vst.msk [vmem:[#allocation6 + $0x40] sm:$0xff] %vm355, %v3750
        %3759 = vst.msk [vmem:[#allocation6 + $0x50] sm:$0xff] %vm355, %v3751
        %3760 = vst.msk [vmem:[#allocation6 + $0x60] sm:$0xff] %vm355, %v3752
        %3761 = vst.msk [vmem:[#allocation6 + $0x70] sm:$0xff] %vm355, %v3753
        %v3762 = vld [vmem:[#allocation4 + $0x1] sm:$0xff]
        %v3763 = vld [vmem:[#allocation4 + $0x11] sm:$0xff]
        %v3764 = vld [vmem:[#allocation4 + $0x21] sm:$0xff]
        %v3765 = vld [vmem:[#allocation4 + $0x31] sm:$0xff]
        %v3766 = vld [vmem:[#allocation4 + $0x41] sm:$0xff]
        %v3767 = vld [vmem:[#allocation4 + $0x51] sm:$0xff]
        %v3768 = vld [vmem:[#allocation4 + $0x61] sm:$0xff]
        %v3769 = vld [vmem:[#allocation4 + $0x71] sm:$0xff]
        %3778 = vrot.lane.b32.xlu0 %v3762, 16
        %v3779 = vpop.permute.xlu0 %3778
        %3780 = vrot.lane.b32.xlu0 %v3763, 16
        %v3781 = vpop.permute.xlu0 %3780
        %3782 = vrot.lane.b32.xlu0 %v3764, 16
        %v3783 = vpop.permute.xlu0 %3782
        %3784 = vrot.lane.b32.xlu0 %v3765, 16
        %v3785 = vpop.permute.xlu0 %3784
        %3786 = vrot.lane.b32.xlu0 %v3766, 16
        %v3787 = vpop.permute.xlu0 %3786
        %3788 = vrot.lane.b32.xlu0 %v3767, 16
        %v3789 = vpop.permute.xlu0 %3788
        %3790 = vrot.lane.b32.xlu0 %v3768, 16
        %v3791 = vpop.permute.xlu0 %3790
        %3792 = vrot.lane.b32.xlu0 %v3769, 16
        %v3793 = vpop.permute.xlu0 %3792
        %3802 = vst.msk [vmem:[#allocation6] sm:$0xff] %vm2650, %v3779
        %3803 = vst.msk [vmem:[#allocation6 + $0x10] sm:$0xff] %vm2650, %v3781
        %3804 = vst.msk [vmem:[#allocation6 + $0x20] sm:$0xff] %vm2650, %v3783
        %3805 = vst.msk [vmem:[#allocation6 + $0x30] sm:$0xff] %vm2650, %v3785
        %3806 = vst.msk [vmem:[#allocation6 + $0x40] sm:$0xff] %vm2650, %v3787
        %3807 = vst.msk [vmem:[#allocation6 + $0x50] sm:$0xff] %vm2650, %v3789
        %3808 = vst.msk [vmem:[#allocation6 + $0x60] sm:$0xff] %vm2650, %v3791
        %3809 = vst.msk [vmem:[#allocation6 + $0x70] sm:$0xff] %vm2650, %v3793
        %v3810 = vld [vmem:[#allocation4 + $0x2] sm:$0xff]
        %v3811 = vld [vmem:[#allocation4 + $0x12] sm:$0xff]
        %v3812 = vld [vmem:[#allocation4 + $0x22] sm:$0xff]
        %v3813 = vld [vmem:[#allocation4 + $0x32] sm:$0xff]
        %v3814 = vld [vmem:[#allocation4 + $0x42] sm:$0xff]
        %v3815 = vld [vmem:[#allocation4 + $0x52] sm:$0xff]
        %v3816 = vld [vmem:[#allocation4 + $0x62] sm:$0xff]
        %v3817 = vld [vmem:[#allocation4 + $0x72] sm:$0xff]
        %3826 = vrot.lane.b32.xlu0 %v3810, 32
        %v3827 = vpop.permute.xlu0 %3826
        %3828 = vrot.lane.b32.xlu0 %v3811, 32
        %v3829 = vpop.permute.xlu0 %3828
        %3830 = vrot.lane.b32.xlu0 %v3812, 32
        %v3831 = vpop.permute.xlu0 %3830
        %3832 = vrot.lane.b32.xlu0 %v3813, 32
        %v3833 = vpop.permute.xlu0 %3832
        %3834 = vrot.lane.b32.xlu0 %v3814, 32
        %v3835 = vpop.permute.xlu0 %3834
        %3836 = vrot.lane.b32.xlu0 %v3815, 32
        %v3837 = vpop.permute.xlu0 %3836
        %3838 = vrot.lane.b32.xlu0 %v3816, 32
        %v3839 = vpop.permute.xlu0 %3838
        %3840 = vrot.lane.b32.xlu0 %v3817, 32
        %v3841 = vpop.permute.xlu0 %3840
        %3850 = vst.msk [vmem:[#allocation6] sm:$0xff] %vm2699, %v3827
        %3851 = vst.msk [vmem:[#allocation6 + $0x10] sm:$0xff] %vm2699, %v3829
        %3852 = vst.msk [vmem:[#allocation6 + $0x20] sm:$0xff] %vm2699, %v3831
        %3853 = vst.msk [vmem:[#allocation6 + $0x30] sm:$0xff] %vm2699, %v3833
        %3854 = vst.msk [vmem:[#allocation6 + $0x40] sm:$0xff] %vm2699, %v3835
        %3855 = vst.msk [vmem:[#allocation6 + $0x50] sm:$0xff] %vm2699, %v3837
        %3856 = vst.msk [vmem:[#allocation6 + $0x60] sm:$0xff] %vm2699, %v3839
        %3857 = vst.msk [vmem:[#allocation6 + $0x70] sm:$0xff] %vm2699, %v3841
        %v3858 = vld [vmem:[%s2566] sm:$0xff]
        %v3859 = vld [vmem:[%s2566 + $0x10] sm:$0xff]
        %v3860 = vld [vmem:[%s2566 + $0x20] sm:$0xff]
        %v3861 = vld [vmem:[%s2566 + $0x30] sm:$0xff]
        %v3862 = vld [vmem:[%s2566 + $0x40] sm:$0xff]
        %v3863 = vld [vmem:[%s2566 + $0x50] sm:$0xff]
        %v3864 = vld [vmem:[%s2566 + $0x60] sm:$0xff]
        %v3865 = vld [vmem:[%s2566 + $0x70] sm:$0xff]
        %3874 = vrot.lane.b32.xlu0 %v3858, 48
        %v3875 = vpop.permute.xlu0 %3874
        %3876 = vrot.lane.b32.xlu0 %v3859, 48
        %v3877 = vpop.permute.xlu0 %3876
        %3878 = vrot.lane.b32.xlu0 %v3860, 48
        %v3879 = vpop.permute.xlu0 %3878
        %3880 = vrot.lane.b32.xlu0 %v3861, 48
        %v3881 = vpop.permute.xlu0 %3880
        %3882 = vrot.lane.b32.xlu0 %v3862, 48
        %v3883 = vpop.permute.xlu0 %3882
        %3884 = vrot.lane.b32.xlu0 %v3863, 48
        %v3885 = vpop.permute.xlu0 %3884
        %3886 = vrot.lane.b32.xlu0 %v3864, 48
        %v3887 = vpop.permute.xlu0 %3886
        %3888 = vrot.lane.b32.xlu0 %v3865, 48
        %v3889 = vpop.permute.xlu0 %3888
        %3898 = vst.msk [vmem:[#allocation6] sm:$0xff] %vm2748, %v3875
        %3899 = vst.msk [vmem:[#allocation6 + $0x10] sm:$0xff] %vm2748, %v3877
        %3900 = vst.msk [vmem:[#allocation6 + $0x20] sm:$0xff] %vm2748, %v3879
        %3901 = vst.msk [vmem:[#allocation6 + $0x30] sm:$0xff] %vm2748, %v3881
        %3902 = vst.msk [vmem:[#allocation6 + $0x40] sm:$0xff] %vm2748, %v3883
        %3903 = vst.msk [vmem:[#allocation6 + $0x50] sm:$0xff] %vm2748, %v3885
        %3904 = vst.msk [vmem:[#allocation6 + $0x60] sm:$0xff] %vm2748, %v3887
        %3905 = vst.msk [vmem:[#allocation6 + $0x70] sm:$0xff] %vm2748, %v3889
        %v3906 = vld [vmem:[%s2566 + $0x1] sm:$0xff]
        %v3907 = vld [vmem:[%s2566 + $0x11] sm:$0xff]
        %v3908 = vld [vmem:[%s2566 + $0x21] sm:$0xff]
        %v3909 = vld [vmem:[%s2566 + $0x31] sm:$0xff]
        %v3910 = vld [vmem:[%s2566 + $0x41] sm:$0xff]
        %v3911 = vld [vmem:[%s2566 + $0x51] sm:$0xff]
        %v3912 = vld [vmem:[%s2566 + $0x61] sm:$0xff]
        %v3913 = vld [vmem:[%s2566 + $0x71] sm:$0xff]
        %3922 = vrot.lane.b32.xlu0 %v3906, 64
        %v3923 = vpop.permute.xlu0 %3922
        %3924 = vrot.lane.b32.xlu0 %v3907, 64
        %v3925 = vpop.permute.xlu0 %3924
        %3926 = vrot.lane.b32.xlu0 %v3908, 64
        %v3927 = vpop.permute.xlu0 %3926
        %3928 = vrot.lane.b32.xlu0 %v3909, 64
        %v3929 = vpop.permute.xlu0 %3928
        %3930 = vrot.lane.b32.xlu0 %v3910, 64
        %v3931 = vpop.permute.xlu0 %3930
        %3932 = vrot.lane.b32.xlu0 %v3911, 64
        %v3933 = vpop.permute.xlu0 %3932
        %3934 = vrot.lane.b32.xlu0 %v3912, 64
        %v3935 = vpop.permute.xlu0 %3934
        %3936 = vrot.lane.b32.xlu0 %v3913, 64
        %v3937 = vpop.permute.xlu0 %3936
        %3946 = vst.msk [vmem:[#allocation6] sm:$0xff] %vm2797, %v3923
        %3947 = vst.msk [vmem:[#allocation6 + $0x10] sm:$0xff] %vm2797, %v3925
        %3948 = vst.msk [vmem:[#allocation6 + $0x20] sm:$0xff] %vm2797, %v3927
        %3949 = vst.msk [vmem:[#allocation6 + $0x30] sm:$0xff] %vm2797, %v3929
        %3950 = vst.msk [vmem:[#allocation6 + $0x40] sm:$0xff] %vm2797, %v3931
        %3951 = vst.msk [vmem:[#allocation6 + $0x50] sm:$0xff] %vm2797, %v3933
        %3952 = vst.msk [vmem:[#allocation6 + $0x60] sm:$0xff] %vm2797, %v3935
        %3953 = vst.msk [vmem:[#allocation6 + $0x70] sm:$0xff] %vm2797, %v3937
        %v3954 = vld [vmem:[%s2566 + $0x2] sm:$0xff]
        %v3955 = vld [vmem:[%s2566 + $0x12] sm:$0xff]
        %v3956 = vld [vmem:[%s2566 + $0x22] sm:$0xff]
        %v3957 = vld [vmem:[%s2566 + $0x32] sm:$0xff]
        %v3958 = vld [vmem:[%s2566 + $0x42] sm:$0xff]
        %v3959 = vld [vmem:[%s2566 + $0x52] sm:$0xff]
        %v3960 = vld [vmem:[%s2566 + $0x62] sm:$0xff]
        %v3961 = vld [vmem:[%s2566 + $0x72] sm:$0xff]
        %3970 = vrot.lane.b32.xlu0 %v3954, 80
        %v3971 = vpop.permute.xlu0 %3970
        %3972 = vrot.lane.b32.xlu0 %v3955, 80
        %v3973 = vpop.permute.xlu0 %3972
        %3974 = vrot.lane.b32.xlu0 %v3956, 80
        %v3975 = vpop.permute.xlu0 %3974
        %3976 = vrot.lane.b32.xlu0 %v3957, 80
        %v3977 = vpop.permute.xlu0 %3976
        %3978 = vrot.lane.b32.xlu0 %v3958, 80
        %v3979 = vpop.permute.xlu0 %3978
        %3980 = vrot.lane.b32.xlu0 %v3959, 80
        %v3981 = vpop.permute.xlu0 %3980
        %3982 = vrot.lane.b32.xlu0 %v3960, 80
        %v3983 = vpop.permute.xlu0 %3982
        %3984 = vrot.lane.b32.xlu0 %v3961, 80
        %v3985 = vpop.permute.xlu0 %3984
        %3994 = vst.msk [vmem:[#allocation6] sm:$0xff] %vm2846, %v3971
        %3995 = vst.msk [vmem:[#allocation6 + $0x10] sm:$0xff] %vm2846, %v3973
        %3996 = vst.msk [vmem:[#allocation6 + $0x20] sm:$0xff] %vm2846, %v3975
        %3997 = vst.msk [vmem:[#allocation6 + $0x30] sm:$0xff] %vm2846, %v3977
        %3998 = vst.msk [vmem:[#allocation6 + $0x40] sm:$0xff] %vm2846, %v3979
        %3999 = vst.msk [vmem:[#allocation6 + $0x50] sm:$0xff] %vm2846, %v3981
        %4000 = vst.msk [vmem:[#allocation6 + $0x60] sm:$0xff] %vm2846, %v3983
        %4001 = vst.msk [vmem:[#allocation6 + $0x70] sm:$0xff] %vm2846, %v3985
        %v4002 = vld [vmem:[%s2855] sm:$0xff]
        %v4003 = vld [vmem:[%s2855 + $0x10] sm:$0xff]
        %v4004 = vld [vmem:[%s2855 + $0x20] sm:$0xff]
        %v4005 = vld [vmem:[%s2855 + $0x30] sm:$0xff]
        %v4006 = vld [vmem:[%s2855 + $0x40] sm:$0xff]
        %v4007 = vld [vmem:[%s2855 + $0x50] sm:$0xff]
        %v4008 = vld [vmem:[%s2855 + $0x60] sm:$0xff]
        %v4009 = vld [vmem:[%s2855 + $0x70] sm:$0xff]
        %4018 = vrot.lane.b32.xlu0 %v4002, 96
        %v4019 = vpop.permute.xlu0 %4018
        %4020 = vrot.lane.b32.xlu0 %v4003, 96
        %v4021 = vpop.permute.xlu0 %4020
        %4022 = vrot.lane.b32.xlu0 %v4004, 96
        %v4023 = vpop.permute.xlu0 %4022
        %4024 = vrot.lane.b32.xlu0 %v4005, 96
        %v4025 = vpop.permute.xlu0 %4024
        %4026 = vrot.lane.b32.xlu0 %v4006, 96
        %v4027 = vpop.permute.xlu0 %4026
        %4028 = vrot.lane.b32.xlu0 %v4007, 96
        %v4029 = vpop.permute.xlu0 %4028
        %4030 = vrot.lane.b32.xlu0 %v4008, 96
        %v4031 = vpop.permute.xlu0 %4030
        %4032 = vrot.lane.b32.xlu0 %v4009, 96
        %v4033 = vpop.permute.xlu0 %4032
        %4042 = vst.msk [vmem:[#allocation6] sm:$0xff] %vm2896, %v4019
        %4043 = vst.msk [vmem:[#allocation6 + $0x10] sm:$0xff] %vm2896, %v4021
        %4044 = vst.msk [vmem:[#allocation6 + $0x20] sm:$0xff] %vm2896, %v4023
        %4045 = vst.msk [vmem:[#allocation6 + $0x30] sm:$0xff] %vm2896, %v4025
        %4046 = vst.msk [vmem:[#allocation6 + $0x40] sm:$0xff] %vm2896, %v4027
        %4047 = vst.msk [vmem:[#allocation6 + $0x50] sm:$0xff] %vm2896, %v4029
        %4048 = vst.msk [vmem:[#allocation6 + $0x60] sm:$0xff] %vm2896, %v4031
        %4049 = vst.msk [vmem:[#allocation6 + $0x70] sm:$0xff] %vm2896, %v4033
        %v4050 = vld [vmem:[%s2855 + $0x1] sm:$0xff]
        %v4051 = vld [vmem:[%s2855 + $0x11] sm:$0xff]
        %v4052 = vld [vmem:[%s2855 + $0x21] sm:$0xff]
        %v4053 = vld [vmem:[%s2855 + $0x31] sm:$0xff]
        %v4054 = vld [vmem:[%s2855 + $0x41] sm:$0xff]
        %v4055 = vld [vmem:[%s2855 + $0x51] sm:$0xff]
        %v4056 = vld [vmem:[%s2855 + $0x61] sm:$0xff]
        %v4057 = vld [vmem:[%s2855 + $0x71] sm:$0xff]
        %4066 = vrot.lane.b32.xlu0 %v4050, 112
        %v4067 = vpop.permute.xlu0 %4066
        %4068 = vrot.lane.b32.xlu0 %v4051, 112
        %v4069 = vpop.permute.xlu0 %4068
        %4070 = vrot.lane.b32.xlu0 %v4052, 112
        %v4071 = vpop.permute.xlu0 %4070
        %4072 = vrot.lane.b32.xlu0 %v4053, 112
        %v4073 = vpop.permute.xlu0 %4072
        %4074 = vrot.lane.b32.xlu0 %v4054, 112
        %v4075 = vpop.permute.xlu0 %4074
        %4076 = vrot.lane.b32.xlu0 %v4055, 112
        %v4077 = vpop.permute.xlu0 %4076
        %4078 = vrot.lane.b32.xlu0 %v4056, 112
        %v4079 = vpop.permute.xlu0 %4078
        %4080 = vrot.lane.b32.xlu0 %v4057, 112
        %v4081 = vpop.permute.xlu0 %4080
        %4090 = vst.msk [vmem:[#allocation6] sm:$0xff] %vm2945, %v4067
        %4091 = vst.msk [vmem:[#allocation6 + $0x10] sm:$0xff] %vm2945, %v4069
        %4092 = vst.msk [vmem:[#allocation6 + $0x20] sm:$0xff] %vm2945, %v4071
        %4093 = vst.msk [vmem:[#allocation6 + $0x30] sm:$0xff] %vm2945, %v4073
        %4094 = vst.msk [vmem:[#allocation6 + $0x40] sm:$0xff] %vm2945, %v4075
        %4095 = vst.msk [vmem:[#allocation6 + $0x50] sm:$0xff] %vm2945, %v4077
        %4096 = vst.msk [vmem:[#allocation6 + $0x60] sm:$0xff] %vm2945, %v4079
        %4097 = vst.msk [vmem:[#allocation6 + $0x70] sm:$0xff] %vm2945, %v4081
        %v4098 = vld [vmem:[%s2855 + $0x2] sm:$0xff]
        %v4099 = vld [vmem:[%s2855 + $0x12] sm:$0xff]
        %v4100 = vld [vmem:[%s2855 + $0x22] sm:$0xff]
        %v4101 = vld [vmem:[%s2855 + $0x32] sm:$0xff]
        %v4102 = vld [vmem:[%s2855 + $0x42] sm:$0xff]
        %v4103 = vld [vmem:[%s2855 + $0x52] sm:$0xff]
        %v4104 = vld [vmem:[%s2855 + $0x62] sm:$0xff]
        %v4105 = vld [vmem:[%s2855 + $0x72] sm:$0xff]
        %4106 = vst.msk [vmem:[#allocation6 + $0x8] sm:$0xff] %vm355, %v4098
        %4107 = vst.msk [vmem:[#allocation6 + $0x18] sm:$0xff] %vm355, %v4099
        %4108 = vst.msk [vmem:[#allocation6 + $0x28] sm:$0xff] %vm355, %v4100
        %4109 = vst.msk [vmem:[#allocation6 + $0x38] sm:$0xff] %vm355, %v4101
        %4110 = vst.msk [vmem:[#allocation6 + $0x48] sm:$0xff] %vm355, %v4102
        %4111 = vst.msk [vmem:[#allocation6 + $0x58] sm:$0xff] %vm355, %v4103
        %4112 = vst.msk [vmem:[#allocation6 + $0x68] sm:$0xff] %vm355, %v4104
        %4113 = vst.msk [vmem:[#allocation6 + $0x78] sm:$0xff] %vm355, %v4105
        %v4114 = vld [vmem:[#allocation6] sm:$0xff]
        %v4115 = vld [vmem:[#allocation6 + $0x8] sm:$0xff]
        %v4116 = vld [vmem:[#allocation6 + $0x10] sm:$0xff]
        %v4117 = vld [vmem:[#allocation6 + $0x18] sm:$0xff]
        %v4118 = vld [vmem:[#allocation6 + $0x20] sm:$0xff]
        %v4119 = vld [vmem:[#allocation6 + $0x28] sm:$0xff]
        %v4120 = vld [vmem:[#allocation6 + $0x30] sm:$0xff]
        %v4121 = vld [vmem:[#allocation6 + $0x38] sm:$0xff]
        %v4122 = vld [vmem:[#allocation6 + $0x40] sm:$0xff]
        %v4123 = vld [vmem:[#allocation6 + $0x48] sm:$0xff]
        %v4124 = vld [vmem:[#allocation6 + $0x50] sm:$0xff]
        %v4125 = vld [vmem:[#allocation6 + $0x58] sm:$0xff]
        %v4126 = vld [vmem:[#allocation6 + $0x60] sm:$0xff]
        %v4127 = vld [vmem:[#allocation6 + $0x68] sm:$0xff]
        %v4128 = vld [vmem:[#allocation6 + $0x70] sm:$0xff]
        %v4129 = vld [vmem:[#allocation6 + $0x78] sm:$0xff]
        %v4131 = vlaneseq
        %v4132 = vshrl.u32 %v4131, 7
        %v4133 = vsub.s32 0, %v4132
        %v4134 = vrot.slane %v3745, %v4133
        %v4137 = vsel %vm355, %v4115, 0
        %v4140 = vsel %vm355, %v4117, 0
        %v4143 = vsel %vm355, %v4119, 0
        %v4146 = vsel %vm355, %v4121, 0
        %v4149 = vsel %vm355, %v4123, 0
        %v4152 = vsel %vm355, %v4125, 0
        %v4155 = vsel %vm355, %v4127, 0
        %v4158 = vsel %vm355, %v4129, 0
        %4160 = vmatprep.subr.mxu0 0.0
        %4161 = vmatpush1.msra.mxu0 %v3726
        %4162 = vmatprep.subr.mxu0 0.0
        %4163 = vmatpush1.msra.mxu0 %v3727
        %4164 = vmatprep.subr.mxu0 0.0
        %4165 = vmatpush1.msra.mxu0 %v3728
        %4166 = vmatprep.subr.mxu0 0.0
        %4167 = vmatpush1.msra.mxu0 %v3729
        %4168 = vmatprep.subr.mxu0 0.0
        %4169 = vmatpush1.msra.mxu0 %v3730
        %4170 = vmatprep.subr.mxu0 0.0
        %4171 = vmatpush1.msra.mxu0 %v3731
        %4172 = vmatprep.subr.mxu0 0.0
        %4173 = vmatpush1.msra.mxu0 %v3732
        %4174 = vmatprep.subr.mxu0 0.0
        %4175 = vmatpush1.msra.mxu0 %v3733
        %4176 = vmatprep.subr.mxu0 0.0
        %4177 = vmatpush1.msra.mxu0 %v3734
        %4178 = vmatprep.subr.mxu0 0.0
        %4179 = vmatpush1.msra.mxu0 %v3735
        %4180 = vmatprep.subr.mxu0 0.0
        %4181 = vmatpush1.msra.mxu0 %v3736
        %4182 = vmatprep.subr.mxu0 0.0
        %4183 = vmatpush1.msra.mxu0 %v3737
        %4184 = vmatprep.subr.mxu0 0.0
        %4185 = vmatpush1.msra.mxu0 %v3738
        %4186 = vmatprep.subr.mxu0 0.0
        %4187 = vmatpush1.msra.mxu0 %v3739
        %4188 = vmatprep.subr.mxu0 0.0
        %4189 = vmatpush1.msra.mxu0 %v3740
        %4190 = vmatprep.subr.mxu0 0.0
        %4191 = vmatpush1.msra.mxu0 %v3741
        %4192 = vmatprep.subr.mxu0 0.0
        %4193 = vmatpush1.msra.mxu0 %v3742
        %4194 = vmatprep.subr.mxu0 0.0
        %4195 = vmatpush1.msra.mxu0 %v3743
        %4196 = vmatprep.subr.mxu0 0.0
        %4197 = vmatpush1.msra.mxu0 0.0
        %4198 = vmatprep.subr.mxu0 0.0
        %4199 = vmatpush1.msra.mxu0 0.0
        %4200 = vmatprep.subr.mxu0 0.0
        %4201 = vmatpush1.msra.mxu0 0.0
        %4202 = vmatprep.subr.mxu0 0.0
        %4203 = vmatpush1.msra.mxu0 0.0
        %4204 = vmatprep.subr.mxu0 0.0
        %4205 = vmatpush1.msra.mxu0 0.0
        %4206 = vmatprep.subr.mxu0 0.0
        %4207 = vmatpush1.msra.mxu0 0.0
        %4208 = vmatprep.subr.mxu0 0.0
        %4209 = vmatpush1.msra.mxu0 0.0
        %4210 = vmatprep.subr.mxu0 0.0
        %4211 = vmatpush1.msra.mxu0 0.0
        %4212 = vmatprep.subr.mxu0 0.0
        %4213 = vmatpush1.msra.mxu0 0.0
        %4214 = vmatprep.subr.mxu0 0.0
        %4215 = vmatpush1.msra.mxu0 0.0
        %4216 = vmatprep.subr.mxu0 0.0
        %4217 = vmatpush1.msra.mxu0 0.0
        %4218 = vmatprep.subr.mxu0 0.0
        %4219 = vmatpush1.msra.mxu0 0.0
        %4220 = vmatprep.subr.mxu0 0.0
        %4221 = vmatpush1.msra.mxu0 0.0
        %4222 = vmatprep.subr.mxu0 0.0
        %4223 = vmatpush1.msra.mxu0 0.0
        %4224 = vmatprep.mubr.f32.mxu0 %v4137
        %4225 = vmatmul.mubr.f32.gmra.mrb[0].mxu0 %v4114
        %v4226 = vpop.f32.mrb[0].mxu0
        %v4227 = vadd.f32 %v4134, %v4226
        %v4228 = vpop.f32.mrb[0].mxu0
        %4229 = vmatprep.mubr.f32.mxu0 %v4140
        %4230 = vmatmul.mubr.f32.gmra.mrb[0].mxu0 %v4116
        %v4231 = vpop.f32.mrb[0].mxu0
        %v4232 = vadd.f32 %v4134, %v4231
        %v4233 = vpop.f32.mrb[0].mxu0
        %4234 = vmatprep.mubr.f32.mxu0 %v4143
        %4235 = vmatmul.mubr.f32.gmra.mrb[0].mxu0 %v4118
        %v4236 = vpop.f32.mrb[0].mxu0
        %v4237 = vadd.f32 %v4134, %v4236
        %v4238 = vpop.f32.mrb[0].mxu0
        %4239 = vmatprep.mubr.f32.mxu0 %v4146
        %4240 = vmatmul.mubr.f32.gmra.mrb[0].mxu0 %v4120
        %v4241 = vpop.f32.mrb[0].mxu0
        %v4242 = vadd.f32 %v4134, %v4241
        %v4243 = vpop.f32.mrb[0].mxu0
        %4244 = vmatprep.mubr.f32.mxu0 %v4149
        %4245 = vmatmul.mubr.f32.gmra.mrb[0].mxu0 %v4122
        %v4246 = vpop.f32.mrb[0].mxu0
        %v4247 = vadd.f32 %v4134, %v4246
        %v4248 = vpop.f32.mrb[0].mxu0
        %4249 = vmatprep.mubr.f32.mxu0 %v4152
        %4250 = vmatmul.mubr.f32.gmra.mrb[0].mxu0 %v4124
        %v4251 = vpop.f32.mrb[0].mxu0
        %v4252 = vadd.f32 %v4134, %v4251
        %v4253 = vpop.f32.mrb[0].mxu0
        %4254 = vmatprep.mubr.f32.mxu0 %v4155
        %4255 = vmatmul.mubr.f32.gmra.mrb[0].mxu0 %v4126
        %v4256 = vpop.f32.mrb[0].mxu0
        %v4257 = vadd.f32 %v4134, %v4256
        %v4258 = vpop.f32.mrb[0].mxu0
        %4259 = vmatprep.mubr.f32.mxu0 %v4158
        %4260 = vmatmul.mubr.f32.gmra.mrb[0].mxu0 %v4128
        %v4261 = vpop.f32.mrb[0].mxu0
        %v4262 = vadd.f32 %v4134, %v4261
        %v4263 = vpop.f32.mrb[0].mxu0
        %4264 = vdwg.mxu0
        %v4265 = vmax.f32 %v4227, 0.0
        %v4266 = vmax.f32 %v4232, 0.0
        %v4267 = vmax.f32 %v4237, 0.0
        %v4268 = vmax.f32 %v4242, 0.0
        %v4269 = vmax.f32 %v4247, 0.0
        %v4270 = vmax.f32 %v4252, 0.0
        %v4271 = vmax.f32 %v4257, 0.0
        %v4272 = vmax.f32 %v4262, 0.0
        %4273 = vst.msk [vmem:[%s2566 + $0x1] sm:$0xff] %vm355, %v4265
        %4274 = vst.msk [vmem:[%s2566 + $0x11] sm:$0xff] %vm355, %v4266
        %4275 = vst.msk [vmem:[%s2566 + $0x21] sm:$0xff] %vm355, %v4267
        %4276 = vst.msk [vmem:[%s2566 + $0x31] sm:$0xff] %vm355, %v4268
        %4277 = vst.msk [vmem:[%s2566 + $0x41] sm:$0xff] %vm355, %v4269
        %4278 = vst.msk [vmem:[%s2566 + $0x51] sm:$0xff] %vm355, %v4270
        %4279 = vst.msk [vmem:[%s2566 + $0x61] sm:$0xff] %vm355, %v4271
        %4280 = vst.msk [vmem:[%s2566 + $0x71] sm:$0xff] %vm355, %v4272
        %s4281 = scalar_lea.vmem %s4, 432
        %v4282 = vld [vmem:[%s4281] sm:$0xff]
        %v4283 = vld [vmem:[%s4281 + $0x8] sm:$0xff]
        %v4284 = vld [vmem:[%s4281 + $0x10] sm:$0xff]
        %v4285 = vld [vmem:[%s4281 + $0x18] sm:$0xff]
        %v4286 = vld [vmem:[%s4281 + $0x20] sm:$0xff]
        %v4287 = vld [vmem:[%s4281 + $0x28] sm:$0xff]
        %v4288 = vld [vmem:[%s4281 + $0x30] sm:$0xff]
        %v4289 = vld [vmem:[%s4281 + $0x38] sm:$0xff]
        %v4290 = vld [vmem:[%s4281 + $0x40] sm:$0xff]
        %v4291 = vld [vmem:[%s4281 + $0x48] sm:$0xff]
        %v4292 = vld [vmem:[%s4281 + $0x50] sm:$0xff]
        %v4293 = vld [vmem:[%s4281 + $0x58] sm:$0xff]
        %v4294 = vld [vmem:[%s4281 + $0x60] sm:$0xff]
        %v4295 = vld [vmem:[%s4281 + $0x68] sm:$0xff]
        %v4296 = vld [vmem:[%s4281 + $0x70] sm:$0xff]
        %v4297 = vld [vmem:[%s4281 + $0x78] sm:$0xff]
        %v4298 = vld [vmem:[%s4281 + $0x80] sm:$0xff]
        %v4299 = vld [vmem:[%s4281 + $0x88] sm:$0xff]
        %s4300 = scalar_lea.vmem %s5, 3
        %v4301 = vld [vmem:[%s4300] sm:$0x1]
        %v4302 = vld [vmem:[#allocation4] sm:$0xff]
        %v4303 = vld [vmem:[#allocation4 + $0x10] sm:$0xff]
        %v4304 = vld [vmem:[#allocation4 + $0x20] sm:$0xff]
        %v4305 = vld [vmem:[#allocation4 + $0x30] sm:$0xff]
        %v4306 = vld [vmem:[#allocation4 + $0x40] sm:$0xff]
        %v4307 = vld [vmem:[#allocation4 + $0x50] sm:$0xff]
        %v4308 = vld [vmem:[#allocation4 + $0x60] sm:$0xff]
        %v4309 = vld [vmem:[#allocation4 + $0x70] sm:$0xff]
        %4310 = vst.msk [vmem:[#allocation6] sm:$0xff] %vm355, %v4302
        %4311 = vst.msk [vmem:[#allocation6 + $0x10] sm:$0xff] %vm355, %v4303
        %4312 = vst.msk [vmem:[#allocation6 + $0x20] sm:$0xff] %vm355, %v4304
        %4313 = vst.msk [vmem:[#allocation6 + $0x30] sm:$0xff] %vm355, %v4305
        %4314 = vst.msk [vmem:[#allocation6 + $0x40] sm:$0xff] %vm355, %v4306
        %4315 = vst.msk [vmem:[#allocation6 + $0x50] sm:$0xff] %vm355, %v4307
        %4316 = vst.msk [vmem:[#allocation6 + $0x60] sm:$0xff] %vm355, %v4308
        %4317 = vst.msk [vmem:[#allocation6 + $0x70] sm:$0xff] %vm355, %v4309
        %v4318 = vld [vmem:[#allocation4 + $0x1] sm:$0xff]
        %v4319 = vld [vmem:[#allocation4 + $0x11] sm:$0xff]
        %v4320 = vld [vmem:[#allocation4 + $0x21] sm:$0xff]
        %v4321 = vld [vmem:[#allocation4 + $0x31] sm:$0xff]
        %v4322 = vld [vmem:[#allocation4 + $0x41] sm:$0xff]
        %v4323 = vld [vmem:[#allocation4 + $0x51] sm:$0xff]
        %v4324 = vld [vmem:[#allocation4 + $0x61] sm:$0xff]
        %v4325 = vld [vmem:[#allocation4 + $0x71] sm:$0xff]
        %4334 = vrot.lane.b32.xlu0 %v4318, 16
        %v4335 = vpop.permute.xlu0 %4334
        %4336 = vrot.lane.b32.xlu0 %v4319, 16
        %v4337 = vpop.permute.xlu0 %4336
        %4338 = vrot.lane.b32.xlu0 %v4320, 16
        %v4339 = vpop.permute.xlu0 %4338
        %4340 = vrot.lane.b32.xlu0 %v4321, 16
        %v4341 = vpop.permute.xlu0 %4340
        %4342 = vrot.lane.b32.xlu0 %v4322, 16
        %v4343 = vpop.permute.xlu0 %4342
        %4344 = vrot.lane.b32.xlu0 %v4323, 16
        %v4345 = vpop.permute.xlu0 %4344
        %4346 = vrot.lane.b32.xlu0 %v4324, 16
        %v4347 = vpop.permute.xlu0 %4346
        %4348 = vrot.lane.b32.xlu0 %v4325, 16
        %v4349 = vpop.permute.xlu0 %4348
        %4358 = vst.msk [vmem:[#allocation6] sm:$0xff] %vm2650, %v4335
        %4359 = vst.msk [vmem:[#allocation6 + $0x10] sm:$0xff] %vm2650, %v4337
        %4360 = vst.msk [vmem:[#allocation6 + $0x20] sm:$0xff] %vm2650, %v4339
        %4361 = vst.msk [vmem:[#allocation6 + $0x30] sm:$0xff] %vm2650, %v4341
        %4362 = vst.msk [vmem:[#allocation6 + $0x40] sm:$0xff] %vm2650, %v4343
        %4363 = vst.msk [vmem:[#allocation6 + $0x50] sm:$0xff] %vm2650, %v4345
        %4364 = vst.msk [vmem:[#allocation6 + $0x60] sm:$0xff] %vm2650, %v4347
        %4365 = vst.msk [vmem:[#allocation6 + $0x70] sm:$0xff] %vm2650, %v4349
        %v4366 = vld [vmem:[#allocation4 + $0x2] sm:$0xff]
        %v4367 = vld [vmem:[#allocation4 + $0x12] sm:$0xff]
        %v4368 = vld [vmem:[#allocation4 + $0x22] sm:$0xff]
        %v4369 = vld [vmem:[#allocation4 + $0x32] sm:$0xff]
        %v4370 = vld [vmem:[#allocation4 + $0x42] sm:$0xff]
        %v4371 = vld [vmem:[#allocation4 + $0x52] sm:$0xff]
        %v4372 = vld [vmem:[#allocation4 + $0x62] sm:$0xff]
        %v4373 = vld [vmem:[#allocation4 + $0x72] sm:$0xff]
        %4382 = vrot.lane.b32.xlu0 %v4366, 32
        %v4383 = vpop.permute.xlu0 %4382
        %4384 = vrot.lane.b32.xlu0 %v4367, 32
        %v4385 = vpop.permute.xlu0 %4384
        %4386 = vrot.lane.b32.xlu0 %v4368, 32
        %v4387 = vpop.permute.xlu0 %4386
        %4388 = vrot.lane.b32.xlu0 %v4369, 32
        %v4389 = vpop.permute.xlu0 %4388
        %4390 = vrot.lane.b32.xlu0 %v4370, 32
        %v4391 = vpop.permute.xlu0 %4390
        %4392 = vrot.lane.b32.xlu0 %v4371, 32
        %v4393 = vpop.permute.xlu0 %4392
        %4394 = vrot.lane.b32.xlu0 %v4372, 32
        %v4395 = vpop.permute.xlu0 %4394
        %4396 = vrot.lane.b32.xlu0 %v4373, 32
        %v4397 = vpop.permute.xlu0 %4396
        %4406 = vst.msk [vmem:[#allocation6] sm:$0xff] %vm2699, %v4383
        %4407 = vst.msk [vmem:[#allocation6 + $0x10] sm:$0xff] %vm2699, %v4385
        %4408 = vst.msk [vmem:[#allocation6 + $0x20] sm:$0xff] %vm2699, %v4387
        %4409 = vst.msk [vmem:[#allocation6 + $0x30] sm:$0xff] %vm2699, %v4389
        %4410 = vst.msk [vmem:[#allocation6 + $0x40] sm:$0xff] %vm2699, %v4391
        %4411 = vst.msk [vmem:[#allocation6 + $0x50] sm:$0xff] %vm2699, %v4393
        %4412 = vst.msk [vmem:[#allocation6 + $0x60] sm:$0xff] %vm2699, %v4395
        %4413 = vst.msk [vmem:[#allocation6 + $0x70] sm:$0xff] %vm2699, %v4397
        %v4414 = vld [vmem:[%s2566] sm:$0xff]
        %v4415 = vld [vmem:[%s2566 + $0x10] sm:$0xff]
        %v4416 = vld [vmem:[%s2566 + $0x20] sm:$0xff]
        %v4417 = vld [vmem:[%s2566 + $0x30] sm:$0xff]
        %v4418 = vld [vmem:[%s2566 + $0x40] sm:$0xff]
        %v4419 = vld [vmem:[%s2566 + $0x50] sm:$0xff]
        %v4420 = vld [vmem:[%s2566 + $0x60] sm:$0xff]
        %v4421 = vld [vmem:[%s2566 + $0x70] sm:$0xff]
        %4430 = vrot.lane.b32.xlu0 %v4414, 48
        %v4431 = vpop.permute.xlu0 %4430
        %4432 = vrot.lane.b32.xlu0 %v4415, 48
        %v4433 = vpop.permute.xlu0 %4432
        %4434 = vrot.lane.b32.xlu0 %v4416, 48
        %v4435 = vpop.permute.xlu0 %4434
        %4436 = vrot.lane.b32.xlu0 %v4417, 48
        %v4437 = vpop.permute.xlu0 %4436
        %4438 = vrot.lane.b32.xlu0 %v4418, 48
        %v4439 = vpop.permute.xlu0 %4438
        %4440 = vrot.lane.b32.xlu0 %v4419, 48
        %v4441 = vpop.permute.xlu0 %4440
        %4442 = vrot.lane.b32.xlu0 %v4420, 48
        %v4443 = vpop.permute.xlu0 %4442
        %4444 = vrot.lane.b32.xlu0 %v4421, 48
        %v4445 = vpop.permute.xlu0 %4444
        %4454 = vst.msk [vmem:[#allocation6] sm:$0xff] %vm2748, %v4431
        %4455 = vst.msk [vmem:[#allocation6 + $0x10] sm:$0xff] %vm2748, %v4433
        %4456 = vst.msk [vmem:[#allocation6 + $0x20] sm:$0xff] %vm2748, %v4435
        %4457 = vst.msk [vmem:[#allocation6 + $0x30] sm:$0xff] %vm2748, %v4437
        %4458 = vst.msk [vmem:[#allocation6 + $0x40] sm:$0xff] %vm2748, %v4439
        %4459 = vst.msk [vmem:[#allocation6 + $0x50] sm:$0xff] %vm2748, %v4441
        %4460 = vst.msk [vmem:[#allocation6 + $0x60] sm:$0xff] %vm2748, %v4443
        %4461 = vst.msk [vmem:[#allocation6 + $0x70] sm:$0xff] %vm2748, %v4445
        %v4462 = vld [vmem:[%s2566 + $0x1] sm:$0xff]
        %v4463 = vld [vmem:[%s2566 + $0x11] sm:$0xff]
        %v4464 = vld [vmem:[%s2566 + $0x21] sm:$0xff]
        %v4465 = vld [vmem:[%s2566 + $0x31] sm:$0xff]
        %v4466 = vld [vmem:[%s2566 + $0x41] sm:$0xff]
        %v4467 = vld [vmem:[%s2566 + $0x51] sm:$0xff]
        %v4468 = vld [vmem:[%s2566 + $0x61] sm:$0xff]
        %v4469 = vld [vmem:[%s2566 + $0x71] sm:$0xff]
        %4478 = vrot.lane.b32.xlu0 %v4462, 64
        %v4479 = vpop.permute.xlu0 %4478
        %4480 = vrot.lane.b32.xlu0 %v4463, 64
        %v4481 = vpop.permute.xlu0 %4480
        %4482 = vrot.lane.b32.xlu0 %v4464, 64
        %v4483 = vpop.permute.xlu0 %4482
        %4484 = vrot.lane.b32.xlu0 %v4465, 64
        %v4485 = vpop.permute.xlu0 %4484
        %4486 = vrot.lane.b32.xlu0 %v4466, 64
        %v4487 = vpop.permute.xlu0 %4486
        %4488 = vrot.lane.b32.xlu0 %v4467, 64
        %v4489 = vpop.permute.xlu0 %4488
        %4490 = vrot.lane.b32.xlu0 %v4468, 64
        %v4491 = vpop.permute.xlu0 %4490
        %4492 = vrot.lane.b32.xlu0 %v4469, 64
        %v4493 = vpop.permute.xlu0 %4492
        %4502 = vst.msk [vmem:[#allocation6] sm:$0xff] %vm2797, %v4479
        %4503 = vst.msk [vmem:[#allocation6 + $0x10] sm:$0xff] %vm2797, %v4481
        %4504 = vst.msk [vmem:[#allocation6 + $0x20] sm:$0xff] %vm2797, %v4483
        %4505 = vst.msk [vmem:[#allocation6 + $0x30] sm:$0xff] %vm2797, %v4485
        %4506 = vst.msk [vmem:[#allocation6 + $0x40] sm:$0xff] %vm2797, %v4487
        %4507 = vst.msk [vmem:[#allocation6 + $0x50] sm:$0xff] %vm2797, %v4489
        %4508 = vst.msk [vmem:[#allocation6 + $0x60] sm:$0xff] %vm2797, %v4491
        %4509 = vst.msk [vmem:[#allocation6 + $0x70] sm:$0xff] %vm2797, %v4493
        %v4510 = vld [vmem:[%s2566 + $0x2] sm:$0xff]
        %v4511 = vld [vmem:[%s2566 + $0x12] sm:$0xff]
        %v4512 = vld [vmem:[%s2566 + $0x22] sm:$0xff]
        %v4513 = vld [vmem:[%s2566 + $0x32] sm:$0xff]
        %v4514 = vld [vmem:[%s2566 + $0x42] sm:$0xff]
        %v4515 = vld [vmem:[%s2566 + $0x52] sm:$0xff]
        %v4516 = vld [vmem:[%s2566 + $0x62] sm:$0xff]
        %v4517 = vld [vmem:[%s2566 + $0x72] sm:$0xff]
        %4526 = vrot.lane.b32.xlu0 %v4510, 80
        %v4527 = vpop.permute.xlu0 %4526
        %4528 = vrot.lane.b32.xlu0 %v4511, 80
        %v4529 = vpop.permute.xlu0 %4528
        %4530 = vrot.lane.b32.xlu0 %v4512, 80
        %v4531 = vpop.permute.xlu0 %4530
        %4532 = vrot.lane.b32.xlu0 %v4513, 80
        %v4533 = vpop.permute.xlu0 %4532
        %4534 = vrot.lane.b32.xlu0 %v4514, 80
        %v4535 = vpop.permute.xlu0 %4534
        %4536 = vrot.lane.b32.xlu0 %v4515, 80
        %v4537 = vpop.permute.xlu0 %4536
        %4538 = vrot.lane.b32.xlu0 %v4516, 80
        %v4539 = vpop.permute.xlu0 %4538
        %4540 = vrot.lane.b32.xlu0 %v4517, 80
        %v4541 = vpop.permute.xlu0 %4540
        %4550 = vst.msk [vmem:[#allocation6] sm:$0xff] %vm2846, %v4527
        %4551 = vst.msk [vmem:[#allocation6 + $0x10] sm:$0xff] %vm2846, %v4529
        %4552 = vst.msk [vmem:[#allocation6 + $0x20] sm:$0xff] %vm2846, %v4531
        %4553 = vst.msk [vmem:[#allocation6 + $0x30] sm:$0xff] %vm2846, %v4533
        %4554 = vst.msk [vmem:[#allocation6 + $0x40] sm:$0xff] %vm2846, %v4535
        %4555 = vst.msk [vmem:[#allocation6 + $0x50] sm:$0xff] %vm2846, %v4537
        %4556 = vst.msk [vmem:[#allocation6 + $0x60] sm:$0xff] %vm2846, %v4539
        %4557 = vst.msk [vmem:[#allocation6 + $0x70] sm:$0xff] %vm2846, %v4541
        %v4558 = vld [vmem:[%s2855] sm:$0xff]
        %v4559 = vld [vmem:[%s2855 + $0x10] sm:$0xff]
        %v4560 = vld [vmem:[%s2855 + $0x20] sm:$0xff]
        %v4561 = vld [vmem:[%s2855 + $0x30] sm:$0xff]
        %v4562 = vld [vmem:[%s2855 + $0x40] sm:$0xff]
        %v4563 = vld [vmem:[%s2855 + $0x50] sm:$0xff]
        %v4564 = vld [vmem:[%s2855 + $0x60] sm:$0xff]
        %v4565 = vld [vmem:[%s2855 + $0x70] sm:$0xff]
        %4574 = vrot.lane.b32.xlu0 %v4558, 96
        %v4575 = vpop.permute.xlu0 %4574
        %4576 = vrot.lane.b32.xlu0 %v4559, 96
        %v4577 = vpop.permute.xlu0 %4576
        %4578 = vrot.lane.b32.xlu0 %v4560, 96
        %v4579 = vpop.permute.xlu0 %4578
        %4580 = vrot.lane.b32.xlu0 %v4561, 96
        %v4581 = vpop.permute.xlu0 %4580
        %4582 = vrot.lane.b32.xlu0 %v4562, 96
        %v4583 = vpop.permute.xlu0 %4582
        %4584 = vrot.lane.b32.xlu0 %v4563, 96
        %v4585 = vpop.permute.xlu0 %4584
        %4586 = vrot.lane.b32.xlu0 %v4564, 96
        %v4587 = vpop.permute.xlu0 %4586
        %4588 = vrot.lane.b32.xlu0 %v4565, 96
        %v4589 = vpop.permute.xlu0 %4588
        %4598 = vst.msk [vmem:[#allocation6] sm:$0xff] %vm2896, %v4575
        %4599 = vst.msk [vmem:[#allocation6 + $0x10] sm:$0xff] %vm2896, %v4577
        %4600 = vst.msk [vmem:[#allocation6 + $0x20] sm:$0xff] %vm2896, %v4579
        %4601 = vst.msk [vmem:[#allocation6 + $0x30] sm:$0xff] %vm2896, %v4581
        %4602 = vst.msk [vmem:[#allocation6 + $0x40] sm:$0xff] %vm2896, %v4583
        %4603 = vst.msk [vmem:[#allocation6 + $0x50] sm:$0xff] %vm2896, %v4585
        %4604 = vst.msk [vmem:[#allocation6 + $0x60] sm:$0xff] %vm2896, %v4587
        %4605 = vst.msk [vmem:[#allocation6 + $0x70] sm:$0xff] %vm2896, %v4589
        %v4606 = vld [vmem:[%s2855 + $0x1] sm:$0xff]
        %v4607 = vld [vmem:[%s2855 + $0x11] sm:$0xff]
        %v4608 = vld [vmem:[%s2855 + $0x21] sm:$0xff]
        %v4609 = vld [vmem:[%s2855 + $0x31] sm:$0xff]
        %v4610 = vld [vmem:[%s2855 + $0x41] sm:$0xff]
        %v4611 = vld [vmem:[%s2855 + $0x51] sm:$0xff]
        %v4612 = vld [vmem:[%s2855 + $0x61] sm:$0xff]
        %v4613 = vld [vmem:[%s2855 + $0x71] sm:$0xff]
        %4622 = vrot.lane.b32.xlu0 %v4606, 112
        %v4623 = vpop.permute.xlu0 %4622
        %4624 = vrot.lane.b32.xlu0 %v4607, 112
        %v4625 = vpop.permute.xlu0 %4624
        %4626 = vrot.lane.b32.xlu0 %v4608, 112
        %v4627 = vpop.permute.xlu0 %4626
        %4628 = vrot.lane.b32.xlu0 %v4609, 112
        %v4629 = vpop.permute.xlu0 %4628
        %4630 = vrot.lane.b32.xlu0 %v4610, 112
        %v4631 = vpop.permute.xlu0 %4630
        %4632 = vrot.lane.b32.xlu0 %v4611, 112
        %v4633 = vpop.permute.xlu0 %4632
        %4634 = vrot.lane.b32.xlu0 %v4612, 112
        %v4635 = vpop.permute.xlu0 %4634
        %4636 = vrot.lane.b32.xlu0 %v4613, 112
        %v4637 = vpop.permute.xlu0 %4636
        %4646 = vst.msk [vmem:[#allocation6] sm:$0xff] %vm2945, %v4623
        %4647 = vst.msk [vmem:[#allocation6 + $0x10] sm:$0xff] %vm2945, %v4625
        %4648 = vst.msk [vmem:[#allocation6 + $0x20] sm:$0xff] %vm2945, %v4627
        %4649 = vst.msk [vmem:[#allocation6 + $0x30] sm:$0xff] %vm2945, %v4629
        %4650 = vst.msk [vmem:[#allocation6 + $0x40] sm:$0xff] %vm2945, %v4631
        %4651 = vst.msk [vmem:[#allocation6 + $0x50] sm:$0xff] %vm2945, %v4633
        %4652 = vst.msk [vmem:[#allocation6 + $0x60] sm:$0xff] %vm2945, %v4635
        %4653 = vst.msk [vmem:[#allocation6 + $0x70] sm:$0xff] %vm2945, %v4637
        %v4654 = vld [vmem:[%s2855 + $0x2] sm:$0xff]
        %v4655 = vld [vmem:[%s2855 + $0x12] sm:$0xff]
        %v4656 = vld [vmem:[%s2855 + $0x22] sm:$0xff]
        %v4657 = vld [vmem:[%s2855 + $0x32] sm:$0xff]
        %v4658 = vld [vmem:[%s2855 + $0x42] sm:$0xff]
        %v4659 = vld [vmem:[%s2855 + $0x52] sm:$0xff]
        %v4660 = vld [vmem:[%s2855 + $0x62] sm:$0xff]
        %v4661 = vld [vmem:[%s2855 + $0x72] sm:$0xff]
        %4662 = vst.msk [vmem:[#allocation6 + $0x8] sm:$0xff] %vm355, %v4654
        %4663 = vst.msk [vmem:[#allocation6 + $0x18] sm:$0xff] %vm355, %v4655
        %4664 = vst.msk [vmem:[#allocation6 + $0x28] sm:$0xff] %vm355, %v4656
        %4665 = vst.msk [vmem:[#allocation6 + $0x38] sm:$0xff] %vm355, %v4657
        %4666 = vst.msk [vmem:[#allocation6 + $0x48] sm:$0xff] %vm355, %v4658
        %4667 = vst.msk [vmem:[#allocation6 + $0x58] sm:$0xff] %vm355, %v4659
        %4668 = vst.msk [vmem:[#allocation6 + $0x68] sm:$0xff] %vm355, %v4660
        %4669 = vst.msk [vmem:[#allocation6 + $0x78] sm:$0xff] %vm355, %v4661
        %v4670 = vld [vmem:[#allocation6] sm:$0xff]
        %v4671 = vld [vmem:[#allocation6 + $0x8] sm:$0xff]
        %v4672 = vld [vmem:[#allocation6 + $0x10] sm:$0xff]
        %v4673 = vld [vmem:[#allocation6 + $0x18] sm:$0xff]
        %v4674 = vld [vmem:[#allocation6 + $0x20] sm:$0xff]
        %v4675 = vld [vmem:[#allocation6 + $0x28] sm:$0xff]
        %v4676 = vld [vmem:[#allocation6 + $0x30] sm:$0xff]
        %v4677 = vld [vmem:[#allocation6 + $0x38] sm:$0xff]
        %v4678 = vld [vmem:[#allocation6 + $0x40] sm:$0xff]
        %v4679 = vld [vmem:[#allocation6 + $0x48] sm:$0xff]
        %v4680 = vld [vmem:[#allocation6 + $0x50] sm:$0xff]
        %v4681 = vld [vmem:[#allocation6 + $0x58] sm:$0xff]
        %v4682 = vld [vmem:[#allocation6 + $0x60] sm:$0xff]
        %v4683 = vld [vmem:[#allocation6 + $0x68] sm:$0xff]
        %v4684 = vld [vmem:[#allocation6 + $0x70] sm:$0xff]
        %v4685 = vld [vmem:[#allocation6 + $0x78] sm:$0xff]
        %v4687 = vlaneseq
        %v4688 = vshrl.u32 %v4687, 7
        %v4689 = vsub.s32 0, %v4688
        %v4690 = vrot.slane %v4301, %v4689
        %v4693 = vsel %vm355, %v4671, 0
        %v4696 = vsel %vm355, %v4673, 0
        %v4699 = vsel %vm355, %v4675, 0
        %v4702 = vsel %vm355, %v4677, 0
        %v4705 = vsel %vm355, %v4679, 0
        %v4708 = vsel %vm355, %v4681, 0
        %v4711 = vsel %vm355, %v4683, 0
        %v4714 = vsel %vm355, %v4685, 0
        %4716 = vmatprep.subr.mxu0 0.0
        %4717 = vmatpush1.msra.mxu0 %v4282
        %4718 = vmatprep.subr.mxu0 0.0
        %4719 = vmatpush1.msra.mxu0 %v4283
        %4720 = vmatprep.subr.mxu0 0.0
        %4721 = vmatpush1.msra.mxu0 %v4284
        %4722 = vmatprep.subr.mxu0 0.0
        %4723 = vmatpush1.msra.mxu0 %v4285
        %4724 = vmatprep.subr.mxu0 0.0
        %4725 = vmatpush1.msra.mxu0 %v4286
        %4726 = vmatprep.subr.mxu0 0.0
        %4727 = vmatpush1.msra.mxu0 %v4287
        %4728 = vmatprep.subr.mxu0 0.0
        %4729 = vmatpush1.msra.mxu0 %v4288
        %4730 = vmatprep.subr.mxu0 0.0
        %4731 = vmatpush1.msra.mxu0 %v4289
        %4732 = vmatprep.subr.mxu0 0.0
        %4733 = vmatpush1.msra.mxu0 %v4290
        %4734 = vmatprep.subr.mxu0 0.0
        %4735 = vmatpush1.msra.mxu0 %v4291
        %4736 = vmatprep.subr.mxu0 0.0
        %4737 = vmatpush1.msra.mxu0 %v4292
        %4738 = vmatprep.subr.mxu0 0.0
        %4739 = vmatpush1.msra.mxu0 %v4293
        %4740 = vmatprep.subr.mxu0 0.0
        %4741 = vmatpush1.msra.mxu0 %v4294
        %4742 = vmatprep.subr.mxu0 0.0
        %4743 = vmatpush1.msra.mxu0 %v4295
        %4744 = vmatprep.subr.mxu0 0.0
        %4745 = vmatpush1.msra.mxu0 %v4296
        %4746 = vmatprep.subr.mxu0 0.0
        %4747 = vmatpush1.msra.mxu0 %v4297
        %4748 = vmatprep.subr.mxu0 0.0
        %4749 = vmatpush1.msra.mxu0 %v4298
        %4750 = vmatprep.subr.mxu0 0.0
        %4751 = vmatpush1.msra.mxu0 %v4299
        %4752 = vmatprep.subr.mxu0 0.0
        %4753 = vmatpush1.msra.mxu0 0.0
        %4754 = vmatprep.subr.mxu0 0.0
        %4755 = vmatpush1.msra.mxu0 0.0
        %4756 = vmatprep.subr.mxu0 0.0
        %4757 = vmatpush1.msra.mxu0 0.0
        %4758 = vmatprep.subr.mxu0 0.0
        %4759 = vmatpush1.msra.mxu0 0.0
        %4760 = vmatprep.subr.mxu0 0.0
        %4761 = vmatpush1.msra.mxu0 0.0
        %4762 = vmatprep.subr.mxu0 0.0
        %4763 = vmatpush1.msra.mxu0 0.0
        %4764 = vmatprep.subr.mxu0 0.0
        %4765 = vmatpush1.msra.mxu0 0.0
        %4766 = vmatprep.subr.mxu0 0.0
        %4767 = vmatpush1.msra.mxu0 0.0
        %4768 = vmatprep.subr.mxu0 0.0
        %4769 = vmatpush1.msra.mxu0 0.0
        %4770 = vmatprep.subr.mxu0 0.0
        %4771 = vmatpush1.msra.mxu0 0.0
        %4772 = vmatprep.subr.mxu0 0.0
        %4773 = vmatpush1.msra.mxu0 0.0
        %4774 = vmatprep.subr.mxu0 0.0
        %4775 = vmatpush1.msra.mxu0 0.0
        %4776 = vmatprep.subr.mxu0 0.0
        %4777 = vmatpush1.msra.mxu0 0.0
        %4778 = vmatprep.subr.mxu0 0.0
        %4779 = vmatpush1.msra.mxu0 0.0
        %4780 = vmatprep.mubr.f32.mxu0 %v4693
        %4781 = vmatmul.mubr.f32.gmra.mrb[0].mxu0 %v4670
        %v4782 = vpop.f32.mrb[0].mxu0
        %v4783 = vadd.f32 %v4690, %v4782
        %v4784 = vpop.f32.mrb[0].mxu0
        %4785 = vmatprep.mubr.f32.mxu0 %v4696
        %4786 = vmatmul.mubr.f32.gmra.mrb[0].mxu0 %v4672
        %v4787 = vpop.f32.mrb[0].mxu0
        %v4788 = vadd.f32 %v4690, %v4787
        %v4789 = vpop.f32.mrb[0].mxu0
        %4790 = vmatprep.mubr.f32.mxu0 %v4699
        %4791 = vmatmul.mubr.f32.gmra.mrb[0].mxu0 %v4674
        %v4792 = vpop.f32.mrb[0].mxu0
        %v4793 = vadd.f32 %v4690, %v4792
        %v4794 = vpop.f32.mrb[0].mxu0
        %4795 = vmatprep.mubr.f32.mxu0 %v4702
        %4796 = vmatmul.mubr.f32.gmra.mrb[0].mxu0 %v4676
        %v4797 = vpop.f32.mrb[0].mxu0
        %v4798 = vadd.f32 %v4690, %v4797
        %v4799 = vpop.f32.mrb[0].mxu0
        %4800 = vmatprep.mubr.f32.mxu0 %v4705
        %4801 = vmatmul.mubr.f32.gmra.mrb[0].mxu0 %v4678
        %v4802 = vpop.f32.mrb[0].mxu0
        %v4803 = vadd.f32 %v4690, %v4802
        %v4804 = vpop.f32.mrb[0].mxu0
        %4805 = vmatprep.mubr.f32.mxu0 %v4708
        %4806 = vmatmul.mubr.f32.gmra.mrb[0].mxu0 %v4680
        %v4807 = vpop.f32.mrb[0].mxu0
        %v4808 = vadd.f32 %v4690, %v4807
        %v4809 = vpop.f32.mrb[0].mxu0
        %4810 = vmatprep.mubr.f32.mxu0 %v4711
        %4811 = vmatmul.mubr.f32.gmra.mrb[0].mxu0 %v4682
        %v4812 = vpop.f32.mrb[0].mxu0
        %v4813 = vadd.f32 %v4690, %v4812
        %v4814 = vpop.f32.mrb[0].mxu0
        %4815 = vmatprep.mubr.f32.mxu0 %v4714
        %4816 = vmatmul.mubr.f32.gmra.mrb[0].mxu0 %v4684
        %v4817 = vpop.f32.mrb[0].mxu0
        %v4818 = vadd.f32 %v4690, %v4817
        %v4819 = vpop.f32.mrb[0].mxu0
        %4820 = vdwg.mxu0
        %v4821 = vld [vmem:[#allocation8] sm:$0xff]
        %v4822 = vld [vmem:[#allocation8 + $0x8] sm:$0xff]
        %v4823 = vld [vmem:[#allocation8 + $0x10] sm:$0xff]
        %v4824 = vld [vmem:[#allocation8 + $0x18] sm:$0xff]
        %v4825 = vld [vmem:[#allocation8 + $0x20] sm:$0xff]
        %v4826 = vld [vmem:[#allocation8 + $0x28] sm:$0xff]
        %v4827 = vld [vmem:[#allocation8 + $0x30] sm:$0xff]
        %v4828 = vld [vmem:[#allocation8 + $0x38] sm:$0xff]
        %v4829 = vadd.f32 %v4821, %v4783
        %v4830 = vadd.f32 %v4822, %v4788
        %v4831 = vadd.f32 %v4823, %v4793
        %v4832 = vadd.f32 %v4824, %v4798
        %v4833 = vadd.f32 %v4825, %v4803
        %v4834 = vadd.f32 %v4826, %v4808
        %v4835 = vadd.f32 %v4827, %v4813
        %v4836 = vadd.f32 %v4828, %v4818
        %4837 = vst.msk [vmem:[#allocation8] sm:$0xff] %vm355, %v4829
        %4838 = vst.msk [vmem:[#allocation8 + $0x8] sm:$0xff] %vm355, %v4830
        %4839 = vst.msk [vmem:[#allocation8 + $0x10] sm:$0xff] %vm355, %v4831
        %4840 = vst.msk [vmem:[#allocation8 + $0x18] sm:$0xff] %vm355, %v4832
        %4841 = vst.msk [vmem:[#allocation8 + $0x20] sm:$0xff] %vm355, %v4833
        %4842 = vst.msk [vmem:[#allocation8 + $0x28] sm:$0xff] %vm355, %v4834
        %4843 = vst.msk [vmem:[#allocation8 + $0x30] sm:$0xff] %vm355, %v4835
        %4844 = vst.msk [vmem:[#allocation8 + $0x38] sm:$0xff] %vm355, %v4836
        %v4845 = vld [vmem:[#allocation8] sm:$0xff]
        %v4846 = vld [vmem:[#allocation8 + $0x8] sm:$0xff]
        %v4847 = vld [vmem:[#allocation8 + $0x10] sm:$0xff]
        %v4848 = vld [vmem:[#allocation8 + $0x18] sm:$0xff]
        %v4849 = vld [vmem:[#allocation8 + $0x20] sm:$0xff]
        %v4850 = vld [vmem:[#allocation8 + $0x28] sm:$0xff]
        %v4851 = vld [vmem:[#allocation8 + $0x30] sm:$0xff]
        %v4852 = vld [vmem:[#allocation8 + $0x38] sm:$0xff]
        %4853 = vst.msk [vmem:[%s259] sm:$0xff] %vm355, %v4845
        %4854 = vst.msk [vmem:[%s259 + $0x8] sm:$0xff] %vm355, %v4846
        %4855 = vst.msk [vmem:[%s259 + $0x10] sm:$0xff] %vm355, %v4847
        %4856 = vst.msk [vmem:[%s259 + $0x18] sm:$0xff] %vm355, %v4848
        %4857 = vst.msk [vmem:[%s259 + $0x20] sm:$0xff] %vm355, %v4849
        %4858 = vst.msk [vmem:[%s259 + $0x28] sm:$0xff] %vm355, %v4850
        %4859 = vst.msk [vmem:[%s259 + $0x30] sm:$0xff] %vm355, %v4851
        %4860 = vst.msk [vmem:[%s259 + $0x38] sm:$0xff] %vm355, %v4852
        %s4861 = sand.u32 %s164, 1
        %s4862 = scalar_lea.sflag [#allocation10], %s4861
        %s4863 = sand.u32 %s164, 1
        %s4864 = smul.addr %s4863, 64
        %s4865 = scalar_lea.vmem [#allocation9], %s4864
        // Predicated region
        $region45: #{cnn_down_stack.1} parent=43 // pred_check
          %p4866 = pneg %p174
        $region46: #{cnn_down_stack.1} parent=43 // pred_check_branch
          %4868 = sbr.rel (%p4866) target = $region48
        $region47: #{cnn_down_stack.1} parent=43 // pred_region
          %s4870 = ssub.s32 1024, 1024
          %4871 = vsyncadd %s4862, %s4870
          %s4872 = smul.addr %s20, 8
          %s4873 = smul.addr %s4872, 128
          %s4874 = scalar_lea.hbm %s6, %s4873
          %s4875 = sshll.u32 %s4865, 4
          %s4876 = int_to_ptr.vmem [resolvable:$true] %s4875
          %4881 = dma.vmem_to_hbm [thread:$0]  %s4876, 1024, %s4874, %s4862, 128, 128, 8
        $region48: #{cnn_down_stack.1} parent=43 // pred_fallthru
          _
      $region44: #{cnn_down_stack.1} parent=5 // pred_fallthru
        _
      %p4882 = scmp.le.s32.totalorder 2, %s15
      // Predicated region
      $region49: #{cnn_down_stack.1} parent=5 // pred_check
        %p4883 = pneg %p4882
      $region50: #{cnn_down_stack.1} parent=5 // pred_check_branch
        %4885 = sbr.rel (%p4883) target = $region52
      $region51: #{cnn_down_stack.1} parent=5 // pred_region
        %s4886 = ssub.s32 %s15, 2
        // Predicated region
        $region53: #{cnn_down_stack.1} parent=51 // pred_check
          %p4887 = pneg %p180
        $region54: #{cnn_down_stack.1} parent=51 // pred_check_branch
          %4889 = sbr.rel (%p4887) target = $region56
        $region55: #{cnn_down_stack.1} parent=51 // pred_region
          %s4890 = sand.u32 %s165, 1
          %s4891 = scalar_lea.sflag [#allocation10], %s4890
          %s4892 = sand.u32 %s165, 1
          %s4893 = smul.addr %s4892, 64
          %s4894 = scalar_lea.vmem [#allocation9], %s4893
          %4895 = dma.done %s4891, 1024
        $region56: #{cnn_down_stack.1} parent=51 // pred_fallthru
          _
      $region52: #{cnn_down_stack.1} parent=5 // pred_fallthru
        _
    $region6: #{cnn_down_stack.1} parent=1 // loop_footer
      %s19 = sadd.s32 1, %s15
    $region7: #{cnn_down_stack.1} parent=1 // loop_footer_branch
      %14 = sbr.rel target = $region3
    $region8: #{cnn_down_stack.1} parent=1 // loop_exit
      _
    %4896 = vsyncpa [#allocation10], 1
    %s4897 = scalar_lea.sflag [#allocation10], 1
    %4898 = vsyncpa %s4897, 1

</llo_original>
